<compile_context>
chip_gen: v7x
topology: tpu7x:2x2x1
jax: 0.10.0
libtpu: 0.0.40
codegen_flags: <defaults>
</compile_context>

<pallas_src>
import math

import jax
import jax.numpy as jnp
from jax.experimental import pallas as pl
from jax.experimental.pallas import tpu as pltpu


# ----------------------------- Pallas kernel --------------------------------
def gcn_value_kernel(a_ref, x_ref, w1_ref, b1_ref, w2_ref, b2_ref,
                     w3_ref, w4p_ref, b3_ref, b4_ref, out_ref):
    """One grid block = G independent graphs (MB = G*N node rows).

    a_ref  : (G, N, N)  shared normalized adjacency, broadcast per graph (cdt)
    x_ref  : (G, N, F)  node features of this block's G graphs (cdt)
    w*_ref : GCN / head weights (cdt); b1/b2 bias rows are f32 VMEM
    w4p_ref: (G, MB)    per-graph head pooling (row g holds w4^T in slot g)
    b3/b4  : (1,)       f32 scalars in SMEM
    out    : (1, G, 1)  one value per graph
    """
    cdt = x_ref.dtype
    g, n, f = x_ref.shape
    mb = g * n
    h2_dim = w2_ref.shape[1]

    a = a_ref[...]                                              # (G, N, N)

    # --- GCNConv 1: tanh((Â X) W1 + b1); aggregate first (F <= H1) ----------
    ax = jnp.einsum('gnm,gmf->gnf', a, x_ref[...],
                    preferred_element_type=jnp.float32)         # (G, N, F) f32
    ax2 = ax.reshape(mb, f).astype(cdt)                         # layout-preserving merge
    h = jnp.dot(ax2, w1_ref[...],
                preferred_element_type=jnp.float32) + b1_ref[...]
    h = jnp.tanh(h)                                             # (MB, H1) f32

    # --- GCNConv 2: tanh(Â (h W2) + b2); transform first (H2 <= H1) ---------
    hw = jnp.dot(h.astype(cdt), w2_ref[...],
                 preferred_element_type=jnp.float32)            # (MB, H2) f32
    hw3 = hw.reshape(g, n, h2_dim).astype(cdt)                  # layout-preserving split
    z = jnp.einsum('gnm,gmh->gnh', a, hw3,
                   preferred_element_type=jnp.float32) + b2_ref[...]
    h = jnp.tanh(z)                                             # (G, N, H2) f32

    # --- GCNConv 3: tanh((Â h) w3 + b3); aggregate first (h already 3-D) ----
    agg = jnp.einsum('gnm,gmh->gnh', a, h.astype(cdt),
                     preferred_element_type=jnp.float32)        # (G, N, H2) f32
    v = jnp.dot(agg.reshape(mb, h2_dim).astype(cdt), w3_ref[...],
                preferred_element_type=jnp.float32)             # (MB, 1) f32
    t = jnp.tanh(v + b3_ref[0])                                 # (MB, 1) f32

    # --- Linear head: out[g] = w4 . t[g*N:(g+1)*N] + b4 ----------------------
    col = jnp.dot(w4p_ref[...], t.astype(cdt),
                  preferred_element_type=jnp.float32)           # (G, 1) f32
    out_ref[0] = (col + b4_ref[0]).astype(out_ref.dtype)


# ------------------------------ JAX glue -------------------------------------
def build_norm_adj(edge_index, num_nodes):
    """Dense D^-1/2 (A + I) D^-1/2, matching torch_geometric GCNConv defaults."""
    src, dst = edge_index[0], edge_index[1]
    adj = jnp.zeros((num_nodes, num_nodes), jnp.float32)
    adj = adj.at[dst, src].add(1.0)                      # message flows src -> dst
    adj = adj + jnp.eye(num_nodes, dtype=jnp.float32)    # add self loops
    deg = adj.sum(axis=1)
    d_inv_sqrt = jnp.where(deg > 0, 1.0 / jnp.sqrt(deg), 0.0)
    return d_inv_sqrt[:, None] * adj * d_inv_sqrt[None, :]


def prepare_inputs(x, edge_index, graphs_per_block, dtype):
    """One-time preprocessing (topology is static): build Â ONCE and broadcast
    it to a tiny (G, N, N) constant — the block-diagonal I_G ⊗ Â is never
    materialized.  Features are kept as (B, N, F)."""
    _, n, _ = x.shape
    a_hat = build_norm_adj(edge_index, n)
    a_b = jnp.broadcast_to(a_hat, (graphs_per_block, n, n)).astype(dtype)
    return a_b, x.astype(dtype)


def prepare_params(params, graphs_per_block, dtype):
    """Weights -> compute dtype; head w4 expanded once to a (G, G*N) per-graph
    pooling matrix (natural-orientation matmul); scalar biases are 1-D f32 for
    unpadded SMEM."""
    w1, b1, w2, b2, w3, b3, w4, b4 = params
    g = graphs_per_block
    w4p = jnp.kron(jnp.eye(g, dtype=jnp.float32), w4.T)         # (G, G*N)
    return (w1.astype(dtype), b1.astype(jnp.float32),
            w2.astype(dtype), b2.astype(jnp.float32),
            w3.astype(dtype), w4p.astype(dtype),
            b3.reshape(1).astype(jnp.float32),
            b4.reshape(1).astype(jnp.float32))


def gcn_value_forward(a_b, x3, prepped, *, vmem_limit_bytes=32 * 1024 * 1024):
    """Batched forward: one value per graph, shape (B,)."""
    g, n, _ = a_b.shape
    b, n2, f = x3.shape
    assert n2 == n and b % g == 0, (x3.shape, a_b.shape)
    nb = b // g
    mb = g * n
    w1, b1, w2, b2, w3, w4p, b3, b4 = prepped
    h1, h2 = w1.shape[1], w2.shape[1]

    # Conservative VMEM budget (assume every block double-buffered); keeps the
    # v7x 64 MiB (32 MiB default-scoped) ceiling visible when N / G grow.
    blocks = [((g, n, n), a_b.dtype), ((g, n, f), x3.dtype),
              (w1.shape, w1.dtype), (b1.shape, b1.dtype),
              (w2.shape, w2.dtype), (b2.shape, b2.dtype),
              (w3.shape, w3.dtype), (w4p.shape, w4p.dtype),
              ((1, g, 1), jnp.float32)]
    est = sum(2 * math.prod(int(d) for d in s) * jnp.dtype(t).itemsize
              for s, t in blocks)
    assert est < vmem_limit_bytes, f"VMEM estimate {est} >= {vmem_limit_bytes}"

    out = pl.pallas_call(
        gcn_value_kernel,
        out_shape=jax.ShapeDtypeStruct((nb, g, 1), jnp.float32),
        grid=(nb,),
        in_specs=[
            # Constant index_maps => fetched once for the whole grid.
            pl.BlockSpec((g, n, n), lambda i: (0, 0, 0)),        # Â (shared)
            pl.BlockSpec((g, n, f), lambda i: (i, 0, 0)),        # node features
            pl.BlockSpec((f, h1), lambda i: (0, 0)),             # W1
            pl.BlockSpec((1, h1), lambda i: (0, 0)),             # b1
            pl.BlockSpec((h1, h2), lambda i: (0, 0)),            # W2
            pl.BlockSpec((1, h2), lambda i: (0, 0)),             # b2
            pl.BlockSpec((h2, 1), lambda i: (0, 0)),             # w3
            pl.BlockSpec((g, mb), lambda i: (0, 0)),             # head pooling
            pl.BlockSpec(memory_space=pltpu.MemorySpace.SMEM),   # b3 (1,)
            pl.BlockSpec(memory_space=pltpu.MemorySpace.SMEM),   # b4 (1,)
        ],
        out_specs=pl.BlockSpec((1, g, 1), lambda i: (i, 0, 0)),
        compiler_params=pltpu.CompilerParams(
            dimension_semantics=("parallel",),
            vmem_limit_bytes=vmem_limit_bytes),
    )(a_b, x3, w1, b1, w2, b2, w3, w4p, b3, b4)
    return out.reshape(nb * g)


def gcn_value_net(x, edge_index, params, dtype=jnp.float32):
    """Single-graph forward matching the PyTorch module (returns shape (1,))."""
    a_b, x3 = prepare_inputs(x[None], edge_index, 1, dtype)
    prepped = prepare_params(params, 1, dtype)
    return gcn_value_forward(a_b, x3, prepped)


def pick_graphs_per_block(num_nodes, batch):
    """Perf knob only (never affects correctness): target MB = G*N of 256 on
    the 256x256-MXU generations (v6e / v7x), 128 on v5e, while keeping >= 2
    grid steps so both v7x TensorCores receive a block."""
    try:
        kind = jax.devices()[0].device_kind.lower()
    except Exception:
        kind = ""
    target_rows = 128 if "v5" in kind else 256
    g = max(1, target_rows // num_nodes)
    while g > 1 and (batch % g != 0 or batch // g < 2):
        g //= 2
    return max(1, g)


def init_params(key, feature1_dim, hidden1_dim, hidden2_dim, action_dim):
    """Deterministic synthetic parameters (glorot-ish weights, zero biases)."""
    ks = jax.random.split(key, 4)

    def glorot(k, fan_in, fan_out):
        lim = jnp.sqrt(6.0 / (fan_in + fan_out))
        return jax.random.uniform(k, (fan_in, fan_out), jnp.float32, -lim, lim)

    w1 = glorot(ks[0], feature1_dim, hidden1_dim)
    b1 = jnp.zeros((1, hidden1_dim), jnp.float32)
    w2 = glorot(ks[1], hidden1_dim, hidden2_dim)
    b2 = jnp.zeros((1, hidden2_dim), jnp.float32)
    w3 = glorot(ks[2], hidden2_dim, 1)
    b3 = jnp.zeros((1, 1), jnp.float32)
    w4 = glorot(ks[3], action_dim, 1)        # nn.Linear(action_dim, 1) weight^T
    b4 = jnp.zeros((1, 1), jnp.float32)
    return (w1, b1, w2, b2, w3, b3, w4, b4)


def reference_forward(x, edge_index, params):
    """Pure-JAX reference mirroring the PyTorch forward for one graph."""
    w1, b1, w2, b2, w3, b3, w4, b4 = params
    a = build_norm_adj(edge_index, x.shape[0])
    h = jnp.tanh(a @ (x @ w1) + b1)
    h = jnp.tanh(a @ (h @ w2) + b2)
    h = jnp.tanh(a @ (h @ w3) + b3)
    h = h.reshape(-1)
    return (h @ w4 + b4).reshape(-1)                 # shape (1,)


if __name__ == "__main__":
    # Shapes consistent with the module: N nodes == action_dim (conv3 emits one
    # feature per node, flattened into the final Linear).
    N = 8                       # nodes per graph == action_dim
    FEAT, H1, H2 = 16, 32, 16
    B = 64                      # graphs in the batch

    key = jax.random.PRNGKey(0)
    kx, kp = jax.random.split(key)
    x = jax.random.normal(kx, (B, N, FEAT), jnp.float32)

    # Undirected ring shared by all graphs: (2, 2N)
    src = jnp.arange(N, dtype=jnp.int32)
    dst = (src + 1) % N
    edge_index = jnp.stack([jnp.concatenate([src, dst]),
                            jnp.concatenate([dst, src])], axis=0)

    params = init_params(kp, FEAT, H1, H2, N)

    # bf16 MXU operands on every TPU generation (f32 accumulate, f32 tanh).
    cdt = jnp.bfloat16
    G = pick_graphs_per_block(N, B)     # 32 on v6e/v7x (MB=256, nb=2), 16 on v5e

    # One-time preprocessing: Â built ONCE, broadcast to (G, N, N).
    a_blocks, x3 = prepare_inputs(x, edge_index, G, cdt)
    prepped = prepare_params(params, G, cdt)

    fwd = jax.jit(gcn_value_forward)
    out = fwd(a_blocks, x3, prepped)
    jax.block_until_ready(out)

    ref = jax.vmap(lambda xg: reference_forward(xg, edge_index, params))(x)
    ref = ref.reshape(-1)

    assert out.shape == (B,)
    # bf16 MXU operands + inter-layer bf16 casts (f32 accumulation): loose-ish
    # tolerance is expected and acceptable for a value head.
    assert jnp.allclose(out, ref, atol=2e-1, rtol=5e-2), (
        f"max abs err = {jnp.max(jnp.abs(out - ref))}")

    # Single-graph path (exact module signature; f32 path, tight tolerance).
    out1 = gcn_value_net(x[0], edge_index, params, dtype=jnp.float32)
    jax.block_until_ready(out1)
    ref1 = reference_forward(x[0], edge_index, params)
    assert out1.shape == (1,)
    assert jnp.allclose(out1, ref1, atol=5e-3, rtol=5e-3)

    # Directed-graph check: asymmetric Â exercises the exact contraction axis
    # (out[n] = sum_m Â[n,m] x[m]) — no symmetry assumption in the kernel.
    edge_dir = jnp.stack([src, dst], axis=0)            # one-way ring
    out_d = gcn_value_net(x[0], edge_dir, params, dtype=jnp.float32)
    jax.block_until_ready(out_d)
    ref_d = reference_forward(x[0], edge_dir, params)
    assert jnp.allclose(out_d, ref_d, atol=5e-3, rtol=5e-3)

    print("KERNEL_OK")
</pallas_src>

<mosaic_0001>
module attributes {stable_mosaic.version = 11 : i64} {
  func.func @gcn_value_kernel(%arg0: i32, %arg1: memref<32x8x8xbf16, #tpu.memory_space<vmem>>, %arg2: memref<32x8x16xbf16, #tpu.memory_space<vmem>>, %arg3: memref<16x32xbf16, #tpu.memory_space<vmem>>, %arg4: memref<1x32xf32, #tpu.memory_space<vmem>>, %arg5: memref<32x16xbf16, #tpu.memory_space<vmem>>, %arg6: memref<1x16xf32, #tpu.memory_space<vmem>>, %arg7: memref<16x1xbf16, #tpu.memory_space<vmem>>, %arg8: memref<32x256xbf16, #tpu.memory_space<vmem>>, %arg9: memref<1xf32, #tpu.memory_space<smem>>, %arg10: memref<1xf32, #tpu.memory_space<smem>>, %arg11: memref<1x32x1xf32, #tpu.memory_space<vmem>>) attributes {dimension_semantics = [#tpu.dimension_semantics<parallel>], iteration_bounds = array<i64: 2>, scalar_prefetch = 0 : i64, scratch_operands = 0 : i64, tpu.core_type = #tpu.core_type<tc>, window_params = [{pipeline_mode = #tpu.pipeline_mode<synchronous>, transform_indices = @transform_0, window_bounds = array<i64: 32, 8, 8>}, {transform_indices = @transform_1, window_bounds = array<i64: 32, 8, 16>}, {pipeline_mode = #tpu.pipeline_mode<synchronous>, transform_indices = @transform_2, window_bounds = array<i64: 16, 32>}, {pipeline_mode = #tpu.pipeline_mode<synchronous>, transform_indices = @transform_3, window_bounds = array<i64: 1, 32>}, {pipeline_mode = #tpu.pipeline_mode<synchronous>, transform_indices = @transform_4, window_bounds = array<i64: 32, 16>}, {pipeline_mode = #tpu.pipeline_mode<synchronous>, transform_indices = @transform_5, window_bounds = array<i64: 1, 16>}, {pipeline_mode = #tpu.pipeline_mode<synchronous>, transform_indices = @transform_6, window_bounds = array<i64: 16, 1>}, {pipeline_mode = #tpu.pipeline_mode<synchronous>, transform_indices = @transform_7, window_bounds = array<i64: 32, 256>}, {transform_indices = @transform_8, window_bounds = array<i64: 1>}, {transform_indices = @transform_9, window_bounds = array<i64: 1>}, {transform_indices = @transform_10, window_bounds = array<i64: 1, 32, 1>}]} {
    %c0 = arith.constant 0 : index
    %c0_0 = arith.constant 0 : index
    %c0_1 = arith.constant 0 : index
    %0 = vector.load %arg1[%c0, %c0_0, %c0_1] : memref<32x8x8xbf16, #tpu.memory_space<vmem>>, vector<32x8x8xbf16>
    %c0_2 = arith.constant 0 : index
    %c0_3 = arith.constant 0 : index
    %c0_4 = arith.constant 0 : index
    %1 = vector.load %arg2[%c0_2, %c0_3, %c0_4] : memref<32x8x16xbf16, #tpu.memory_space<vmem>>, vector<32x8x16xbf16>
    "tpu.trace_start"() <{level = 10 : i32, message = "gnm,gmf->gnf"}> : () -> ()
    %cst = arith.constant dense<0.000000e+00> : vector<32x8x16xf32>
    %2 = tpu.matmul %0, %1, %cst {dimension_numbers = #tpu.dot_dimension_numbers<[2], [1], [1], [2], [0, 0, 0, 1, 1, 2], [0], [0]>} : vector<32x8x8xbf16>, vector<32x8x16xbf16>, vector<32x8x16xf32> -> vector<32x8x16xf32>
    "tpu.trace_stop"() : () -> ()
    %3 = vector.shape_cast %2 : vector<32x8x16xf32> to vector<256x16xf32>
    %4 = arith.truncf %3 : vector<256x16xf32> to vector<256x16xbf16>
    %c0_5 = arith.constant 0 : index
    %c0_6 = arith.constant 0 : index
    %5 = vector.load %arg3[%c0_5, %c0_6] : memref<16x32xbf16, #tpu.memory_space<vmem>>, vector<16x32xbf16>
    %cst_7 = arith.constant dense<0.000000e+00> : vector<256x32xf32>
    %6 = tpu.matmul %4, %5, %cst_7 {dimension_numbers = #tpu.dot_dimension_numbers<[1], [0], [0], [1], [0, 0, 1, 1], [], []>} : vector<256x16xbf16>, vector<16x32xbf16>, vector<256x32xf32> -> vector<256x32xf32>
    %c0_8 = arith.constant 0 : index
    %c0_9 = arith.constant 0 : index
    %7 = vector.load %arg4[%c0_8, %c0_9] : memref<1x32xf32, #tpu.memory_space<vmem>>, vector<1x32xf32>
    %8 = vector.broadcast %7 : vector<1x32xf32> to vector<256x32xf32>
    %9 = arith.addf %6, %8 : vector<256x32xf32>
    %10 = math.tanh %9 : vector<256x32xf32>
    %11 = arith.truncf %10 : vector<256x32xf32> to vector<256x32xbf16>
    %c0_10 = arith.constant 0 : index
    %c0_11 = arith.constant 0 : index
    %12 = vector.load %arg5[%c0_10, %c0_11] : memref<32x16xbf16, #tpu.memory_space<vmem>>, vector<32x16xbf16>
    %cst_12 = arith.constant dense<0.000000e+00> : vector<256x16xf32>
    %13 = tpu.matmul %11, %12, %cst_12 {dimension_numbers = #tpu.dot_dimension_numbers<[1], [0], [0], [1], [0, 0, 1, 1], [], []>} : vector<256x32xbf16>, vector<32x16xbf16>, vector<256x16xf32> -> vector<256x16xf32>
    %14 = vector.shape_cast %13 : vector<256x16xf32> to vector<32x8x16xf32>
    %15 = arith.truncf %14 : vector<32x8x16xf32> to vector<32x8x16xbf16>
    "tpu.trace_start"() <{level = 10 : i32, message = "gnm,gmh->gnh"}> : () -> ()
    %cst_13 = arith.constant dense<0.000000e+00> : vector<32x8x16xf32>
    %16 = tpu.matmul %0, %15, %cst_13 {dimension_numbers = #tpu.dot_dimension_numbers<[2], [1], [1], [2], [0, 0, 0, 1, 1, 2], [0], [0]>} : vector<32x8x8xbf16>, vector<32x8x16xbf16>, vector<32x8x16xf32> -> vector<32x8x16xf32>
    "tpu.trace_stop"() : () -> ()
    %c0_14 = arith.constant 0 : index
    %c0_15 = arith.constant 0 : index
    %17 = vector.load %arg6[%c0_14, %c0_15] : memref<1x16xf32, #tpu.memory_space<vmem>>, vector<1x16xf32>
    %18 = vector.shape_cast %17 : vector<1x16xf32> to vector<1x1x16xf32>
    %19 = vector.broadcast %18 : vector<1x1x16xf32> to vector<32x8x16xf32>
    %20 = arith.addf %16, %19 : vector<32x8x16xf32>
    %21 = math.tanh %20 : vector<32x8x16xf32>
    %22 = arith.truncf %21 : vector<32x8x16xf32> to vector<32x8x16xbf16>
    "tpu.trace_start"() <{level = 10 : i32, message = "gnm,gmh->gnh"}> : () -> ()
    %cst_16 = arith.constant dense<0.000000e+00> : vector<32x8x16xf32>
    %23 = tpu.matmul %0, %22, %cst_16 {dimension_numbers = #tpu.dot_dimension_numbers<[2], [1], [1], [2], [0, 0, 0, 1, 1, 2], [0], [0]>} : vector<32x8x8xbf16>, vector<32x8x16xbf16>, vector<32x8x16xf32> -> vector<32x8x16xf32>
    "tpu.trace_stop"() : () -> ()
    %24 = vector.shape_cast %23 : vector<32x8x16xf32> to vector<256x16xf32>
    %25 = arith.truncf %24 : vector<256x16xf32> to vector<256x16xbf16>
    %c0_17 = arith.constant 0 : index
    %c0_18 = arith.constant 0 : index
    %26 = vector.load %arg7[%c0_17, %c0_18] : memref<16x1xbf16, #tpu.memory_space<vmem>>, vector<16x1xbf16>
    %cst_19 = arith.constant dense<0.000000e+00> : vector<256x1xf32>
    %27 = tpu.matmul %25, %26, %cst_19 {dimension_numbers = #tpu.dot_dimension_numbers<[1], [0], [0], [1], [0, 0, 1, 1], [], []>} : vector<256x16xbf16>, vector<16x1xbf16>, vector<256x1xf32> -> vector<256x1xf32>
    %c0_20 = arith.constant 0 : index
    %28 = memref.load %arg9[%c0_20] : memref<1xf32, #tpu.memory_space<smem>>
    %29 = vector.broadcast %28 : f32 to vector<256x1xf32>
    %30 = arith.addf %27, %29 : vector<256x1xf32>
    %31 = math.tanh %30 : vector<256x1xf32>
    %c0_21 = arith.constant 0 : index
    %c0_22 = arith.constant 0 : index
    %32 = vector.load %arg8[%c0_21, %c0_22] : memref<32x256xbf16, #tpu.memory_space<vmem>>, vector<32x256xbf16>
    %33 = arith.truncf %31 : vector<256x1xf32> to vector<256x1xbf16>
    %cst_23 = arith.constant dense<0.000000e+00> : vector<32x1xf32>
    %34 = tpu.matmul %32, %33, %cst_23 {dimension_numbers = #tpu.dot_dimension_numbers<[1], [0], [0], [1], [0, 0, 1, 1], [], []>} : vector<32x256xbf16>, vector<256x1xbf16>, vector<32x1xf32> -> vector<32x1xf32>
    %c0_24 = arith.constant 0 : index
    %35 = memref.load %arg10[%c0_24] : memref<1xf32, #tpu.memory_space<smem>>
    %36 = vector.broadcast %35 : f32 to vector<32x1xf32>
    %37 = arith.addf %34, %36 : vector<32x1xf32>
    %c0_25 = arith.constant 0 : index
    %c0_26 = arith.constant 0 : index
    %c0_27 = arith.constant 0 : index
    %38 = vector.load %arg11[%c0_25, %c0_26, %c0_27] : memref<1x32x1xf32, #tpu.memory_space<vmem>>, vector<1x32x1xf32>
    %39 = vector.shape_cast %38 : vector<1x32x1xf32> to vector<32x1xf32>
    %40 = vector.shape_cast %37 : vector<32x1xf32> to vector<1x32x1xf32>
    tpu.vector_store %arg11[%c0_25, %c0_26, %c0_27], %40 {strides = array<i32>} : memref<1x32x1xf32, #tpu.memory_space<vmem>>, vector<1x32x1xf32>,
    return
  }
  func.func @transform_0(%arg0: i32) -> (i32, i32, i32) {
    %c0_i32 = arith.constant 0 : i32
    %c0_i32_0 = arith.constant 0 : i32
    %c0_i32_1 = arith.constant 0 : i32
    %c0_i32_2 = arith.constant 0 : i32
    return %c0_i32, %c0_i32_0, %c0_i32_1 : i32, i32, i32
  }
  func.func @transform_1(%arg0: i32) -> (i32, i32, i32) {
    %c0_i32 = arith.constant 0 : i32
    %c0_i32_0 = arith.constant 0 : i32
    %c0_i32_1 = arith.constant 0 : i32
    return %arg0, %c0_i32, %c0_i32_0 : i32, i32, i32
  }
  func.func @transform_2(%arg0: i32) -> (i32, i32) {
    %c0_i32 = arith.constant 0 : i32
    %c0_i32_0 = arith.constant 0 : i32
    %c0_i32_1 = arith.constant 0 : i32
    return %c0_i32, %c0_i32_0 : i32, i32
  }
  func.func @transform_3(%arg0: i32) -> (i32, i32) {
    %c0_i32 = arith.constant 0 : i32
    %c0_i32_0 = arith.constant 0 : i32
    %c0_i32_1 = arith.constant 0 : i32
    return %c0_i32, %c0_i32_0 : i32, i32
  }
  func.func @transform_4(%arg0: i32) -> (i32, i32) {
    %c0_i32 = arith.constant 0 : i32
    %c0_i32_0 = arith.constant 0 : i32
    %c0_i32_1 = arith.constant 0 : i32
    return %c0_i32, %c0_i32_0 : i32, i32
  }
  func.func @transform_5(%arg0: i32) -> (i32, i32) {
    %c0_i32 = arith.constant 0 : i32
    %c0_i32_0 = arith.constant 0 : i32
    %c0_i32_1 = arith.constant 0 : i32
    return %c0_i32, %c0_i32_0 : i32, i32
  }
  func.func @transform_6(%arg0: i32) -> (i32, i32) {
    %c0_i32 = arith.constant 0 : i32
    %c0_i32_0 = arith.constant 0 : i32
    %c0_i32_1 = arith.constant 0 : i32
    return %c0_i32, %c0_i32_0 : i32, i32
  }
  func.func @transform_7(%arg0: i32) -> (i32, i32) {
    %c0_i32 = arith.constant 0 : i32
    %c0_i32_0 = arith.constant 0 : i32
    %c0_i32_1 = arith.constant 0 : i32
    return %c0_i32, %c0_i32_0 : i32, i32
  }
  func.func @transform_8(%arg0: i32) -> i32 {
    %c0_i32 = arith.constant 0 : i32
    %c0_i32_0 = arith.constant 0 : i32
    return %c0_i32 : i32
  }
  func.func @transform_9(%arg0: i32) -> i32 {
    %c0_i32 = arith.constant 0 : i32
    %c0_i32_0 = arith.constant 0 : i32
    return %c0_i32 : i32
  }
  func.func @transform_10(%arg0: i32) -> (i32, i32, i32) {
    %c0_i32 = arith.constant 0 : i32
    %c0_i32_0 = arith.constant 0 : i32
    %c0_i32_1 = arith.constant 0 : i32
    return %arg0, %c0_i32, %c0_i32_0 : i32, i32, i32
  }
}

</mosaic_0001>

<llo_original>
// kernel: gcn_value_forward.1
$region0: #{gcn_value_forward.1}
  #allocation0 [shape = 'u32[]', space=smem, size = 0x4, offset = 0x4, fixed_abs, tag = 'smem constant byte address 0x4 - core index']
  #allocation1 [shape = 'u32[144,128]{1,0:T(1,128)}', space=vmem, size = 0x12000, scoped, tag = 'internal scratch']
  #allocation2 [shape = 'f32[1]{0:T(128)S(6)}', space=smem, size = 0x200, scoped, tag = 'scoped memory for gcn_value_forward.1']
  #allocation3 [shape = 'f32[1]{0:T(128)S(6)}', space=smem, size = 0x200, scoped, tag = 'scoped memory for gcn_value_forward.1']
  %s0 = inlined_call_operand.vmem [shape: bf16[32,8,8], index: 0, kind: input, shape index: {}]
  %s1 = inlined_call_operand.vmem [shape: bf16[64,8,16], index: 1, kind: input, shape index: {}]
  %s2 = inlined_call_operand.vmem [shape: bf16[16,32], index: 2, kind: input, shape index: {}]
  %s3 = inlined_call_operand.vmem [shape: f32[1,32], index: 3, kind: input, shape index: {}]
  %s4 = inlined_call_operand.vmem [shape: bf16[32,16], index: 4, kind: input, shape index: {}]
  %s5 = inlined_call_operand.vmem [shape: f32[1,16], index: 5, kind: input, shape index: {}]
  %s6 = inlined_call_operand.vmem [shape: bf16[16,1], index: 6, kind: input, shape index: {}]
  %s7 = inlined_call_operand.vmem [shape: bf16[32,256], index: 7, kind: input, shape index: {}]
  %s8 = inlined_call_operand.<no memory space> [shape: f32[1], index: 8, kind: input, shape index: {}]
  %s9 = inlined_call_operand.<no memory space> [shape: f32[1], index: 9, kind: input, shape index: {}]
  %s10 = inlined_call_operand.vmem [shape: f32[2,32,1], index: 10, kind: output, shape index: {}]
  %s11 = sld [smem:[#allocation0]]
  $region73: #{gcn_value_forward.1} parent=0
    _
  %s13 = ssub.s32 1, %s11
  %s14 = scalar_select 0, %s13, %s11
  %15 = sst [smem:[#allocation2]] %s8
  %16 = sst [smem:[#allocation3]] %s9
  loop: start=0, step=1, limit=4
  $region2: #{gcn_value_forward.1} parent=0 // loop_pre_header
    _
  $region3: #{gcn_value_forward.1} parent=0 // loop_header
    %s18 = sphi 0, %s22
    %p19 = scmp.ge.s32.totalorder %s18, 4
    %s26 = sphi 0, %s26
    %s28 = sphi 0, %s26
    %s29 = sphi 0, %s28
    %s43 = sphi 0, %s29
    %s49 = sphi 0, %s51
    %s52 = sphi 0, %s49
    %s53 = sphi 0, %s52
    %s69 = sphi 0, %s53
    %s73 = sphi 0, %s73
    %s75 = sphi 0, %s73
    %s76 = sphi 0, %s75
    %s90 = sphi 0, %s76
    %s94 = sphi 0, %s94
    %s96 = sphi 0, %s94
    %s97 = sphi 0, %s96
    %s111 = sphi 0, %s97
    %s115 = sphi 0, %s115
    %s117 = sphi 0, %s115
    %s118 = sphi 0, %s117
    %s132 = sphi 0, %s118
    %s136 = sphi 0, %s136
    %s138 = sphi 0, %s136
    %s139 = sphi 0, %s138
    %s153 = sphi 0, %s139
    %s157 = sphi 0, %s157
    %s159 = sphi 0, %s157
    %s160 = sphi 0, %s159
    %s174 = sphi 0, %s160
    %s178 = sphi 0, %s178
    %s180 = sphi 0, %s178
    %s181 = sphi 0, %s180
    %s195 = sphi 0, %s181
    %s199 = sphi 0, %s199
    %s201 = sphi 0, %s199
    %s202 = sphi 0, %s201
    %s216 = sphi 0, %s202
    %s220 = sphi 0, %s220
    %s222 = sphi 0, %s220
    %s223 = sphi 0, %s222
    %s237 = sphi 0, %s223
    %s243 = sphi 0, %s245
    %s246 = sphi 0, %s243
    %s247 = sphi 0, %s246
    %s263 = sphi 0, %s247
  $region4: #{gcn_value_forward.1} parent=0 // loop_header_branch
    %21 = sbr.rel (%p19) target = $region8
  $region5: #{gcn_value_forward.1} parent=0 // loop_body
    %s23 = ssub.s32 %s18, 1
    %s24 = ssub.s32 %s18, 2
    %s25 = sadd.s32 %s18, 1
    %s27 = sadd.s32 %s26, 1
    %p30 = scmp.eq.s32.totalorder %s18, 1
    %p31 = scmp.ne.s32.totalorder %s26, %s28
    %p32 = scmp.eq.s32.totalorder %s18, 0
    %p33 = por %p31, %p32
    %p34 = scmp.ne.s32.totalorder %s26, %s28
    %p35 = scmp.eq.s32.totalorder %s23, 1
    %p36 = por %p34, %p35
    %p37 = scmp.ne.s32.totalorder %s28, %s29
    %p38 = scmp.eq.s32.totalorder %s23, 0
    %p39 = por %p37, %p38
    %p40 = scmp.ne.s32.totalorder %s28, %s29
    %p41 = scmp.eq.s32.totalorder %s24, 1
    %p42 = por %p40, %p41
    %p44 = scmp.ne.s32.totalorder %s29, %s43
    %p45 = scmp.eq.s32.totalorder %s24, 0
    %p46 = por %p44, %p45
    %s47 = ssub.s32 %s18, %s25
    %p48 = scmp.eq.s32.totalorder %s47, 0
    %s50 = sadd.s32 %s49, 1
    %s51 = scalar_select %p48, %s49, %s50
    %p54 = pneg %p48
    %p55 = scmp.eq.s32.totalorder %s18, 1
    %p56 = por %p54, %p55
    %p57 = scmp.ne.s32.totalorder %s49, %s52
    %p58 = scmp.eq.s32.totalorder %s18, 0
    %p59 = por %p57, %p58
    %p60 = scmp.ne.s32.totalorder %s49, %s52
    %p61 = scmp.eq.s32.totalorder %s23, 1
    %p62 = por %p60, %p61
    %p63 = scmp.ne.s32.totalorder %s52, %s53
    %p64 = scmp.eq.s32.totalorder %s23, 0
    %p65 = por %p63, %p64
    %p66 = scmp.ne.s32.totalorder %s52, %s53
    %p67 = scmp.eq.s32.totalorder %s24, 1
    %p68 = por %p66, %p67
    %p70 = scmp.ne.s32.totalorder %s53, %s69
    %p71 = scmp.eq.s32.totalorder %s24, 0
    %p72 = por %p70, %p71
    %s74 = sadd.s32 %s73, 1
    %p77 = scmp.eq.s32.totalorder %s18, 1
    %p78 = scmp.ne.s32.totalorder %s73, %s75
    %p79 = scmp.eq.s32.totalorder %s18, 0
    %p80 = por %p78, %p79
    %p81 = scmp.ne.s32.totalorder %s73, %s75
    %p82 = scmp.eq.s32.totalorder %s23, 1
    %p83 = por %p81, %p82
    %p84 = scmp.ne.s32.totalorder %s75, %s76
    %p85 = scmp.eq.s32.totalorder %s23, 0
    %p86 = por %p84, %p85
    %p87 = scmp.ne.s32.totalorder %s75, %s76
    %p88 = scmp.eq.s32.totalorder %s24, 1
    %p89 = por %p87, %p88
    %p91 = scmp.ne.s32.totalorder %s76, %s90
    %p92 = scmp.eq.s32.totalorder %s24, 0
    %p93 = por %p91, %p92
    %s95 = sadd.s32 %s94, 1
    %p98 = scmp.eq.s32.totalorder %s18, 1
    %p99 = scmp.ne.s32.totalorder %s94, %s96
    %p100 = scmp.eq.s32.totalorder %s18, 0
    %p101 = por %p99, %p100
    %p102 = scmp.ne.s32.totalorder %s94, %s96
    %p103 = scmp.eq.s32.totalorder %s23, 1
    %p104 = por %p102, %p103
    %p105 = scmp.ne.s32.totalorder %s96, %s97
    %p106 = scmp.eq.s32.totalorder %s23, 0
    %p107 = por %p105, %p106
    %p108 = scmp.ne.s32.totalorder %s96, %s97
    %p109 = scmp.eq.s32.totalorder %s24, 1
    %p110 = por %p108, %p109
    %p112 = scmp.ne.s32.totalorder %s97, %s111
    %p113 = scmp.eq.s32.totalorder %s24, 0
    %p114 = por %p112, %p113
    %s116 = sadd.s32 %s115, 1
    %p119 = scmp.eq.s32.totalorder %s18, 1
    %p120 = scmp.ne.s32.totalorder %s115, %s117
    %p121 = scmp.eq.s32.totalorder %s18, 0
    %p122 = por %p120, %p121
    %p123 = scmp.ne.s32.totalorder %s115, %s117
    %p124 = scmp.eq.s32.totalorder %s23, 1
    %p125 = por %p123, %p124
    %p126 = scmp.ne.s32.totalorder %s117, %s118
    %p127 = scmp.eq.s32.totalorder %s23, 0
    %p128 = por %p126, %p127
    %p129 = scmp.ne.s32.totalorder %s117, %s118
    %p130 = scmp.eq.s32.totalorder %s24, 1
    %p131 = por %p129, %p130
    %p133 = scmp.ne.s32.totalorder %s118, %s132
    %p134 = scmp.eq.s32.totalorder %s24, 0
    %p135 = por %p133, %p134
    %s137 = sadd.s32 %s136, 1
    %p140 = scmp.eq.s32.totalorder %s18, 1
    %p141 = scmp.ne.s32.totalorder %s136, %s138
    %p142 = scmp.eq.s32.totalorder %s18, 0
    %p143 = por %p141, %p142
    %p144 = scmp.ne.s32.totalorder %s136, %s138
    %p145 = scmp.eq.s32.totalorder %s23, 1
    %p146 = por %p144, %p145
    %p147 = scmp.ne.s32.totalorder %s138, %s139
    %p148 = scmp.eq.s32.totalorder %s23, 0
    %p149 = por %p147, %p148
    %p150 = scmp.ne.s32.totalorder %s138, %s139
    %p151 = scmp.eq.s32.totalorder %s24, 1
    %p152 = por %p150, %p151
    %p154 = scmp.ne.s32.totalorder %s139, %s153
    %p155 = scmp.eq.s32.totalorder %s24, 0
    %p156 = por %p154, %p155
    %s158 = sadd.s32 %s157, 1
    %p161 = scmp.eq.s32.totalorder %s18, 1
    %p162 = scmp.ne.s32.totalorder %s157, %s159
    %p163 = scmp.eq.s32.totalorder %s18, 0
    %p164 = por %p162, %p163
    %p165 = scmp.ne.s32.totalorder %s157, %s159
    %p166 = scmp.eq.s32.totalorder %s23, 1
    %p167 = por %p165, %p166
    %p168 = scmp.ne.s32.totalorder %s159, %s160
    %p169 = scmp.eq.s32.totalorder %s23, 0
    %p170 = por %p168, %p169
    %p171 = scmp.ne.s32.totalorder %s159, %s160
    %p172 = scmp.eq.s32.totalorder %s24, 1
    %p173 = por %p171, %p172
    %p175 = scmp.ne.s32.totalorder %s160, %s174
    %p176 = scmp.eq.s32.totalorder %s24, 0
    %p177 = por %p175, %p176
    %s179 = sadd.s32 %s178, 1
    %p182 = scmp.eq.s32.totalorder %s18, 1
    %p183 = scmp.ne.s32.totalorder %s178, %s180
    %p184 = scmp.eq.s32.totalorder %s18, 0
    %p185 = por %p183, %p184
    %p186 = scmp.ne.s32.totalorder %s178, %s180
    %p187 = scmp.eq.s32.totalorder %s23, 1
    %p188 = por %p186, %p187
    %p189 = scmp.ne.s32.totalorder %s180, %s181
    %p190 = scmp.eq.s32.totalorder %s23, 0
    %p191 = por %p189, %p190
    %p192 = scmp.ne.s32.totalorder %s180, %s181
    %p193 = scmp.eq.s32.totalorder %s24, 1
    %p194 = por %p192, %p193
    %p196 = scmp.ne.s32.totalorder %s181, %s195
    %p197 = scmp.eq.s32.totalorder %s24, 0
    %p198 = por %p196, %p197
    %s200 = sadd.s32 %s199, 1
    %p203 = scmp.eq.s32.totalorder %s18, 1
    %p204 = scmp.ne.s32.totalorder %s199, %s201
    %p205 = scmp.eq.s32.totalorder %s18, 0
    %p206 = por %p204, %p205
    %p207 = scmp.ne.s32.totalorder %s199, %s201
    %p208 = scmp.eq.s32.totalorder %s23, 1
    %p209 = por %p207, %p208
    %p210 = scmp.ne.s32.totalorder %s201, %s202
    %p211 = scmp.eq.s32.totalorder %s23, 0
    %p212 = por %p210, %p211
    %p213 = scmp.ne.s32.totalorder %s201, %s202
    %p214 = scmp.eq.s32.totalorder %s24, 1
    %p215 = por %p213, %p214
    %p217 = scmp.ne.s32.totalorder %s202, %s216
    %p218 = scmp.eq.s32.totalorder %s24, 0
    %p219 = por %p217, %p218
    %s221 = sadd.s32 %s220, 1
    %p224 = scmp.eq.s32.totalorder %s18, 1
    %p225 = scmp.ne.s32.totalorder %s220, %s222
    %p226 = scmp.eq.s32.totalorder %s18, 0
    %p227 = por %p225, %p226
    %p228 = scmp.ne.s32.totalorder %s220, %s222
    %p229 = scmp.eq.s32.totalorder %s23, 1
    %p230 = por %p228, %p229
    %p231 = scmp.ne.s32.totalorder %s222, %s223
    %p232 = scmp.eq.s32.totalorder %s23, 0
    %p233 = por %p231, %p232
    %p234 = scmp.ne.s32.totalorder %s222, %s223
    %p235 = scmp.eq.s32.totalorder %s24, 1
    %p236 = por %p234, %p235
    %p238 = scmp.ne.s32.totalorder %s223, %s237
    %p239 = scmp.eq.s32.totalorder %s24, 0
    %p240 = por %p238, %p239
    %s241 = ssub.s32 %s18, %s25
    %p242 = scmp.eq.s32.totalorder %s241, 0
    %s244 = sadd.s32 %s243, 1
    %s245 = scalar_select %p242, %s243, %s244
    %p248 = pneg %p242
    %p249 = scmp.eq.s32.totalorder %s18, 1
    %p250 = por %p248, %p249
    %p251 = scmp.ne.s32.totalorder %s243, %s246
    %p252 = scmp.eq.s32.totalorder %s18, 0
    %p253 = por %p251, %p252
    %p254 = scmp.ne.s32.totalorder %s243, %s246
    %p255 = scmp.eq.s32.totalorder %s23, 1
    %p256 = por %p254, %p255
    %p257 = scmp.ne.s32.totalorder %s246, %s247
    %p258 = scmp.eq.s32.totalorder %s23, 0
    %p259 = por %p257, %p258
    %p260 = scmp.ne.s32.totalorder %s246, %s247
    %p261 = scmp.eq.s32.totalorder %s24, 1
    %p262 = por %p260, %p261
    %p264 = scmp.ne.s32.totalorder %s247, %s263
    %p265 = scmp.eq.s32.totalorder %s24, 0
    %p266 = por %p264, %p265
    %p267 = scmp.le.s32.totalorder 1, %s18
    %p268 = scmp.lt.s32.totalorder %s18, 3
    %p269 = pnand %p267, %p268
    %p270 = pneg %p269
    // Predicated region
    $region9: #{gcn_value_forward.1} parent=5 // pred_check
      _
    $region10: #{gcn_value_forward.1} parent=5 // pred_check_branch
      %272 = sbr.rel (%p269) target = $region12
    $region11: #{gcn_value_forward.1} parent=5 // pred_region
      %s273 = ssub.s32 %s18, 1
      // Predicated region
      $region13: #{gcn_value_forward.1} parent=11 // pred_check
        %p274 = pneg %p39
      $region14: #{gcn_value_forward.1} parent=11 // pred_check_branch
        %276 = sbr.rel (%p274) target = $region16
      $region15: #{gcn_value_forward.1} parent=11 // pred_region
        _
      $region16: #{gcn_value_forward.1} parent=11 // pred_fallthru
        _
      // Predicated region
      $region17: #{gcn_value_forward.1} parent=11 // pred_check
        %p277 = pneg %p86
      $region18: #{gcn_value_forward.1} parent=11 // pred_check_branch
        %279 = sbr.rel (%p277) target = $region20
      $region19: #{gcn_value_forward.1} parent=11 // pred_region
        _
      $region20: #{gcn_value_forward.1} parent=11 // pred_fallthru
        _
      // Predicated region
      $region21: #{gcn_value_forward.1} parent=11 // pred_check
        %p280 = pneg %p107
      $region22: #{gcn_value_forward.1} parent=11 // pred_check_branch
        %282 = sbr.rel (%p280) target = $region24
      $region23: #{gcn_value_forward.1} parent=11 // pred_region
        _
      $region24: #{gcn_value_forward.1} parent=11 // pred_fallthru
        _
      // Predicated region
      $region25: #{gcn_value_forward.1} parent=11 // pred_check
        %p283 = pneg %p128
      $region26: #{gcn_value_forward.1} parent=11 // pred_check_branch
        %285 = sbr.rel (%p283) target = $region28
      $region27: #{gcn_value_forward.1} parent=11 // pred_region
        _
      $region28: #{gcn_value_forward.1} parent=11 // pred_fallthru
        _
      // Predicated region
      $region29: #{gcn_value_forward.1} parent=11 // pred_check
        %p286 = pneg %p149
      $region30: #{gcn_value_forward.1} parent=11 // pred_check_branch
        %288 = sbr.rel (%p286) target = $region32
      $region31: #{gcn_value_forward.1} parent=11 // pred_region
        _
      $region32: #{gcn_value_forward.1} parent=11 // pred_fallthru
        _
      // Predicated region
      $region33: #{gcn_value_forward.1} parent=11 // pred_check
        %p289 = pneg %p170
      $region34: #{gcn_value_forward.1} parent=11 // pred_check_branch
        %291 = sbr.rel (%p289) target = $region36
      $region35: #{gcn_value_forward.1} parent=11 // pred_region
        _
      $region36: #{gcn_value_forward.1} parent=11 // pred_fallthru
        _
      // Predicated region
      $region37: #{gcn_value_forward.1} parent=11 // pred_check
        %p292 = pneg %p191
      $region38: #{gcn_value_forward.1} parent=11 // pred_check_branch
        %294 = sbr.rel (%p292) target = $region40
      $region39: #{gcn_value_forward.1} parent=11 // pred_region
        _
      $region40: #{gcn_value_forward.1} parent=11 // pred_fallthru
        _
      // Predicated region
      $region41: #{gcn_value_forward.1} parent=11 // pred_check
        %p295 = pneg %p212
      $region42: #{gcn_value_forward.1} parent=11 // pred_check_branch
        %297 = sbr.rel (%p295) target = $region44
      $region43: #{gcn_value_forward.1} parent=11 // pred_region
        _
      $region44: #{gcn_value_forward.1} parent=11 // pred_fallthru
        _
      // Predicated region
      $region45: #{gcn_value_forward.1} parent=11 // pred_check
        %p298 = pneg %p233
      $region46: #{gcn_value_forward.1} parent=11 // pred_check_branch
        %300 = sbr.rel (%p298) target = $region48
      $region47: #{gcn_value_forward.1} parent=11 // pred_region
        _
      $region48: #{gcn_value_forward.1} parent=11 // pred_fallthru
        _
    $region12: #{gcn_value_forward.1} parent=5 // pred_fallthru
      _
    %p301 = scmp.lt.s32.totalorder %s18, 2
    // Predicated region
    $region49: #{gcn_value_forward.1} parent=5 // pred_check
      %p302 = pneg %p301
    $region50: #{gcn_value_forward.1} parent=5 // pred_check_branch
      %304 = sbr.rel (%p302) target = $region52
    $region51: #{gcn_value_forward.1} parent=5 // pred_region
      // Predicated region
      $region53: #{gcn_value_forward.1} parent=51 // pred_check
        %p305 = pneg %p59
      $region54: #{gcn_value_forward.1} parent=51 // pred_check_branch
        %307 = sbr.rel (%p305) target = $region56
      $region55: #{gcn_value_forward.1} parent=51 // pred_region
        %s308 = smul.u32 32, %s18
        %p309 = scmp.lt.s32.totalorder %s308, 63
        %s310 = scalar_select %p309, %s308, 63
        %s311 = smul.addr %s310, 4
        %s312 = scalar_lea.vmem %s1, %s311
        %s313 = smul.u32 32, %s18
      $region56: #{gcn_value_forward.1} parent=51 // pred_fallthru
        _
    $region52: #{gcn_value_forward.1} parent=5 // pred_fallthru
      _
    %p314 = scmp.le.s32.totalorder 1, %s18
    %p315 = scmp.lt.s32.totalorder %s18, 3
    %p316 = pnand %p314, %p315
    %p317 = pneg %p316
    // Predicated region
    $region57: #{gcn_value_forward.1} parent=5 // pred_check
      _
    $region58: #{gcn_value_forward.1} parent=5 // pred_check_branch
      %319 = sbr.rel (%p316) target = $region60
    $region59: #{gcn_value_forward.1} parent=5 // pred_region
      %s320 = ssub.s32 %s18, 1
      %p321 = pneg %p39
      %p322 = pneg %p36
      %s323 = smul.u32 32, %s23
      %p324 = scmp.lt.s32.totalorder %s323, 63
      %s325 = scalar_select %p324, %s323, 63
      %s326 = smul.addr %s325, 4
      %s327 = scalar_lea.vmem %s1, %s326
      %p328 = pneg %p65
      %p329 = pneg %p62
      %p330 = pneg %p86
      %p331 = pneg %p83
      %p332 = pneg %p107
      %p333 = pneg %p104
      %p334 = pneg %p128
      %p335 = pneg %p125
      %p336 = pneg %p149
      %p337 = pneg %p146
      %p338 = pneg %p170
      %p339 = pneg %p167
      %p340 = pneg %p191
      %p341 = pneg %p188
      %p342 = pneg %p212
      %p343 = pneg %p209
      %p344 = pneg %p233
      %p345 = pneg %p230
      %p346 = pneg %p259
      %p347 = pneg %p256
      %p348 = scmp.lt.s32.totalorder %s23, 1
      %s349 = scalar_select %p348, %s23, 1
      %s350 = smul.addr %s349, 4
      %s351 = smul.addr %s350, 8
      %s352 = scalar_lea.vmem %s10, %s351
      %s353 = smul.u32 32, %s23
      %p354 = scmp.lt.s32.totalorder %s353, 63
      %s355 = scalar_select %p354, %s353, 63
      %s356 = smul.addr %s355, 4
      %s357 = scalar_lea.vmem %s1, %s356
      %s358 = smul.u32 32, %s23
      %p359 = scmp.lt.s32.totalorder %s23, 1
      %s360 = scalar_select %p359, %s23, 1
      %s361 = smul.addr %s360, 4
      %s362 = smul.addr %s361, 8
      %s363 = scalar_lea.vmem %s10, %s362
      %v365 = vld [vmem:[%s0] sm:$0xf]
      %v366 = vld [vmem:[%s0 + $0x4] sm:$0xf]
      %v367 = vld [vmem:[%s0 + $0x8] sm:$0xf]
      %v368 = vld [vmem:[%s0 + $0xc] sm:$0xf]
      %v369 = vld [vmem:[%s0 + $0x10] sm:$0xf]
      %v370 = vld [vmem:[%s0 + $0x14] sm:$0xf]
      %v371 = vld [vmem:[%s0 + $0x18] sm:$0xf]
      %v372 = vld [vmem:[%s0 + $0x1c] sm:$0xf]
      %v373 = vld [vmem:[%s0 + $0x20] sm:$0xf]
      %v374 = vld [vmem:[%s0 + $0x24] sm:$0xf]
      %v375 = vld [vmem:[%s0 + $0x28] sm:$0xf]
      %v376 = vld [vmem:[%s0 + $0x2c] sm:$0xf]
      %v377 = vld [vmem:[%s0 + $0x30] sm:$0xf]
      %v378 = vld [vmem:[%s0 + $0x34] sm:$0xf]
      %v379 = vld [vmem:[%s0 + $0x38] sm:$0xf]
      %v380 = vld [vmem:[%s0 + $0x3c] sm:$0xf]
      %v381 = vld [vmem:[%s0 + $0x40] sm:$0xf]
      %v382 = vld [vmem:[%s0 + $0x44] sm:$0xf]
      %v383 = vld [vmem:[%s0 + $0x48] sm:$0xf]
      %v384 = vld [vmem:[%s0 + $0x4c] sm:$0xf]
      %v385 = vld [vmem:[%s0 + $0x50] sm:$0xf]
      %v386 = vld [vmem:[%s0 + $0x54] sm:$0xf]
      %v387 = vld [vmem:[%s0 + $0x58] sm:$0xf]
      %v388 = vld [vmem:[%s0 + $0x5c] sm:$0xf]
      %v389 = vld [vmem:[%s0 + $0x60] sm:$0xf]
      %v390 = vld [vmem:[%s0 + $0x64] sm:$0xf]
      %v391 = vld [vmem:[%s0 + $0x68] sm:$0xf]
      %v392 = vld [vmem:[%s0 + $0x6c] sm:$0xf]
      %v393 = vld [vmem:[%s0 + $0x70] sm:$0xf]
      %v394 = vld [vmem:[%s0 + $0x74] sm:$0xf]
      %v395 = vld [vmem:[%s0 + $0x78] sm:$0xf]
      %v396 = vld [vmem:[%s0 + $0x7c] sm:$0xf]
      %v397 = vld [vmem:[%s357] sm:$0xf]
      %v398 = vld [vmem:[%s357 + $0x4] sm:$0xf]
      %v399 = vld [vmem:[%s357 + $0x8] sm:$0xf]
      %v400 = vld [vmem:[%s357 + $0xc] sm:$0xf]
      %v401 = vld [vmem:[%s357 + $0x10] sm:$0xf]
      %v402 = vld [vmem:[%s357 + $0x14] sm:$0xf]
      %v403 = vld [vmem:[%s357 + $0x18] sm:$0xf]
      %v404 = vld [vmem:[%s357 + $0x1c] sm:$0xf]
      %v405 = vld [vmem:[%s357 + $0x20] sm:$0xf]
      %v406 = vld [vmem:[%s357 + $0x24] sm:$0xf]
      %v407 = vld [vmem:[%s357 + $0x28] sm:$0xf]
      %v408 = vld [vmem:[%s357 + $0x2c] sm:$0xf]
      %v409 = vld [vmem:[%s357 + $0x30] sm:$0xf]
      %v410 = vld [vmem:[%s357 + $0x34] sm:$0xf]
      %v411 = vld [vmem:[%s357 + $0x38] sm:$0xf]
      %v412 = vld [vmem:[%s357 + $0x3c] sm:$0xf]
      %v413 = vld [vmem:[%s357 + $0x40] sm:$0xf]
      %v414 = vld [vmem:[%s357 + $0x44] sm:$0xf]
      %v415 = vld [vmem:[%s357 + $0x48] sm:$0xf]
      %v416 = vld [vmem:[%s357 + $0x4c] sm:$0xf]
      %v417 = vld [vmem:[%s357 + $0x50] sm:$0xf]
      %v418 = vld [vmem:[%s357 + $0x54] sm:$0xf]
      %v419 = vld [vmem:[%s357 + $0x58] sm:$0xf]
      %v420 = vld [vmem:[%s357 + $0x5c] sm:$0xf]
      %v421 = vld [vmem:[%s357 + $0x60] sm:$0xf]
      %v422 = vld [vmem:[%s357 + $0x64] sm:$0xf]
      %v423 = vld [vmem:[%s357 + $0x68] sm:$0xf]
      %v424 = vld [vmem:[%s357 + $0x6c] sm:$0xf]
      %v425 = vld [vmem:[%s357 + $0x70] sm:$0xf]
      %v426 = vld [vmem:[%s357 + $0x74] sm:$0xf]
      %v427 = vld [vmem:[%s357 + $0x78] sm:$0xf]
      %v428 = vld [vmem:[%s357 + $0x7c] sm:$0xf]
      %vm429 = vcmask 64512
      %v431 = vsel %vm429, %v365, 0
      %vm433 = vcmask 1043456
      %v435 = vsel %vm433, %v397, 0
      %437 = vmatprep.subr.bf16.mxu0 0
      %438 = vmatpush1.bf16.msra.mxu0 %v435
      %439 = vmatprep.subr.bf16.mxu0 0
      %440 = vmatpush1.bf16.msra.mxu0 0
      %441 = vmatprep.subr.bf16.mxu0 0
      %442 = vmatpush1.bf16.msra.mxu0 0
      %443 = vmatprep.subr.bf16.mxu0 0
      %444 = vmatpush1.bf16.msra.mxu0 0
      %445 = vmatprep.subr.bf16.mxu0 0
      %446 = vmatpush1.bf16.msra.mxu0 0
      %447 = vmatprep.subr.bf16.mxu0 0
      %448 = vmatpush1.bf16.msra.mxu0 0
      %449 = vmatprep.subr.bf16.mxu0 0
      %450 = vmatpush1.bf16.msra.mxu0 0
      %451 = vmatprep.subr.bf16.mxu0 0
      %452 = vmatpush1.bf16.msra.mxu0 0
      %453 = vmatprep.subr.bf16.mxu0 0
      %454 = vmatpush1.bf16.msra.mxu0 0
      %455 = vmatprep.subr.bf16.mxu0 0
      %456 = vmatpush1.bf16.msra.mxu0 0
      %457 = vmatprep.subr.bf16.mxu0 0
      %458 = vmatpush1.bf16.msra.mxu0 0
      %459 = vmatprep.subr.bf16.mxu0 0
      %460 = vmatpush1.bf16.msra.mxu0 0
      %461 = vmatprep.subr.bf16.mxu0 0
      %462 = vmatpush1.bf16.msra.mxu0 0
      %463 = vmatprep.subr.bf16.mxu0 0
      %464 = vmatpush1.bf16.msra.mxu0 0
      %465 = vmatprep.subr.bf16.mxu0 0
      %466 = vmatpush1.bf16.msra.mxu0 0
      %467 = vmatprep.subr.bf16.mxu0 0
      %468 = vmatpush1.bf16.msra.mxu0 0
      %469 = vmatprep.mubr.bf16.mxu0 0
      %470 = vmatmul.mubr.bf16.gmra.mrb[0].mxu0 %v431
      %v471 = vpop.f32.mrb[0].mxu0
      %v472 = vadd.f32 0.0, %v471
      %v473 = vpop.f32.mrb[0].mxu0
      %v474 = vpop.f32.mrb[0].mxu0
      %v475 = vpop.f32.mrb[0].mxu0
      %476 = vdwg.mxu0
      %v478 = vsel %vm429, %v366, 0
      %v481 = vsel %vm433, %v398, 0
      %483 = vmatprep.subr.bf16.mxu0 0
      %484 = vmatpush1.bf16.msra.mxu0 %v481
      %485 = vmatprep.subr.bf16.mxu0 0
      %486 = vmatpush1.bf16.msra.mxu0 0
      %487 = vmatprep.subr.bf16.mxu0 0
      %488 = vmatpush1.bf16.msra.mxu0 0
      %489 = vmatprep.subr.bf16.mxu0 0
      %490 = vmatpush1.bf16.msra.mxu0 0
      %491 = vmatprep.subr.bf16.mxu0 0
      %492 = vmatpush1.bf16.msra.mxu0 0
      %493 = vmatprep.subr.bf16.mxu0 0
      %494 = vmatpush1.bf16.msra.mxu0 0
      %495 = vmatprep.subr.bf16.mxu0 0
      %496 = vmatpush1.bf16.msra.mxu0 0
      %497 = vmatprep.subr.bf16.mxu0 0
      %498 = vmatpush1.bf16.msra.mxu0 0
      %499 = vmatprep.subr.bf16.mxu0 0
      %500 = vmatpush1.bf16.msra.mxu0 0
      %501 = vmatprep.subr.bf16.mxu0 0
      %502 = vmatpush1.bf16.msra.mxu0 0
      %503 = vmatprep.subr.bf16.mxu0 0
      %504 = vmatpush1.bf16.msra.mxu0 0
      %505 = vmatprep.subr.bf16.mxu0 0
      %506 = vmatpush1.bf16.msra.mxu0 0
      %507 = vmatprep.subr.bf16.mxu0 0
      %508 = vmatpush1.bf16.msra.mxu0 0
      %509 = vmatprep.subr.bf16.mxu0 0
      %510 = vmatpush1.bf16.msra.mxu0 0
      %511 = vmatprep.subr.bf16.mxu0 0
      %512 = vmatpush1.bf16.msra.mxu0 0
      %513 = vmatprep.subr.bf16.mxu0 0
      %514 = vmatpush1.bf16.msra.mxu0 0
      %515 = vmatprep.mubr.bf16.mxu0 0
      %516 = vmatmul.mubr.bf16.gmra.mrb[0].mxu0 %v478
      %v517 = vpop.f32.mrb[0].mxu0
      %v518 = vadd.f32 0.0, %v517
      %v519 = vpop.f32.mrb[0].mxu0
      %v520 = vpop.f32.mrb[0].mxu0
      %v521 = vpop.f32.mrb[0].mxu0
      %522 = vdwg.mxu0
      %v524 = vsel %vm429, %v367, 0
      %v527 = vsel %vm433, %v399, 0
      %529 = vmatprep.subr.bf16.mxu0 0
      %530 = vmatpush1.bf16.msra.mxu0 %v527
      %531 = vmatprep.subr.bf16.mxu0 0
      %532 = vmatpush1.bf16.msra.mxu0 0
      %533 = vmatprep.subr.bf16.mxu0 0
      %534 = vmatpush1.bf16.msra.mxu0 0
      %535 = vmatprep.subr.bf16.mxu0 0
      %536 = vmatpush1.bf16.msra.mxu0 0
      %537 = vmatprep.subr.bf16.mxu0 0
      %538 = vmatpush1.bf16.msra.mxu0 0
      %539 = vmatprep.subr.bf16.mxu0 0
      %540 = vmatpush1.bf16.msra.mxu0 0
      %541 = vmatprep.subr.bf16.mxu0 0
      %542 = vmatpush1.bf16.msra.mxu0 0
      %543 = vmatprep.subr.bf16.mxu0 0
      %544 = vmatpush1.bf16.msra.mxu0 0
      %545 = vmatprep.subr.bf16.mxu0 0
      %546 = vmatpush1.bf16.msra.mxu0 0
      %547 = vmatprep.subr.bf16.mxu0 0
      %548 = vmatpush1.bf16.msra.mxu0 0
      %549 = vmatprep.subr.bf16.mxu0 0
      %550 = vmatpush1.bf16.msra.mxu0 0
      %551 = vmatprep.subr.bf16.mxu0 0
      %552 = vmatpush1.bf16.msra.mxu0 0
      %553 = vmatprep.subr.bf16.mxu0 0
      %554 = vmatpush1.bf16.msra.mxu0 0
      %555 = vmatprep.subr.bf16.mxu0 0
      %556 = vmatpush1.bf16.msra.mxu0 0
      %557 = vmatprep.subr.bf16.mxu0 0
      %558 = vmatpush1.bf16.msra.mxu0 0
      %559 = vmatprep.subr.bf16.mxu0 0
      %560 = vmatpush1.bf16.msra.mxu0 0
      %561 = vmatprep.mubr.bf16.mxu0 0
      %562 = vmatmul.mubr.bf16.gmra.mrb[0].mxu0 %v524
      %v563 = vpop.f32.mrb[0].mxu0
      %v564 = vadd.f32 0.0, %v563
      %v565 = vpop.f32.mrb[0].mxu0
      %v566 = vpop.f32.mrb[0].mxu0
      %v567 = vpop.f32.mrb[0].mxu0
      %568 = vdwg.mxu0
      %v570 = vsel %vm429, %v368, 0
      %v573 = vsel %vm433, %v400, 0
      %575 = vmatprep.subr.bf16.mxu0 0
      %576 = vmatpush1.bf16.msra.mxu0 %v573
      %577 = vmatprep.subr.bf16.mxu0 0
      %578 = vmatpush1.bf16.msra.mxu0 0
      %579 = vmatprep.subr.bf16.mxu0 0
      %580 = vmatpush1.bf16.msra.mxu0 0
      %581 = vmatprep.subr.bf16.mxu0 0
      %582 = vmatpush1.bf16.msra.mxu0 0
      %583 = vmatprep.subr.bf16.mxu0 0
      %584 = vmatpush1.bf16.msra.mxu0 0
      %585 = vmatprep.subr.bf16.mxu0 0
      %586 = vmatpush1.bf16.msra.mxu0 0
      %587 = vmatprep.subr.bf16.mxu0 0
      %588 = vmatpush1.bf16.msra.mxu0 0
      %589 = vmatprep.subr.bf16.mxu0 0
      %590 = vmatpush1.bf16.msra.mxu0 0
      %591 = vmatprep.subr.bf16.mxu0 0
      %592 = vmatpush1.bf16.msra.mxu0 0
      %593 = vmatprep.subr.bf16.mxu0 0
      %594 = vmatpush1.bf16.msra.mxu0 0
      %595 = vmatprep.subr.bf16.mxu0 0
      %596 = vmatpush1.bf16.msra.mxu0 0
      %597 = vmatprep.subr.bf16.mxu0 0
      %598 = vmatpush1.bf16.msra.mxu0 0
      %599 = vmatprep.subr.bf16.mxu0 0
      %600 = vmatpush1.bf16.msra.mxu0 0
      %601 = vmatprep.subr.bf16.mxu0 0
      %602 = vmatpush1.bf16.msra.mxu0 0
      %603 = vmatprep.subr.bf16.mxu0 0
      %604 = vmatpush1.bf16.msra.mxu0 0
      %605 = vmatprep.subr.bf16.mxu0 0
      %606 = vmatpush1.bf16.msra.mxu0 0
      %607 = vmatprep.mubr.bf16.mxu0 0
      %608 = vmatmul.mubr.bf16.gmra.mrb[0].mxu0 %v570
      %v609 = vpop.f32.mrb[0].mxu0
      %v610 = vadd.f32 0.0, %v609
      %v611 = vpop.f32.mrb[0].mxu0
      %v612 = vpop.f32.mrb[0].mxu0
      %v613 = vpop.f32.mrb[0].mxu0
      %614 = vdwg.mxu0
      %v616 = vsel %vm429, %v369, 0
      %v619 = vsel %vm433, %v401, 0
      %621 = vmatprep.subr.bf16.mxu0 0
      %622 = vmatpush1.bf16.msra.mxu0 %v619
      %623 = vmatprep.subr.bf16.mxu0 0
      %624 = vmatpush1.bf16.msra.mxu0 0
      %625 = vmatprep.subr.bf16.mxu0 0
      %626 = vmatpush1.bf16.msra.mxu0 0
      %627 = vmatprep.subr.bf16.mxu0 0
      %628 = vmatpush1.bf16.msra.mxu0 0
      %629 = vmatprep.subr.bf16.mxu0 0
      %630 = vmatpush1.bf16.msra.mxu0 0
      %631 = vmatprep.subr.bf16.mxu0 0
      %632 = vmatpush1.bf16.msra.mxu0 0
      %633 = vmatprep.subr.bf16.mxu0 0
      %634 = vmatpush1.bf16.msra.mxu0 0
      %635 = vmatprep.subr.bf16.mxu0 0
      %636 = vmatpush1.bf16.msra.mxu0 0
      %637 = vmatprep.subr.bf16.mxu0 0
      %638 = vmatpush1.bf16.msra.mxu0 0
      %639 = vmatprep.subr.bf16.mxu0 0
      %640 = vmatpush1.bf16.msra.mxu0 0
      %641 = vmatprep.subr.bf16.mxu0 0
      %642 = vmatpush1.bf16.msra.mxu0 0
      %643 = vmatprep.subr.bf16.mxu0 0
      %644 = vmatpush1.bf16.msra.mxu0 0
      %645 = vmatprep.subr.bf16.mxu0 0
      %646 = vmatpush1.bf16.msra.mxu0 0
      %647 = vmatprep.subr.bf16.mxu0 0
      %648 = vmatpush1.bf16.msra.mxu0 0
      %649 = vmatprep.subr.bf16.mxu0 0
      %650 = vmatpush1.bf16.msra.mxu0 0
      %651 = vmatprep.subr.bf16.mxu0 0
      %652 = vmatpush1.bf16.msra.mxu0 0
      %653 = vmatprep.mubr.bf16.mxu0 0
      %654 = vmatmul.mubr.bf16.gmra.mrb[0].mxu0 %v616
      %v655 = vpop.f32.mrb[0].mxu0
      %v656 = vadd.f32 0.0, %v655
      %v657 = vpop.f32.mrb[0].mxu0
      %v658 = vpop.f32.mrb[0].mxu0
      %v659 = vpop.f32.mrb[0].mxu0
      %660 = vdwg.mxu0
      %v662 = vsel %vm429, %v370, 0
      %v665 = vsel %vm433, %v402, 0
      %667 = vmatprep.subr.bf16.mxu0 0
      %668 = vmatpush1.bf16.msra.mxu0 %v665
      %669 = vmatprep.subr.bf16.mxu0 0
      %670 = vmatpush1.bf16.msra.mxu0 0
      %671 = vmatprep.subr.bf16.mxu0 0
      %672 = vmatpush1.bf16.msra.mxu0 0
      %673 = vmatprep.subr.bf16.mxu0 0
      %674 = vmatpush1.bf16.msra.mxu0 0
      %675 = vmatprep.subr.bf16.mxu0 0
      %676 = vmatpush1.bf16.msra.mxu0 0
      %677 = vmatprep.subr.bf16.mxu0 0
      %678 = vmatpush1.bf16.msra.mxu0 0
      %679 = vmatprep.subr.bf16.mxu0 0
      %680 = vmatpush1.bf16.msra.mxu0 0
      %681 = vmatprep.subr.bf16.mxu0 0
      %682 = vmatpush1.bf16.msra.mxu0 0
      %683 = vmatprep.subr.bf16.mxu0 0
      %684 = vmatpush1.bf16.msra.mxu0 0
      %685 = vmatprep.subr.bf16.mxu0 0
      %686 = vmatpush1.bf16.msra.mxu0 0
      %687 = vmatprep.subr.bf16.mxu0 0
      %688 = vmatpush1.bf16.msra.mxu0 0
      %689 = vmatprep.subr.bf16.mxu0 0
      %690 = vmatpush1.bf16.msra.mxu0 0
      %691 = vmatprep.subr.bf16.mxu0 0
      %692 = vmatpush1.bf16.msra.mxu0 0
      %693 = vmatprep.subr.bf16.mxu0 0
      %694 = vmatpush1.bf16.msra.mxu0 0
      %695 = vmatprep.subr.bf16.mxu0 0
      %696 = vmatpush1.bf16.msra.mxu0 0
      %697 = vmatprep.subr.bf16.mxu0 0
      %698 = vmatpush1.bf16.msra.mxu0 0
      %699 = vmatprep.mubr.bf16.mxu0 0
      %700 = vmatmul.mubr.bf16.gmra.mrb[0].mxu0 %v662
      %v701 = vpop.f32.mrb[0].mxu0
      %v702 = vadd.f32 0.0, %v701
      %v703 = vpop.f32.mrb[0].mxu0
      %v704 = vpop.f32.mrb[0].mxu0
      %v705 = vpop.f32.mrb[0].mxu0
      %706 = vdwg.mxu0
      %v708 = vsel %vm429, %v371, 0
      %v711 = vsel %vm433, %v403, 0
      %713 = vmatprep.subr.bf16.mxu0 0
      %714 = vmatpush1.bf16.msra.mxu0 %v711
      %715 = vmatprep.subr.bf16.mxu0 0
      %716 = vmatpush1.bf16.msra.mxu0 0
      %717 = vmatprep.subr.bf16.mxu0 0
      %718 = vmatpush1.bf16.msra.mxu0 0
      %719 = vmatprep.subr.bf16.mxu0 0
      %720 = vmatpush1.bf16.msra.mxu0 0
      %721 = vmatprep.subr.bf16.mxu0 0
      %722 = vmatpush1.bf16.msra.mxu0 0
      %723 = vmatprep.subr.bf16.mxu0 0
      %724 = vmatpush1.bf16.msra.mxu0 0
      %725 = vmatprep.subr.bf16.mxu0 0
      %726 = vmatpush1.bf16.msra.mxu0 0
      %727 = vmatprep.subr.bf16.mxu0 0
      %728 = vmatpush1.bf16.msra.mxu0 0
      %729 = vmatprep.subr.bf16.mxu0 0
      %730 = vmatpush1.bf16.msra.mxu0 0
      %731 = vmatprep.subr.bf16.mxu0 0
      %732 = vmatpush1.bf16.msra.mxu0 0
      %733 = vmatprep.subr.bf16.mxu0 0
      %734 = vmatpush1.bf16.msra.mxu0 0
      %735 = vmatprep.subr.bf16.mxu0 0
      %736 = vmatpush1.bf16.msra.mxu0 0
      %737 = vmatprep.subr.bf16.mxu0 0
      %738 = vmatpush1.bf16.msra.mxu0 0
      %739 = vmatprep.subr.bf16.mxu0 0
      %740 = vmatpush1.bf16.msra.mxu0 0
      %741 = vmatprep.subr.bf16.mxu0 0
      %742 = vmatpush1.bf16.msra.mxu0 0
      %743 = vmatprep.subr.bf16.mxu0 0
      %744 = vmatpush1.bf16.msra.mxu0 0
      %745 = vmatprep.mubr.bf16.mxu0 0
      %746 = vmatmul.mubr.bf16.gmra.mrb[0].mxu0 %v708
      %v747 = vpop.f32.mrb[0].mxu0
      %v748 = vadd.f32 0.0, %v747
      %v749 = vpop.f32.mrb[0].mxu0
      %v750 = vpop.f32.mrb[0].mxu0
      %v751 = vpop.f32.mrb[0].mxu0
      %752 = vdwg.mxu0
      %v754 = vsel %vm429, %v372, 0
      %v757 = vsel %vm433, %v404, 0
      %759 = vmatprep.subr.bf16.mxu0 0
      %760 = vmatpush1.bf16.msra.mxu0 %v757
      %761 = vmatprep.subr.bf16.mxu0 0
      %762 = vmatpush1.bf16.msra.mxu0 0
      %763 = vmatprep.subr.bf16.mxu0 0
      %764 = vmatpush1.bf16.msra.mxu0 0
      %765 = vmatprep.subr.bf16.mxu0 0
      %766 = vmatpush1.bf16.msra.mxu0 0
      %767 = vmatprep.subr.bf16.mxu0 0
      %768 = vmatpush1.bf16.msra.mxu0 0
      %769 = vmatprep.subr.bf16.mxu0 0
      %770 = vmatpush1.bf16.msra.mxu0 0
      %771 = vmatprep.subr.bf16.mxu0 0
      %772 = vmatpush1.bf16.msra.mxu0 0
      %773 = vmatprep.subr.bf16.mxu0 0
      %774 = vmatpush1.bf16.msra.mxu0 0
      %775 = vmatprep.subr.bf16.mxu0 0
      %776 = vmatpush1.bf16.msra.mxu0 0
      %777 = vmatprep.subr.bf16.mxu0 0
      %778 = vmatpush1.bf16.msra.mxu0 0
      %779 = vmatprep.subr.bf16.mxu0 0
      %780 = vmatpush1.bf16.msra.mxu0 0
      %781 = vmatprep.subr.bf16.mxu0 0
      %782 = vmatpush1.bf16.msra.mxu0 0
      %783 = vmatprep.subr.bf16.mxu0 0
      %784 = vmatpush1.bf16.msra.mxu0 0
      %785 = vmatprep.subr.bf16.mxu0 0
      %786 = vmatpush1.bf16.msra.mxu0 0
      %787 = vmatprep.subr.bf16.mxu0 0
      %788 = vmatpush1.bf16.msra.mxu0 0
      %789 = vmatprep.subr.bf16.mxu0 0
      %790 = vmatpush1.bf16.msra.mxu0 0
      %791 = vmatprep.mubr.bf16.mxu0 0
      %792 = vmatmul.mubr.bf16.gmra.mrb[0].mxu0 %v754
      %v793 = vpop.f32.mrb[0].mxu0
      %v794 = vadd.f32 0.0, %v793
      %v795 = vpop.f32.mrb[0].mxu0
      %v796 = vpop.f32.mrb[0].mxu0
      %v797 = vpop.f32.mrb[0].mxu0
      %798 = vdwg.mxu0
      %v800 = vsel %vm429, %v373, 0
      %v803 = vsel %vm433, %v405, 0
      %805 = vmatprep.subr.bf16.mxu0 0
      %806 = vmatpush1.bf16.msra.mxu0 %v803
      %807 = vmatprep.subr.bf16.mxu0 0
      %808 = vmatpush1.bf16.msra.mxu0 0
      %809 = vmatprep.subr.bf16.mxu0 0
      %810 = vmatpush1.bf16.msra.mxu0 0
      %811 = vmatprep.subr.bf16.mxu0 0
      %812 = vmatpush1.bf16.msra.mxu0 0
      %813 = vmatprep.subr.bf16.mxu0 0
      %814 = vmatpush1.bf16.msra.mxu0 0
      %815 = vmatprep.subr.bf16.mxu0 0
      %816 = vmatpush1.bf16.msra.mxu0 0
      %817 = vmatprep.subr.bf16.mxu0 0
      %818 = vmatpush1.bf16.msra.mxu0 0
      %819 = vmatprep.subr.bf16.mxu0 0
      %820 = vmatpush1.bf16.msra.mxu0 0
      %821 = vmatprep.subr.bf16.mxu0 0
      %822 = vmatpush1.bf16.msra.mxu0 0
      %823 = vmatprep.subr.bf16.mxu0 0
      %824 = vmatpush1.bf16.msra.mxu0 0
      %825 = vmatprep.subr.bf16.mxu0 0
      %826 = vmatpush1.bf16.msra.mxu0 0
      %827 = vmatprep.subr.bf16.mxu0 0
      %828 = vmatpush1.bf16.msra.mxu0 0
      %829 = vmatprep.subr.bf16.mxu0 0
      %830 = vmatpush1.bf16.msra.mxu0 0
      %831 = vmatprep.subr.bf16.mxu0 0
      %832 = vmatpush1.bf16.msra.mxu0 0
      %833 = vmatprep.subr.bf16.mxu0 0
      %834 = vmatpush1.bf16.msra.mxu0 0
      %835 = vmatprep.subr.bf16.mxu0 0
      %836 = vmatpush1.bf16.msra.mxu0 0
      %837 = vmatprep.mubr.bf16.mxu0 0
      %838 = vmatmul.mubr.bf16.gmra.mrb[0].mxu0 %v800
      %v839 = vpop.f32.mrb[0].mxu0
      %v840 = vadd.f32 0.0, %v839
      %v841 = vpop.f32.mrb[0].mxu0
      %v842 = vpop.f32.mrb[0].mxu0
      %v843 = vpop.f32.mrb[0].mxu0
      %844 = vdwg.mxu0
      %v846 = vsel %vm429, %v374, 0
      %v849 = vsel %vm433, %v406, 0
      %851 = vmatprep.subr.bf16.mxu0 0
      %852 = vmatpush1.bf16.msra.mxu0 %v849
      %853 = vmatprep.subr.bf16.mxu0 0
      %854 = vmatpush1.bf16.msra.mxu0 0
      %855 = vmatprep.subr.bf16.mxu0 0
      %856 = vmatpush1.bf16.msra.mxu0 0
      %857 = vmatprep.subr.bf16.mxu0 0
      %858 = vmatpush1.bf16.msra.mxu0 0
      %859 = vmatprep.subr.bf16.mxu0 0
      %860 = vmatpush1.bf16.msra.mxu0 0
      %861 = vmatprep.subr.bf16.mxu0 0
      %862 = vmatpush1.bf16.msra.mxu0 0
      %863 = vmatprep.subr.bf16.mxu0 0
      %864 = vmatpush1.bf16.msra.mxu0 0
      %865 = vmatprep.subr.bf16.mxu0 0
      %866 = vmatpush1.bf16.msra.mxu0 0
      %867 = vmatprep.subr.bf16.mxu0 0
      %868 = vmatpush1.bf16.msra.mxu0 0
      %869 = vmatprep.subr.bf16.mxu0 0
      %870 = vmatpush1.bf16.msra.mxu0 0
      %871 = vmatprep.subr.bf16.mxu0 0
      %872 = vmatpush1.bf16.msra.mxu0 0
      %873 = vmatprep.subr.bf16.mxu0 0
      %874 = vmatpush1.bf16.msra.mxu0 0
      %875 = vmatprep.subr.bf16.mxu0 0
      %876 = vmatpush1.bf16.msra.mxu0 0
      %877 = vmatprep.subr.bf16.mxu0 0
      %878 = vmatpush1.bf16.msra.mxu0 0
      %879 = vmatprep.subr.bf16.mxu0 0
      %880 = vmatpush1.bf16.msra.mxu0 0
      %881 = vmatprep.subr.bf16.mxu0 0
      %882 = vmatpush1.bf16.msra.mxu0 0
      %883 = vmatprep.mubr.bf16.mxu0 0
      %884 = vmatmul.mubr.bf16.gmra.mrb[0].mxu0 %v846
      %v885 = vpop.f32.mrb[0].mxu0
      %v886 = vadd.f32 0.0, %v885
      %v887 = vpop.f32.mrb[0].mxu0
      %v888 = vpop.f32.mrb[0].mxu0
      %v889 = vpop.f32.mrb[0].mxu0
      %890 = vdwg.mxu0
      %v892 = vsel %vm429, %v375, 0
      %v895 = vsel %vm433, %v407, 0
      %897 = vmatprep.subr.bf16.mxu0 0
      %898 = vmatpush1.bf16.msra.mxu0 %v895
      %899 = vmatprep.subr.bf16.mxu0 0
      %900 = vmatpush1.bf16.msra.mxu0 0
      %901 = vmatprep.subr.bf16.mxu0 0
      %902 = vmatpush1.bf16.msra.mxu0 0
      %903 = vmatprep.subr.bf16.mxu0 0
      %904 = vmatpush1.bf16.msra.mxu0 0
      %905 = vmatprep.subr.bf16.mxu0 0
      %906 = vmatpush1.bf16.msra.mxu0 0
      %907 = vmatprep.subr.bf16.mxu0 0
      %908 = vmatpush1.bf16.msra.mxu0 0
      %909 = vmatprep.subr.bf16.mxu0 0
      %910 = vmatpush1.bf16.msra.mxu0 0
      %911 = vmatprep.subr.bf16.mxu0 0
      %912 = vmatpush1.bf16.msra.mxu0 0
      %913 = vmatprep.subr.bf16.mxu0 0
      %914 = vmatpush1.bf16.msra.mxu0 0
      %915 = vmatprep.subr.bf16.mxu0 0
      %916 = vmatpush1.bf16.msra.mxu0 0
      %917 = vmatprep.subr.bf16.mxu0 0
      %918 = vmatpush1.bf16.msra.mxu0 0
      %919 = vmatprep.subr.bf16.mxu0 0
      %920 = vmatpush1.bf16.msra.mxu0 0
      %921 = vmatprep.subr.bf16.mxu0 0
      %922 = vmatpush1.bf16.msra.mxu0 0
      %923 = vmatprep.subr.bf16.mxu0 0
      %924 = vmatpush1.bf16.msra.mxu0 0
      %925 = vmatprep.subr.bf16.mxu0 0
      %926 = vmatpush1.bf16.msra.mxu0 0
      %927 = vmatprep.subr.bf16.mxu0 0
      %928 = vmatpush1.bf16.msra.mxu0 0
      %929 = vmatprep.mubr.bf16.mxu0 0
      %930 = vmatmul.mubr.bf16.gmra.mrb[0].mxu0 %v892
      %v931 = vpop.f32.mrb[0].mxu0
      %v932 = vadd.f32 0.0, %v931
      %v933 = vpop.f32.mrb[0].mxu0
      %v934 = vpop.f32.mrb[0].mxu0
      %v935 = vpop.f32.mrb[0].mxu0
      %936 = vdwg.mxu0
      %v938 = vsel %vm429, %v376, 0
      %v941 = vsel %vm433, %v408, 0
      %943 = vmatprep.subr.bf16.mxu0 0
      %944 = vmatpush1.bf16.msra.mxu0 %v941
      %945 = vmatprep.subr.bf16.mxu0 0
      %946 = vmatpush1.bf16.msra.mxu0 0
      %947 = vmatprep.subr.bf16.mxu0 0
      %948 = vmatpush1.bf16.msra.mxu0 0
      %949 = vmatprep.subr.bf16.mxu0 0
      %950 = vmatpush1.bf16.msra.mxu0 0
      %951 = vmatprep.subr.bf16.mxu0 0
      %952 = vmatpush1.bf16.msra.mxu0 0
      %953 = vmatprep.subr.bf16.mxu0 0
      %954 = vmatpush1.bf16.msra.mxu0 0
      %955 = vmatprep.subr.bf16.mxu0 0
      %956 = vmatpush1.bf16.msra.mxu0 0
      %957 = vmatprep.subr.bf16.mxu0 0
      %958 = vmatpush1.bf16.msra.mxu0 0
      %959 = vmatprep.subr.bf16.mxu0 0
      %960 = vmatpush1.bf16.msra.mxu0 0
      %961 = vmatprep.subr.bf16.mxu0 0
      %962 = vmatpush1.bf16.msra.mxu0 0
      %963 = vmatprep.subr.bf16.mxu0 0
      %964 = vmatpush1.bf16.msra.mxu0 0
      %965 = vmatprep.subr.bf16.mxu0 0
      %966 = vmatpush1.bf16.msra.mxu0 0
      %967 = vmatprep.subr.bf16.mxu0 0
      %968 = vmatpush1.bf16.msra.mxu0 0
      %969 = vmatprep.subr.bf16.mxu0 0
      %970 = vmatpush1.bf16.msra.mxu0 0
      %971 = vmatprep.subr.bf16.mxu0 0
      %972 = vmatpush1.bf16.msra.mxu0 0
      %973 = vmatprep.subr.bf16.mxu0 0
      %974 = vmatpush1.bf16.msra.mxu0 0
      %975 = vmatprep.mubr.bf16.mxu0 0
      %976 = vmatmul.mubr.bf16.gmra.mrb[0].mxu0 %v938
      %v977 = vpop.f32.mrb[0].mxu0
      %v978 = vadd.f32 0.0, %v977
      %v979 = vpop.f32.mrb[0].mxu0
      %v980 = vpop.f32.mrb[0].mxu0
      %v981 = vpop.f32.mrb[0].mxu0
      %982 = vdwg.mxu0
      %v984 = vsel %vm429, %v377, 0
      %v987 = vsel %vm433, %v409, 0
      %989 = vmatprep.subr.bf16.mxu0 0
      %990 = vmatpush1.bf16.msra.mxu0 %v987
      %991 = vmatprep.subr.bf16.mxu0 0
      %992 = vmatpush1.bf16.msra.mxu0 0
      %993 = vmatprep.subr.bf16.mxu0 0
      %994 = vmatpush1.bf16.msra.mxu0 0
      %995 = vmatprep.subr.bf16.mxu0 0
      %996 = vmatpush1.bf16.msra.mxu0 0
      %997 = vmatprep.subr.bf16.mxu0 0
      %998 = vmatpush1.bf16.msra.mxu0 0
      %999 = vmatprep.subr.bf16.mxu0 0
      %1000 = vmatpush1.bf16.msra.mxu0 0
      %1001 = vmatprep.subr.bf16.mxu0 0
      %1002 = vmatpush1.bf16.msra.mxu0 0
      %1003 = vmatprep.subr.bf16.mxu0 0
      %1004 = vmatpush1.bf16.msra.mxu0 0
      %1005 = vmatprep.subr.bf16.mxu0 0
      %1006 = vmatpush1.bf16.msra.mxu0 0
      %1007 = vmatprep.subr.bf16.mxu0 0
      %1008 = vmatpush1.bf16.msra.mxu0 0
      %1009 = vmatprep.subr.bf16.mxu0 0
      %1010 = vmatpush1.bf16.msra.mxu0 0
      %1011 = vmatprep.subr.bf16.mxu0 0
      %1012 = vmatpush1.bf16.msra.mxu0 0
      %1013 = vmatprep.subr.bf16.mxu0 0
      %1014 = vmatpush1.bf16.msra.mxu0 0
      %1015 = vmatprep.subr.bf16.mxu0 0
      %1016 = vmatpush1.bf16.msra.mxu0 0
      %1017 = vmatprep.subr.bf16.mxu0 0
      %1018 = vmatpush1.bf16.msra.mxu0 0
      %1019 = vmatprep.subr.bf16.mxu0 0
      %1020 = vmatpush1.bf16.msra.mxu0 0
      %1021 = vmatprep.mubr.bf16.mxu0 0
      %1022 = vmatmul.mubr.bf16.gmra.mrb[0].mxu0 %v984
      %v1023 = vpop.f32.mrb[0].mxu0
      %v1024 = vadd.f32 0.0, %v1023
      %v1025 = vpop.f32.mrb[0].mxu0
      %v1026 = vpop.f32.mrb[0].mxu0
      %v1027 = vpop.f32.mrb[0].mxu0
      %1028 = vdwg.mxu0
      %v1030 = vsel %vm429, %v378, 0
      %v1033 = vsel %vm433, %v410, 0
      %1035 = vmatprep.subr.bf16.mxu0 0
      %1036 = vmatpush1.bf16.msra.mxu0 %v1033
      %1037 = vmatprep.subr.bf16.mxu0 0
      %1038 = vmatpush1.bf16.msra.mxu0 0
      %1039 = vmatprep.subr.bf16.mxu0 0
      %1040 = vmatpush1.bf16.msra.mxu0 0
      %1041 = vmatprep.subr.bf16.mxu0 0
      %1042 = vmatpush1.bf16.msra.mxu0 0
      %1043 = vmatprep.subr.bf16.mxu0 0
      %1044 = vmatpush1.bf16.msra.mxu0 0
      %1045 = vmatprep.subr.bf16.mxu0 0
      %1046 = vmatpush1.bf16.msra.mxu0 0
      %1047 = vmatprep.subr.bf16.mxu0 0
      %1048 = vmatpush1.bf16.msra.mxu0 0
      %1049 = vmatprep.subr.bf16.mxu0 0
      %1050 = vmatpush1.bf16.msra.mxu0 0
      %1051 = vmatprep.subr.bf16.mxu0 0
      %1052 = vmatpush1.bf16.msra.mxu0 0
      %1053 = vmatprep.subr.bf16.mxu0 0
      %1054 = vmatpush1.bf16.msra.mxu0 0
      %1055 = vmatprep.subr.bf16.mxu0 0
      %1056 = vmatpush1.bf16.msra.mxu0 0
      %1057 = vmatprep.subr.bf16.mxu0 0
      %1058 = vmatpush1.bf16.msra.mxu0 0
      %1059 = vmatprep.subr.bf16.mxu0 0
      %1060 = vmatpush1.bf16.msra.mxu0 0
      %1061 = vmatprep.subr.bf16.mxu0 0
      %1062 = vmatpush1.bf16.msra.mxu0 0
      %1063 = vmatprep.subr.bf16.mxu0 0
      %1064 = vmatpush1.bf16.msra.mxu0 0
      %1065 = vmatprep.subr.bf16.mxu0 0
      %1066 = vmatpush1.bf16.msra.mxu0 0
      %1067 = vmatprep.mubr.bf16.mxu0 0
      %1068 = vmatmul.mubr.bf16.gmra.mrb[0].mxu0 %v1030
      %v1069 = vpop.f32.mrb[0].mxu0
      %v1070 = vadd.f32 0.0, %v1069
      %v1071 = vpop.f32.mrb[0].mxu0
      %v1072 = vpop.f32.mrb[0].mxu0
      %v1073 = vpop.f32.mrb[0].mxu0
      %1074 = vdwg.mxu0
      %v1076 = vsel %vm429, %v379, 0
      %v1079 = vsel %vm433, %v411, 0
      %1081 = vmatprep.subr.bf16.mxu0 0
      %1082 = vmatpush1.bf16.msra.mxu0 %v1079
      %1083 = vmatprep.subr.bf16.mxu0 0
      %1084 = vmatpush1.bf16.msra.mxu0 0
      %1085 = vmatprep.subr.bf16.mxu0 0
      %1086 = vmatpush1.bf16.msra.mxu0 0
      %1087 = vmatprep.subr.bf16.mxu0 0
      %1088 = vmatpush1.bf16.msra.mxu0 0
      %1089 = vmatprep.subr.bf16.mxu0 0
      %1090 = vmatpush1.bf16.msra.mxu0 0
      %1091 = vmatprep.subr.bf16.mxu0 0
      %1092 = vmatpush1.bf16.msra.mxu0 0
      %1093 = vmatprep.subr.bf16.mxu0 0
      %1094 = vmatpush1.bf16.msra.mxu0 0
      %1095 = vmatprep.subr.bf16.mxu0 0
      %1096 = vmatpush1.bf16.msra.mxu0 0
      %1097 = vmatprep.subr.bf16.mxu0 0
      %1098 = vmatpush1.bf16.msra.mxu0 0
      %1099 = vmatprep.subr.bf16.mxu0 0
      %1100 = vmatpush1.bf16.msra.mxu0 0
      %1101 = vmatprep.subr.bf16.mxu0 0
      %1102 = vmatpush1.bf16.msra.mxu0 0
      %1103 = vmatprep.subr.bf16.mxu0 0
      %1104 = vmatpush1.bf16.msra.mxu0 0
      %1105 = vmatprep.subr.bf16.mxu0 0
      %1106 = vmatpush1.bf16.msra.mxu0 0
      %1107 = vmatprep.subr.bf16.mxu0 0
      %1108 = vmatpush1.bf16.msra.mxu0 0
      %1109 = vmatprep.subr.bf16.mxu0 0
      %1110 = vmatpush1.bf16.msra.mxu0 0
      %1111 = vmatprep.subr.bf16.mxu0 0
      %1112 = vmatpush1.bf16.msra.mxu0 0
      %1113 = vmatprep.mubr.bf16.mxu0 0
      %1114 = vmatmul.mubr.bf16.gmra.mrb[0].mxu0 %v1076
      %v1115 = vpop.f32.mrb[0].mxu0
      %v1116 = vadd.f32 0.0, %v1115
      %v1117 = vpop.f32.mrb[0].mxu0
      %v1118 = vpop.f32.mrb[0].mxu0
      %v1119 = vpop.f32.mrb[0].mxu0
      %1120 = vdwg.mxu0
      %v1122 = vsel %vm429, %v380, 0
      %v1125 = vsel %vm433, %v412, 0
      %1127 = vmatprep.subr.bf16.mxu0 0
      %1128 = vmatpush1.bf16.msra.mxu0 %v1125
      %1129 = vmatprep.subr.bf16.mxu0 0
      %1130 = vmatpush1.bf16.msra.mxu0 0
      %1131 = vmatprep.subr.bf16.mxu0 0
      %1132 = vmatpush1.bf16.msra.mxu0 0
      %1133 = vmatprep.subr.bf16.mxu0 0
      %1134 = vmatpush1.bf16.msra.mxu0 0
      %1135 = vmatprep.subr.bf16.mxu0 0
      %1136 = vmatpush1.bf16.msra.mxu0 0
      %1137 = vmatprep.subr.bf16.mxu0 0
      %1138 = vmatpush1.bf16.msra.mxu0 0
      %1139 = vmatprep.subr.bf16.mxu0 0
      %1140 = vmatpush1.bf16.msra.mxu0 0
      %1141 = vmatprep.subr.bf16.mxu0 0
      %1142 = vmatpush1.bf16.msra.mxu0 0
      %1143 = vmatprep.subr.bf16.mxu0 0
      %1144 = vmatpush1.bf16.msra.mxu0 0
      %1145 = vmatprep.subr.bf16.mxu0 0
      %1146 = vmatpush1.bf16.msra.mxu0 0
      %1147 = vmatprep.subr.bf16.mxu0 0
      %1148 = vmatpush1.bf16.msra.mxu0 0
      %1149 = vmatprep.subr.bf16.mxu0 0
      %1150 = vmatpush1.bf16.msra.mxu0 0
      %1151 = vmatprep.subr.bf16.mxu0 0
      %1152 = vmatpush1.bf16.msra.mxu0 0
      %1153 = vmatprep.subr.bf16.mxu0 0
      %1154 = vmatpush1.bf16.msra.mxu0 0
      %1155 = vmatprep.subr.bf16.mxu0 0
      %1156 = vmatpush1.bf16.msra.mxu0 0
      %1157 = vmatprep.subr.bf16.mxu0 0
      %1158 = vmatpush1.bf16.msra.mxu0 0
      %1159 = vmatprep.mubr.bf16.mxu0 0
      %1160 = vmatmul.mubr.bf16.gmra.mrb[0].mxu0 %v1122
      %v1161 = vpop.f32.mrb[0].mxu0
      %v1162 = vadd.f32 0.0, %v1161
      %v1163 = vpop.f32.mrb[0].mxu0
      %v1164 = vpop.f32.mrb[0].mxu0
      %v1165 = vpop.f32.mrb[0].mxu0
      %1166 = vdwg.mxu0
      %v1168 = vsel %vm429, %v381, 0
      %v1171 = vsel %vm433, %v413, 0
      %1173 = vmatprep.subr.bf16.mxu0 0
      %1174 = vmatpush1.bf16.msra.mxu0 %v1171
      %1175 = vmatprep.subr.bf16.mxu0 0
      %1176 = vmatpush1.bf16.msra.mxu0 0
      %1177 = vmatprep.subr.bf16.mxu0 0
      %1178 = vmatpush1.bf16.msra.mxu0 0
      %1179 = vmatprep.subr.bf16.mxu0 0
      %1180 = vmatpush1.bf16.msra.mxu0 0
      %1181 = vmatprep.subr.bf16.mxu0 0
      %1182 = vmatpush1.bf16.msra.mxu0 0
      %1183 = vmatprep.subr.bf16.mxu0 0
      %1184 = vmatpush1.bf16.msra.mxu0 0
      %1185 = vmatprep.subr.bf16.mxu0 0
      %1186 = vmatpush1.bf16.msra.mxu0 0
      %1187 = vmatprep.subr.bf16.mxu0 0
      %1188 = vmatpush1.bf16.msra.mxu0 0
      %1189 = vmatprep.subr.bf16.mxu0 0
      %1190 = vmatpush1.bf16.msra.mxu0 0
      %1191 = vmatprep.subr.bf16.mxu0 0
      %1192 = vmatpush1.bf16.msra.mxu0 0
      %1193 = vmatprep.subr.bf16.mxu0 0
      %1194 = vmatpush1.bf16.msra.mxu0 0
      %1195 = vmatprep.subr.bf16.mxu0 0
      %1196 = vmatpush1.bf16.msra.mxu0 0
      %1197 = vmatprep.subr.bf16.mxu0 0
      %1198 = vmatpush1.bf16.msra.mxu0 0
      %1199 = vmatprep.subr.bf16.mxu0 0
      %1200 = vmatpush1.bf16.msra.mxu0 0
      %1201 = vmatprep.subr.bf16.mxu0 0
      %1202 = vmatpush1.bf16.msra.mxu0 0
      %1203 = vmatprep.subr.bf16.mxu0 0
      %1204 = vmatpush1.bf16.msra.mxu0 0
      %1205 = vmatprep.mubr.bf16.mxu0 0
      %1206 = vmatmul.mubr.bf16.gmra.mrb[0].mxu0 %v1168
      %v1207 = vpop.f32.mrb[0].mxu0
      %v1208 = vadd.f32 0.0, %v1207
      %v1209 = vpop.f32.mrb[0].mxu0
      %v1210 = vpop.f32.mrb[0].mxu0
      %v1211 = vpop.f32.mrb[0].mxu0
      %1212 = vdwg.mxu0
      %v1214 = vsel %vm429, %v382, 0
      %v1217 = vsel %vm433, %v414, 0
      %1219 = vmatprep.subr.bf16.mxu0 0
      %1220 = vmatpush1.bf16.msra.mxu0 %v1217
      %1221 = vmatprep.subr.bf16.mxu0 0
      %1222 = vmatpush1.bf16.msra.mxu0 0
      %1223 = vmatprep.subr.bf16.mxu0 0
      %1224 = vmatpush1.bf16.msra.mxu0 0
      %1225 = vmatprep.subr.bf16.mxu0 0
      %1226 = vmatpush1.bf16.msra.mxu0 0
      %1227 = vmatprep.subr.bf16.mxu0 0
      %1228 = vmatpush1.bf16.msra.mxu0 0
      %1229 = vmatprep.subr.bf16.mxu0 0
      %1230 = vmatpush1.bf16.msra.mxu0 0
      %1231 = vmatprep.subr.bf16.mxu0 0
      %1232 = vmatpush1.bf16.msra.mxu0 0
      %1233 = vmatprep.subr.bf16.mxu0 0
      %1234 = vmatpush1.bf16.msra.mxu0 0
      %1235 = vmatprep.subr.bf16.mxu0 0
      %1236 = vmatpush1.bf16.msra.mxu0 0
      %1237 = vmatprep.subr.bf16.mxu0 0
      %1238 = vmatpush1.bf16.msra.mxu0 0
      %1239 = vmatprep.subr.bf16.mxu0 0
      %1240 = vmatpush1.bf16.msra.mxu0 0
      %1241 = vmatprep.subr.bf16.mxu0 0
      %1242 = vmatpush1.bf16.msra.mxu0 0
      %1243 = vmatprep.subr.bf16.mxu0 0
      %1244 = vmatpush1.bf16.msra.mxu0 0
      %1245 = vmatprep.subr.bf16.mxu0 0
      %1246 = vmatpush1.bf16.msra.mxu0 0
      %1247 = vmatprep.subr.bf16.mxu0 0
      %1248 = vmatpush1.bf16.msra.mxu0 0
      %1249 = vmatprep.subr.bf16.mxu0 0
      %1250 = vmatpush1.bf16.msra.mxu0 0
      %1251 = vmatprep.mubr.bf16.mxu0 0
      %1252 = vmatmul.mubr.bf16.gmra.mrb[0].mxu0 %v1214
      %v1253 = vpop.f32.mrb[0].mxu0
      %v1254 = vadd.f32 0.0, %v1253
      %v1255 = vpop.f32.mrb[0].mxu0
      %v1256 = vpop.f32.mrb[0].mxu0
      %v1257 = vpop.f32.mrb[0].mxu0
      %1258 = vdwg.mxu0
      %v1260 = vsel %vm429, %v383, 0
      %v1263 = vsel %vm433, %v415, 0
      %1265 = vmatprep.subr.bf16.mxu0 0
      %1266 = vmatpush1.bf16.msra.mxu0 %v1263
      %1267 = vmatprep.subr.bf16.mxu0 0
      %1268 = vmatpush1.bf16.msra.mxu0 0
      %1269 = vmatprep.subr.bf16.mxu0 0
      %1270 = vmatpush1.bf16.msra.mxu0 0
      %1271 = vmatprep.subr.bf16.mxu0 0
      %1272 = vmatpush1.bf16.msra.mxu0 0
      %1273 = vmatprep.subr.bf16.mxu0 0
      %1274 = vmatpush1.bf16.msra.mxu0 0
      %1275 = vmatprep.subr.bf16.mxu0 0
      %1276 = vmatpush1.bf16.msra.mxu0 0
      %1277 = vmatprep.subr.bf16.mxu0 0
      %1278 = vmatpush1.bf16.msra.mxu0 0
      %1279 = vmatprep.subr.bf16.mxu0 0
      %1280 = vmatpush1.bf16.msra.mxu0 0
      %1281 = vmatprep.subr.bf16.mxu0 0
      %1282 = vmatpush1.bf16.msra.mxu0 0
      %1283 = vmatprep.subr.bf16.mxu0 0
      %1284 = vmatpush1.bf16.msra.mxu0 0
      %1285 = vmatprep.subr.bf16.mxu0 0
      %1286 = vmatpush1.bf16.msra.mxu0 0
      %1287 = vmatprep.subr.bf16.mxu0 0
      %1288 = vmatpush1.bf16.msra.mxu0 0
      %1289 = vmatprep.subr.bf16.mxu0 0
      %1290 = vmatpush1.bf16.msra.mxu0 0
      %1291 = vmatprep.subr.bf16.mxu0 0
      %1292 = vmatpush1.bf16.msra.mxu0 0
      %1293 = vmatprep.subr.bf16.mxu0 0
      %1294 = vmatpush1.bf16.msra.mxu0 0
      %1295 = vmatprep.subr.bf16.mxu0 0
      %1296 = vmatpush1.bf16.msra.mxu0 0
      %1297 = vmatprep.mubr.bf16.mxu0 0
      %1298 = vmatmul.mubr.bf16.gmra.mrb[0].mxu0 %v1260
      %v1299 = vpop.f32.mrb[0].mxu0
      %v1300 = vadd.f32 0.0, %v1299
      %v1301 = vpop.f32.mrb[0].mxu0
      %v1302 = vpop.f32.mrb[0].mxu0
      %v1303 = vpop.f32.mrb[0].mxu0
      %1304 = vdwg.mxu0
      %v1306 = vsel %vm429, %v384, 0
      %v1309 = vsel %vm433, %v416, 0
      %1311 = vmatprep.subr.bf16.mxu0 0
      %1312 = vmatpush1.bf16.msra.mxu0 %v1309
      %1313 = vmatprep.subr.bf16.mxu0 0
      %1314 = vmatpush1.bf16.msra.mxu0 0
      %1315 = vmatprep.subr.bf16.mxu0 0
      %1316 = vmatpush1.bf16.msra.mxu0 0
      %1317 = vmatprep.subr.bf16.mxu0 0
      %1318 = vmatpush1.bf16.msra.mxu0 0
      %1319 = vmatprep.subr.bf16.mxu0 0
      %1320 = vmatpush1.bf16.msra.mxu0 0
      %1321 = vmatprep.subr.bf16.mxu0 0
      %1322 = vmatpush1.bf16.msra.mxu0 0
      %1323 = vmatprep.subr.bf16.mxu0 0
      %1324 = vmatpush1.bf16.msra.mxu0 0
      %1325 = vmatprep.subr.bf16.mxu0 0
      %1326 = vmatpush1.bf16.msra.mxu0 0
      %1327 = vmatprep.subr.bf16.mxu0 0
      %1328 = vmatpush1.bf16.msra.mxu0 0
      %1329 = vmatprep.subr.bf16.mxu0 0
      %1330 = vmatpush1.bf16.msra.mxu0 0
      %1331 = vmatprep.subr.bf16.mxu0 0
      %1332 = vmatpush1.bf16.msra.mxu0 0
      %1333 = vmatprep.subr.bf16.mxu0 0
      %1334 = vmatpush1.bf16.msra.mxu0 0
      %1335 = vmatprep.subr.bf16.mxu0 0
      %1336 = vmatpush1.bf16.msra.mxu0 0
      %1337 = vmatprep.subr.bf16.mxu0 0
      %1338 = vmatpush1.bf16.msra.mxu0 0
      %1339 = vmatprep.subr.bf16.mxu0 0
      %1340 = vmatpush1.bf16.msra.mxu0 0
      %1341 = vmatprep.subr.bf16.mxu0 0
      %1342 = vmatpush1.bf16.msra.mxu0 0
      %1343 = vmatprep.mubr.bf16.mxu0 0
      %1344 = vmatmul.mubr.bf16.gmra.mrb[0].mxu0 %v1306
      %v1345 = vpop.f32.mrb[0].mxu0
      %v1346 = vadd.f32 0.0, %v1345
      %v1347 = vpop.f32.mrb[0].mxu0
      %v1348 = vpop.f32.mrb[0].mxu0
      %v1349 = vpop.f32.mrb[0].mxu0
      %1350 = vdwg.mxu0
      %v1352 = vsel %vm429, %v385, 0
      %v1355 = vsel %vm433, %v417, 0
      %1357 = vmatprep.subr.bf16.mxu0 0
      %1358 = vmatpush1.bf16.msra.mxu0 %v1355
      %1359 = vmatprep.subr.bf16.mxu0 0
      %1360 = vmatpush1.bf16.msra.mxu0 0
      %1361 = vmatprep.subr.bf16.mxu0 0
      %1362 = vmatpush1.bf16.msra.mxu0 0
      %1363 = vmatprep.subr.bf16.mxu0 0
      %1364 = vmatpush1.bf16.msra.mxu0 0
      %1365 = vmatprep.subr.bf16.mxu0 0
      %1366 = vmatpush1.bf16.msra.mxu0 0
      %1367 = vmatprep.subr.bf16.mxu0 0
      %1368 = vmatpush1.bf16.msra.mxu0 0
      %1369 = vmatprep.subr.bf16.mxu0 0
      %1370 = vmatpush1.bf16.msra.mxu0 0
      %1371 = vmatprep.subr.bf16.mxu0 0
      %1372 = vmatpush1.bf16.msra.mxu0 0
      %1373 = vmatprep.subr.bf16.mxu0 0
      %1374 = vmatpush1.bf16.msra.mxu0 0
      %1375 = vmatprep.subr.bf16.mxu0 0
      %1376 = vmatpush1.bf16.msra.mxu0 0
      %1377 = vmatprep.subr.bf16.mxu0 0
      %1378 = vmatpush1.bf16.msra.mxu0 0
      %1379 = vmatprep.subr.bf16.mxu0 0
      %1380 = vmatpush1.bf16.msra.mxu0 0
      %1381 = vmatprep.subr.bf16.mxu0 0
      %1382 = vmatpush1.bf16.msra.mxu0 0
      %1383 = vmatprep.subr.bf16.mxu0 0
      %1384 = vmatpush1.bf16.msra.mxu0 0
      %1385 = vmatprep.subr.bf16.mxu0 0
      %1386 = vmatpush1.bf16.msra.mxu0 0
      %1387 = vmatprep.subr.bf16.mxu0 0
      %1388 = vmatpush1.bf16.msra.mxu0 0
      %1389 = vmatprep.mubr.bf16.mxu0 0
      %1390 = vmatmul.mubr.bf16.gmra.mrb[0].mxu0 %v1352
      %v1391 = vpop.f32.mrb[0].mxu0
      %v1392 = vadd.f32 0.0, %v1391
      %v1393 = vpop.f32.mrb[0].mxu0
      %v1394 = vpop.f32.mrb[0].mxu0
      %v1395 = vpop.f32.mrb[0].mxu0
      %1396 = vdwg.mxu0
      %v1398 = vsel %vm429, %v386, 0
      %v1401 = vsel %vm433, %v418, 0
      %1403 = vmatprep.subr.bf16.mxu0 0
      %1404 = vmatpush1.bf16.msra.mxu0 %v1401
      %1405 = vmatprep.subr.bf16.mxu0 0
      %1406 = vmatpush1.bf16.msra.mxu0 0
      %1407 = vmatprep.subr.bf16.mxu0 0
      %1408 = vmatpush1.bf16.msra.mxu0 0
      %1409 = vmatprep.subr.bf16.mxu0 0
      %1410 = vmatpush1.bf16.msra.mxu0 0
      %1411 = vmatprep.subr.bf16.mxu0 0
      %1412 = vmatpush1.bf16.msra.mxu0 0
      %1413 = vmatprep.subr.bf16.mxu0 0
      %1414 = vmatpush1.bf16.msra.mxu0 0
      %1415 = vmatprep.subr.bf16.mxu0 0
      %1416 = vmatpush1.bf16.msra.mxu0 0
      %1417 = vmatprep.subr.bf16.mxu0 0
      %1418 = vmatpush1.bf16.msra.mxu0 0
      %1419 = vmatprep.subr.bf16.mxu0 0
      %1420 = vmatpush1.bf16.msra.mxu0 0
      %1421 = vmatprep.subr.bf16.mxu0 0
      %1422 = vmatpush1.bf16.msra.mxu0 0
      %1423 = vmatprep.subr.bf16.mxu0 0
      %1424 = vmatpush1.bf16.msra.mxu0 0
      %1425 = vmatprep.subr.bf16.mxu0 0
      %1426 = vmatpush1.bf16.msra.mxu0 0
      %1427 = vmatprep.subr.bf16.mxu0 0
      %1428 = vmatpush1.bf16.msra.mxu0 0
      %1429 = vmatprep.subr.bf16.mxu0 0
      %1430 = vmatpush1.bf16.msra.mxu0 0
      %1431 = vmatprep.subr.bf16.mxu0 0
      %1432 = vmatpush1.bf16.msra.mxu0 0
      %1433 = vmatprep.subr.bf16.mxu0 0
      %1434 = vmatpush1.bf16.msra.mxu0 0
      %1435 = vmatprep.mubr.bf16.mxu0 0
      %1436 = vmatmul.mubr.bf16.gmra.mrb[0].mxu0 %v1398
      %v1437 = vpop.f32.mrb[0].mxu0
      %v1438 = vadd.f32 0.0, %v1437
      %v1439 = vpop.f32.mrb[0].mxu0
      %v1440 = vpop.f32.mrb[0].mxu0
      %v1441 = vpop.f32.mrb[0].mxu0
      %1442 = vdwg.mxu0
      %v1444 = vsel %vm429, %v387, 0
      %v1447 = vsel %vm433, %v419, 0
      %1449 = vmatprep.subr.bf16.mxu0 0
      %1450 = vmatpush1.bf16.msra.mxu0 %v1447
      %1451 = vmatprep.subr.bf16.mxu0 0
      %1452 = vmatpush1.bf16.msra.mxu0 0
      %1453 = vmatprep.subr.bf16.mxu0 0
      %1454 = vmatpush1.bf16.msra.mxu0 0
      %1455 = vmatprep.subr.bf16.mxu0 0
      %1456 = vmatpush1.bf16.msra.mxu0 0
      %1457 = vmatprep.subr.bf16.mxu0 0
      %1458 = vmatpush1.bf16.msra.mxu0 0
      %1459 = vmatprep.subr.bf16.mxu0 0
      %1460 = vmatpush1.bf16.msra.mxu0 0
      %1461 = vmatprep.subr.bf16.mxu0 0
      %1462 = vmatpush1.bf16.msra.mxu0 0
      %1463 = vmatprep.subr.bf16.mxu0 0
      %1464 = vmatpush1.bf16.msra.mxu0 0
      %1465 = vmatprep.subr.bf16.mxu0 0
      %1466 = vmatpush1.bf16.msra.mxu0 0
      %1467 = vmatprep.subr.bf16.mxu0 0
      %1468 = vmatpush1.bf16.msra.mxu0 0
      %1469 = vmatprep.subr.bf16.mxu0 0
      %1470 = vmatpush1.bf16.msra.mxu0 0
      %1471 = vmatprep.subr.bf16.mxu0 0
      %1472 = vmatpush1.bf16.msra.mxu0 0
      %1473 = vmatprep.subr.bf16.mxu0 0
      %1474 = vmatpush1.bf16.msra.mxu0 0
      %1475 = vmatprep.subr.bf16.mxu0 0
      %1476 = vmatpush1.bf16.msra.mxu0 0
      %1477 = vmatprep.subr.bf16.mxu0 0
      %1478 = vmatpush1.bf16.msra.mxu0 0
      %1479 = vmatprep.subr.bf16.mxu0 0
      %1480 = vmatpush1.bf16.msra.mxu0 0
      %1481 = vmatprep.mubr.bf16.mxu0 0
      %1482 = vmatmul.mubr.bf16.gmra.mrb[0].mxu0 %v1444
      %v1483 = vpop.f32.mrb[0].mxu0
      %v1484 = vadd.f32 0.0, %v1483
      %v1485 = vpop.f32.mrb[0].mxu0
      %v1486 = vpop.f32.mrb[0].mxu0
      %v1487 = vpop.f32.mrb[0].mxu0
      %1488 = vdwg.mxu0
      %v1490 = vsel %vm429, %v388, 0
      %v1493 = vsel %vm433, %v420, 0
      %1495 = vmatprep.subr.bf16.mxu0 0
      %1496 = vmatpush1.bf16.msra.mxu0 %v1493
      %1497 = vmatprep.subr.bf16.mxu0 0
      %1498 = vmatpush1.bf16.msra.mxu0 0
      %1499 = vmatprep.subr.bf16.mxu0 0
      %1500 = vmatpush1.bf16.msra.mxu0 0
      %1501 = vmatprep.subr.bf16.mxu0 0
      %1502 = vmatpush1.bf16.msra.mxu0 0
      %1503 = vmatprep.subr.bf16.mxu0 0
      %1504 = vmatpush1.bf16.msra.mxu0 0
      %1505 = vmatprep.subr.bf16.mxu0 0
      %1506 = vmatpush1.bf16.msra.mxu0 0
      %1507 = vmatprep.subr.bf16.mxu0 0
      %1508 = vmatpush1.bf16.msra.mxu0 0
      %1509 = vmatprep.subr.bf16.mxu0 0
      %1510 = vmatpush1.bf16.msra.mxu0 0
      %1511 = vmatprep.subr.bf16.mxu0 0
      %1512 = vmatpush1.bf16.msra.mxu0 0
      %1513 = vmatprep.subr.bf16.mxu0 0
      %1514 = vmatpush1.bf16.msra.mxu0 0
      %1515 = vmatprep.subr.bf16.mxu0 0
      %1516 = vmatpush1.bf16.msra.mxu0 0
      %1517 = vmatprep.subr.bf16.mxu0 0
      %1518 = vmatpush1.bf16.msra.mxu0 0
      %1519 = vmatprep.subr.bf16.mxu0 0
      %1520 = vmatpush1.bf16.msra.mxu0 0
      %1521 = vmatprep.subr.bf16.mxu0 0
      %1522 = vmatpush1.bf16.msra.mxu0 0
      %1523 = vmatprep.subr.bf16.mxu0 0
      %1524 = vmatpush1.bf16.msra.mxu0 0
      %1525 = vmatprep.subr.bf16.mxu0 0
      %1526 = vmatpush1.bf16.msra.mxu0 0
      %1527 = vmatprep.mubr.bf16.mxu0 0
      %1528 = vmatmul.mubr.bf16.gmra.mrb[0].mxu0 %v1490
      %v1529 = vpop.f32.mrb[0].mxu0
      %v1530 = vadd.f32 0.0, %v1529
      %v1531 = vpop.f32.mrb[0].mxu0
      %v1532 = vpop.f32.mrb[0].mxu0
      %v1533 = vpop.f32.mrb[0].mxu0
      %1534 = vdwg.mxu0
      %v1536 = vsel %vm429, %v389, 0
      %v1539 = vsel %vm433, %v421, 0
      %1541 = vmatprep.subr.bf16.mxu0 0
      %1542 = vmatpush1.bf16.msra.mxu0 %v1539
      %1543 = vmatprep.subr.bf16.mxu0 0
      %1544 = vmatpush1.bf16.msra.mxu0 0
      %1545 = vmatprep.subr.bf16.mxu0 0
      %1546 = vmatpush1.bf16.msra.mxu0 0
      %1547 = vmatprep.subr.bf16.mxu0 0
      %1548 = vmatpush1.bf16.msra.mxu0 0
      %1549 = vmatprep.subr.bf16.mxu0 0
      %1550 = vmatpush1.bf16.msra.mxu0 0
      %1551 = vmatprep.subr.bf16.mxu0 0
      %1552 = vmatpush1.bf16.msra.mxu0 0
      %1553 = vmatprep.subr.bf16.mxu0 0
      %1554 = vmatpush1.bf16.msra.mxu0 0
      %1555 = vmatprep.subr.bf16.mxu0 0
      %1556 = vmatpush1.bf16.msra.mxu0 0
      %1557 = vmatprep.subr.bf16.mxu0 0
      %1558 = vmatpush1.bf16.msra.mxu0 0
      %1559 = vmatprep.subr.bf16.mxu0 0
      %1560 = vmatpush1.bf16.msra.mxu0 0
      %1561 = vmatprep.subr.bf16.mxu0 0
      %1562 = vmatpush1.bf16.msra.mxu0 0
      %1563 = vmatprep.subr.bf16.mxu0 0
      %1564 = vmatpush1.bf16.msra.mxu0 0
      %1565 = vmatprep.subr.bf16.mxu0 0
      %1566 = vmatpush1.bf16.msra.mxu0 0
      %1567 = vmatprep.subr.bf16.mxu0 0
      %1568 = vmatpush1.bf16.msra.mxu0 0
      %1569 = vmatprep.subr.bf16.mxu0 0
      %1570 = vmatpush1.bf16.msra.mxu0 0
      %1571 = vmatprep.subr.bf16.mxu0 0
      %1572 = vmatpush1.bf16.msra.mxu0 0
      %1573 = vmatprep.mubr.bf16.mxu0 0
      %1574 = vmatmul.mubr.bf16.gmra.mrb[0].mxu0 %v1536
      %v1575 = vpop.f32.mrb[0].mxu0
      %v1576 = vadd.f32 0.0, %v1575
      %v1577 = vpop.f32.mrb[0].mxu0
      %v1578 = vpop.f32.mrb[0].mxu0
      %v1579 = vpop.f32.mrb[0].mxu0
      %1580 = vdwg.mxu0
      %v1582 = vsel %vm429, %v390, 0
      %v1585 = vsel %vm433, %v422, 0
      %1587 = vmatprep.subr.bf16.mxu0 0
      %1588 = vmatpush1.bf16.msra.mxu0 %v1585
      %1589 = vmatprep.subr.bf16.mxu0 0
      %1590 = vmatpush1.bf16.msra.mxu0 0
      %1591 = vmatprep.subr.bf16.mxu0 0
      %1592 = vmatpush1.bf16.msra.mxu0 0
      %1593 = vmatprep.subr.bf16.mxu0 0
      %1594 = vmatpush1.bf16.msra.mxu0 0
      %1595 = vmatprep.subr.bf16.mxu0 0
      %1596 = vmatpush1.bf16.msra.mxu0 0
      %1597 = vmatprep.subr.bf16.mxu0 0
      %1598 = vmatpush1.bf16.msra.mxu0 0
      %1599 = vmatprep.subr.bf16.mxu0 0
      %1600 = vmatpush1.bf16.msra.mxu0 0
      %1601 = vmatprep.subr.bf16.mxu0 0
      %1602 = vmatpush1.bf16.msra.mxu0 0
      %1603 = vmatprep.subr.bf16.mxu0 0
      %1604 = vmatpush1.bf16.msra.mxu0 0
      %1605 = vmatprep.subr.bf16.mxu0 0
      %1606 = vmatpush1.bf16.msra.mxu0 0
      %1607 = vmatprep.subr.bf16.mxu0 0
      %1608 = vmatpush1.bf16.msra.mxu0 0
      %1609 = vmatprep.subr.bf16.mxu0 0
      %1610 = vmatpush1.bf16.msra.mxu0 0
      %1611 = vmatprep.subr.bf16.mxu0 0
      %1612 = vmatpush1.bf16.msra.mxu0 0
      %1613 = vmatprep.subr.bf16.mxu0 0
      %1614 = vmatpush1.bf16.msra.mxu0 0
      %1615 = vmatprep.subr.bf16.mxu0 0
      %1616 = vmatpush1.bf16.msra.mxu0 0
      %1617 = vmatprep.subr.bf16.mxu0 0
      %1618 = vmatpush1.bf16.msra.mxu0 0
      %1619 = vmatprep.mubr.bf16.mxu0 0
      %1620 = vmatmul.mubr.bf16.gmra.mrb[0].mxu0 %v1582
      %v1621 = vpop.f32.mrb[0].mxu0
      %v1622 = vadd.f32 0.0, %v1621
      %v1623 = vpop.f32.mrb[0].mxu0
      %v1624 = vpop.f32.mrb[0].mxu0
      %v1625 = vpop.f32.mrb[0].mxu0
      %1626 = vdwg.mxu0
      %v1628 = vsel %vm429, %v391, 0
      %v1631 = vsel %vm433, %v423, 0
      %1633 = vmatprep.subr.bf16.mxu0 0
      %1634 = vmatpush1.bf16.msra.mxu0 %v1631
      %1635 = vmatprep.subr.bf16.mxu0 0
      %1636 = vmatpush1.bf16.msra.mxu0 0
      %1637 = vmatprep.subr.bf16.mxu0 0
      %1638 = vmatpush1.bf16.msra.mxu0 0
      %1639 = vmatprep.subr.bf16.mxu0 0
      %1640 = vmatpush1.bf16.msra.mxu0 0
      %1641 = vmatprep.subr.bf16.mxu0 0
      %1642 = vmatpush1.bf16.msra.mxu0 0
      %1643 = vmatprep.subr.bf16.mxu0 0
      %1644 = vmatpush1.bf16.msra.mxu0 0
      %1645 = vmatprep.subr.bf16.mxu0 0
      %1646 = vmatpush1.bf16.msra.mxu0 0
      %1647 = vmatprep.subr.bf16.mxu0 0
      %1648 = vmatpush1.bf16.msra.mxu0 0
      %1649 = vmatprep.subr.bf16.mxu0 0
      %1650 = vmatpush1.bf16.msra.mxu0 0
      %1651 = vmatprep.subr.bf16.mxu0 0
      %1652 = vmatpush1.bf16.msra.mxu0 0
      %1653 = vmatprep.subr.bf16.mxu0 0
      %1654 = vmatpush1.bf16.msra.mxu0 0
      %1655 = vmatprep.subr.bf16.mxu0 0
      %1656 = vmatpush1.bf16.msra.mxu0 0
      %1657 = vmatprep.subr.bf16.mxu0 0
      %1658 = vmatpush1.bf16.msra.mxu0 0
      %1659 = vmatprep.subr.bf16.mxu0 0
      %1660 = vmatpush1.bf16.msra.mxu0 0
      %1661 = vmatprep.subr.bf16.mxu0 0
      %1662 = vmatpush1.bf16.msra.mxu0 0
      %1663 = vmatprep.subr.bf16.mxu0 0
      %1664 = vmatpush1.bf16.msra.mxu0 0
      %1665 = vmatprep.mubr.bf16.mxu0 0
      %1666 = vmatmul.mubr.bf16.gmra.mrb[0].mxu0 %v1628
      %v1667 = vpop.f32.mrb[0].mxu0
      %v1668 = vadd.f32 0.0, %v1667
      %v1669 = vpop.f32.mrb[0].mxu0
      %v1670 = vpop.f32.mrb[0].mxu0
      %v1671 = vpop.f32.mrb[0].mxu0
      %1672 = vdwg.mxu0
      %v1674 = vsel %vm429, %v392, 0
      %v1677 = vsel %vm433, %v424, 0
      %1679 = vmatprep.subr.bf16.mxu0 0
      %1680 = vmatpush1.bf16.msra.mxu0 %v1677
      %1681 = vmatprep.subr.bf16.mxu0 0
      %1682 = vmatpush1.bf16.msra.mxu0 0
      %1683 = vmatprep.subr.bf16.mxu0 0
      %1684 = vmatpush1.bf16.msra.mxu0 0
      %1685 = vmatprep.subr.bf16.mxu0 0
      %1686 = vmatpush1.bf16.msra.mxu0 0
      %1687 = vmatprep.subr.bf16.mxu0 0
      %1688 = vmatpush1.bf16.msra.mxu0 0
      %1689 = vmatprep.subr.bf16.mxu0 0
      %1690 = vmatpush1.bf16.msra.mxu0 0
      %1691 = vmatprep.subr.bf16.mxu0 0
      %1692 = vmatpush1.bf16.msra.mxu0 0
      %1693 = vmatprep.subr.bf16.mxu0 0
      %1694 = vmatpush1.bf16.msra.mxu0 0
      %1695 = vmatprep.subr.bf16.mxu0 0
      %1696 = vmatpush1.bf16.msra.mxu0 0
      %1697 = vmatprep.subr.bf16.mxu0 0
      %1698 = vmatpush1.bf16.msra.mxu0 0
      %1699 = vmatprep.subr.bf16.mxu0 0
      %1700 = vmatpush1.bf16.msra.mxu0 0
      %1701 = vmatprep.subr.bf16.mxu0 0
      %1702 = vmatpush1.bf16.msra.mxu0 0
      %1703 = vmatprep.subr.bf16.mxu0 0
      %1704 = vmatpush1.bf16.msra.mxu0 0
      %1705 = vmatprep.subr.bf16.mxu0 0
      %1706 = vmatpush1.bf16.msra.mxu0 0
      %1707 = vmatprep.subr.bf16.mxu0 0
      %1708 = vmatpush1.bf16.msra.mxu0 0
      %1709 = vmatprep.subr.bf16.mxu0 0
      %1710 = vmatpush1.bf16.msra.mxu0 0
      %1711 = vmatprep.mubr.bf16.mxu0 0
      %1712 = vmatmul.mubr.bf16.gmra.mrb[0].mxu0 %v1674
      %v1713 = vpop.f32.mrb[0].mxu0
      %v1714 = vadd.f32 0.0, %v1713
      %v1715 = vpop.f32.mrb[0].mxu0
      %v1716 = vpop.f32.mrb[0].mxu0
      %v1717 = vpop.f32.mrb[0].mxu0
      %1718 = vdwg.mxu0
      %v1720 = vsel %vm429, %v393, 0
      %v1723 = vsel %vm433, %v425, 0
      %1725 = vmatprep.subr.bf16.mxu0 0
      %1726 = vmatpush1.bf16.msra.mxu0 %v1723
      %1727 = vmatprep.subr.bf16.mxu0 0
      %1728 = vmatpush1.bf16.msra.mxu0 0
      %1729 = vmatprep.subr.bf16.mxu0 0
      %1730 = vmatpush1.bf16.msra.mxu0 0
      %1731 = vmatprep.subr.bf16.mxu0 0
      %1732 = vmatpush1.bf16.msra.mxu0 0
      %1733 = vmatprep.subr.bf16.mxu0 0
      %1734 = vmatpush1.bf16.msra.mxu0 0
      %1735 = vmatprep.subr.bf16.mxu0 0
      %1736 = vmatpush1.bf16.msra.mxu0 0
      %1737 = vmatprep.subr.bf16.mxu0 0
      %1738 = vmatpush1.bf16.msra.mxu0 0
      %1739 = vmatprep.subr.bf16.mxu0 0
      %1740 = vmatpush1.bf16.msra.mxu0 0
      %1741 = vmatprep.subr.bf16.mxu0 0
      %1742 = vmatpush1.bf16.msra.mxu0 0
      %1743 = vmatprep.subr.bf16.mxu0 0
      %1744 = vmatpush1.bf16.msra.mxu0 0
      %1745 = vmatprep.subr.bf16.mxu0 0
      %1746 = vmatpush1.bf16.msra.mxu0 0
      %1747 = vmatprep.subr.bf16.mxu0 0
      %1748 = vmatpush1.bf16.msra.mxu0 0
      %1749 = vmatprep.subr.bf16.mxu0 0
      %1750 = vmatpush1.bf16.msra.mxu0 0
      %1751 = vmatprep.subr.bf16.mxu0 0
      %1752 = vmatpush1.bf16.msra.mxu0 0
      %1753 = vmatprep.subr.bf16.mxu0 0
      %1754 = vmatpush1.bf16.msra.mxu0 0
      %1755 = vmatprep.subr.bf16.mxu0 0
      %1756 = vmatpush1.bf16.msra.mxu0 0
      %1757 = vmatprep.mubr.bf16.mxu0 0
      %1758 = vmatmul.mubr.bf16.gmra.mrb[0].mxu0 %v1720
      %v1759 = vpop.f32.mrb[0].mxu0
      %v1760 = vadd.f32 0.0, %v1759
      %v1761 = vpop.f32.mrb[0].mxu0
      %v1762 = vpop.f32.mrb[0].mxu0
      %v1763 = vpop.f32.mrb[0].mxu0
      %1764 = vdwg.mxu0
      %v1766 = vsel %vm429, %v394, 0
      %v1769 = vsel %vm433, %v426, 0
      %1771 = vmatprep.subr.bf16.mxu0 0
      %1772 = vmatpush1.bf16.msra.mxu0 %v1769
      %1773 = vmatprep.subr.bf16.mxu0 0
      %1774 = vmatpush1.bf16.msra.mxu0 0
      %1775 = vmatprep.subr.bf16.mxu0 0
      %1776 = vmatpush1.bf16.msra.mxu0 0
      %1777 = vmatprep.subr.bf16.mxu0 0
      %1778 = vmatpush1.bf16.msra.mxu0 0
      %1779 = vmatprep.subr.bf16.mxu0 0
      %1780 = vmatpush1.bf16.msra.mxu0 0
      %1781 = vmatprep.subr.bf16.mxu0 0
      %1782 = vmatpush1.bf16.msra.mxu0 0
      %1783 = vmatprep.subr.bf16.mxu0 0
      %1784 = vmatpush1.bf16.msra.mxu0 0
      %1785 = vmatprep.subr.bf16.mxu0 0
      %1786 = vmatpush1.bf16.msra.mxu0 0
      %1787 = vmatprep.subr.bf16.mxu0 0
      %1788 = vmatpush1.bf16.msra.mxu0 0
      %1789 = vmatprep.subr.bf16.mxu0 0
      %1790 = vmatpush1.bf16.msra.mxu0 0
      %1791 = vmatprep.subr.bf16.mxu0 0
      %1792 = vmatpush1.bf16.msra.mxu0 0
      %1793 = vmatprep.subr.bf16.mxu0 0
      %1794 = vmatpush1.bf16.msra.mxu0 0
      %1795 = vmatprep.subr.bf16.mxu0 0
      %1796 = vmatpush1.bf16.msra.mxu0 0
      %1797 = vmatprep.subr.bf16.mxu0 0
      %1798 = vmatpush1.bf16.msra.mxu0 0
      %1799 = vmatprep.subr.bf16.mxu0 0
      %1800 = vmatpush1.bf16.msra.mxu0 0
      %1801 = vmatprep.subr.bf16.mxu0 0
      %1802 = vmatpush1.bf16.msra.mxu0 0
      %1803 = vmatprep.mubr.bf16.mxu0 0
      %1804 = vmatmul.mubr.bf16.gmra.mrb[0].mxu0 %v1766
      %v1805 = vpop.f32.mrb[0].mxu0
      %v1806 = vadd.f32 0.0, %v1805
      %v1807 = vpop.f32.mrb[0].mxu0
      %v1808 = vpop.f32.mrb[0].mxu0
      %v1809 = vpop.f32.mrb[0].mxu0
      %1810 = vdwg.mxu0
      %v1812 = vsel %vm429, %v395, 0
      %v1815 = vsel %vm433, %v427, 0
      %1817 = vmatprep.subr.bf16.mxu0 0
      %1818 = vmatpush1.bf16.msra.mxu0 %v1815
      %1819 = vmatprep.subr.bf16.mxu0 0
      %1820 = vmatpush1.bf16.msra.mxu0 0
      %1821 = vmatprep.subr.bf16.mxu0 0
      %1822 = vmatpush1.bf16.msra.mxu0 0
      %1823 = vmatprep.subr.bf16.mxu0 0
      %1824 = vmatpush1.bf16.msra.mxu0 0
      %1825 = vmatprep.subr.bf16.mxu0 0
      %1826 = vmatpush1.bf16.msra.mxu0 0
      %1827 = vmatprep.subr.bf16.mxu0 0
      %1828 = vmatpush1.bf16.msra.mxu0 0
      %1829 = vmatprep.subr.bf16.mxu0 0
      %1830 = vmatpush1.bf16.msra.mxu0 0
      %1831 = vmatprep.subr.bf16.mxu0 0
      %1832 = vmatpush1.bf16.msra.mxu0 0
      %1833 = vmatprep.subr.bf16.mxu0 0
      %1834 = vmatpush1.bf16.msra.mxu0 0
      %1835 = vmatprep.subr.bf16.mxu0 0
      %1836 = vmatpush1.bf16.msra.mxu0 0
      %1837 = vmatprep.subr.bf16.mxu0 0
      %1838 = vmatpush1.bf16.msra.mxu0 0
      %1839 = vmatprep.subr.bf16.mxu0 0
      %1840 = vmatpush1.bf16.msra.mxu0 0
      %1841 = vmatprep.subr.bf16.mxu0 0
      %1842 = vmatpush1.bf16.msra.mxu0 0
      %1843 = vmatprep.subr.bf16.mxu0 0
      %1844 = vmatpush1.bf16.msra.mxu0 0
      %1845 = vmatprep.subr.bf16.mxu0 0
      %1846 = vmatpush1.bf16.msra.mxu0 0
      %1847 = vmatprep.subr.bf16.mxu0 0
      %1848 = vmatpush1.bf16.msra.mxu0 0
      %1849 = vmatprep.mubr.bf16.mxu0 0
      %1850 = vmatmul.mubr.bf16.gmra.mrb[0].mxu0 %v1812
      %v1851 = vpop.f32.mrb[0].mxu0
      %v1852 = vadd.f32 0.0, %v1851
      %v1853 = vpop.f32.mrb[0].mxu0
      %v1854 = vpop.f32.mrb[0].mxu0
      %v1855 = vpop.f32.mrb[0].mxu0
      %1856 = vdwg.mxu0
      %v1858 = vsel %vm429, %v396, 0
      %v1861 = vsel %vm433, %v428, 0
      %1863 = vmatprep.subr.bf16.mxu0 0
      %1864 = vmatpush1.bf16.msra.mxu0 %v1861
      %1865 = vmatprep.subr.bf16.mxu0 0
      %1866 = vmatpush1.bf16.msra.mxu0 0
      %1867 = vmatprep.subr.bf16.mxu0 0
      %1868 = vmatpush1.bf16.msra.mxu0 0
      %1869 = vmatprep.subr.bf16.mxu0 0
      %1870 = vmatpush1.bf16.msra.mxu0 0
      %1871 = vmatprep.subr.bf16.mxu0 0
      %1872 = vmatpush1.bf16.msra.mxu0 0
      %1873 = vmatprep.subr.bf16.mxu0 0
      %1874 = vmatpush1.bf16.msra.mxu0 0
      %1875 = vmatprep.subr.bf16.mxu0 0
      %1876 = vmatpush1.bf16.msra.mxu0 0
      %1877 = vmatprep.subr.bf16.mxu0 0
      %1878 = vmatpush1.bf16.msra.mxu0 0
      %1879 = vmatprep.subr.bf16.mxu0 0
      %1880 = vmatpush1.bf16.msra.mxu0 0
      %1881 = vmatprep.subr.bf16.mxu0 0
      %1882 = vmatpush1.bf16.msra.mxu0 0
      %1883 = vmatprep.subr.bf16.mxu0 0
      %1884 = vmatpush1.bf16.msra.mxu0 0
      %1885 = vmatprep.subr.bf16.mxu0 0
      %1886 = vmatpush1.bf16.msra.mxu0 0
      %1887 = vmatprep.subr.bf16.mxu0 0
      %1888 = vmatpush1.bf16.msra.mxu0 0
      %1889 = vmatprep.subr.bf16.mxu0 0
      %1890 = vmatpush1.bf16.msra.mxu0 0
      %1891 = vmatprep.subr.bf16.mxu0 0
      %1892 = vmatpush1.bf16.msra.mxu0 0
      %1893 = vmatprep.subr.bf16.mxu0 0
      %1894 = vmatpush1.bf16.msra.mxu0 0
      %1895 = vmatprep.mubr.bf16.mxu0 0
      %1896 = vmatmul.mubr.bf16.gmra.mrb[0].mxu0 %v1858
      %v1897 = vpop.f32.mrb[0].mxu0
      %v1898 = vadd.f32 0.0, %v1897
      %v1899 = vpop.f32.mrb[0].mxu0
      %v1900 = vpop.f32.mrb[0].mxu0
      %v1901 = vpop.f32.mrb[0].mxu0
      %1902 = vdwg.mxu0
      %v1903 = vpack.c.bf16 %v518, %v472
      %v1904 = vpack.c.bf16 %v610, %v564
      %v1905 = vpack.c.bf16 %v702, %v656
      %v1906 = vpack.c.bf16 %v794, %v748
      %v1907 = vpack.c.bf16 %v886, %v840
      %v1908 = vpack.c.bf16 %v978, %v932
      %v1909 = vpack.c.bf16 %v1070, %v1024
      %v1910 = vpack.c.bf16 %v1162, %v1116
      %v1911 = vpack.c.bf16 %v1254, %v1208
      %v1912 = vpack.c.bf16 %v1346, %v1300
      %v1913 = vpack.c.bf16 %v1438, %v1392
      %v1914 = vpack.c.bf16 %v1530, %v1484
      %v1915 = vpack.c.bf16 %v1622, %v1576
      %v1916 = vpack.c.bf16 %v1714, %v1668
      %v1917 = vpack.c.bf16 %v1806, %v1760
      %v1918 = vpack.c.bf16 %v1898, %v1852
      %v1919 = vld [vmem:[%s2] sm:$0xf]
      %v1920 = vld [vmem:[%s2 + $0x4] sm:$0xf]
      %v1921 = vld [vmem:[%s3] sm:$0x1]
      %v1923 = vlaneseq
      %v1924 = vshrl.u32 %v1923, 7
      %v1925 = vsub.s32 0, %v1924
      %v1926 = vrot.slane %v1921, %v1925
      %v1930 = vunpack.c.l.b16 %v1919
      %v1931 = vunpack.c.l.b16 %v1920
      %v1932 = vpack.c.b16 %v1931, %v1930
      %vm1934 = vcmask 130048
      %v1936 = vsel %vm1934, %v1903, 0
      %v1939 = vsel %vm1934, %v1904, 0
      %v1942 = vsel %vm1934, %v1905, 0
      %v1945 = vsel %vm1934, %v1906, 0
      %v1948 = vsel %vm1934, %v1907, 0
      %v1951 = vsel %vm1934, %v1908, 0
      %v1954 = vsel %vm1934, %v1909, 0
      %v1957 = vsel %vm1934, %v1910, 0
      %v1960 = vsel %vm1934, %v1911, 0
      %v1963 = vsel %vm1934, %v1912, 0
      %v1966 = vsel %vm1934, %v1913, 0
      %v1969 = vsel %vm1934, %v1914, 0
      %v1972 = vsel %vm1934, %v1915, 0
      %v1975 = vsel %vm1934, %v1916, 0
      %v1978 = vsel %vm1934, %v1917, 0
      %v1981 = vsel %vm1934, %v1918, 0
      %1983 = vmatprep.subr.bf16.mxu0 0
      %1984 = vmatpush1.bf16.msra.mxu0 %v1932
      %1985 = vmatprep.subr.bf16.mxu0 0
      %1986 = vmatpush1.bf16.msra.mxu0 0
      %1987 = vmatprep.subr.bf16.mxu0 0
      %1988 = vmatpush1.bf16.msra.mxu0 0
      %1989 = vmatprep.subr.bf16.mxu0 0
      %1990 = vmatpush1.bf16.msra.mxu0 0
      %1991 = vmatprep.subr.bf16.mxu0 0
      %1992 = vmatpush1.bf16.msra.mxu0 0
      %1993 = vmatprep.subr.bf16.mxu0 0
      %1994 = vmatpush1.bf16.msra.mxu0 0
      %1995 = vmatprep.subr.bf16.mxu0 0
      %1996 = vmatpush1.bf16.msra.mxu0 0
      %1997 = vmatprep.subr.bf16.mxu0 0
      %1998 = vmatpush1.bf16.msra.mxu0 0
      %1999 = vmatprep.subr.bf16.mxu0 0
      %2000 = vmatpush1.bf16.msra.mxu0 0
      %2001 = vmatprep.subr.bf16.mxu0 0
      %2002 = vmatpush1.bf16.msra.mxu0 0
      %2003 = vmatprep.subr.bf16.mxu0 0
      %2004 = vmatpush1.bf16.msra.mxu0 0
      %2005 = vmatprep.subr.bf16.mxu0 0
      %2006 = vmatpush1.bf16.msra.mxu0 0
      %2007 = vmatprep.subr.bf16.mxu0 0
      %2008 = vmatpush1.bf16.msra.mxu0 0
      %2009 = vmatprep.subr.bf16.mxu0 0
      %2010 = vmatpush1.bf16.msra.mxu0 0
      %2011 = vmatprep.subr.bf16.mxu0 0
      %2012 = vmatpush1.bf16.msra.mxu0 0
      %2013 = vmatprep.subr.bf16.mxu0 0
      %2014 = vmatpush1.bf16.msra.mxu0 0
      %2015 = vmatprep.mubr.bf16.mxu0 0
      %2016 = vmatmul.mubr.bf16.gmra.mrb[0].mxu0 %v1936
      %v2017 = vpop.f32.mrb[0].mxu0
      %v2018 = vadd.f32 %v1926, %v2017
      %v2019 = vpop.f32.mrb[0].mxu0
      %v2020 = vpop.f32.mrb[0].mxu0
      %v2021 = vadd.f32 %v1926, %v2020
      %v2022 = vpop.f32.mrb[0].mxu0
      %2023 = vmatprep.mubr.bf16.mxu0 0
      %2024 = vmatmul.mubr.bf16.gmra.mrb[0].mxu0 %v1939
      %v2025 = vpop.f32.mrb[0].mxu0
      %v2026 = vadd.f32 %v1926, %v2025
      %v2027 = vpop.f32.mrb[0].mxu0
      %v2028 = vpop.f32.mrb[0].mxu0
      %v2029 = vadd.f32 %v1926, %v2028
      %v2030 = vpop.f32.mrb[0].mxu0
      %2031 = vmatprep.mubr.bf16.mxu0 0
      %2032 = vmatmul.mubr.bf16.gmra.mrb[0].mxu0 %v1942
      %v2033 = vpop.f32.mrb[0].mxu0
      %v2034 = vadd.f32 %v1926, %v2033
      %v2035 = vpop.f32.mrb[0].mxu0
      %v2036 = vpop.f32.mrb[0].mxu0
      %v2037 = vadd.f32 %v1926, %v2036
      %v2038 = vpop.f32.mrb[0].mxu0
      %2039 = vmatprep.mubr.bf16.mxu0 0
      %2040 = vmatmul.mubr.bf16.gmra.mrb[0].mxu0 %v1945
      %v2041 = vpop.f32.mrb[0].mxu0
      %v2042 = vadd.f32 %v1926, %v2041
      %v2043 = vpop.f32.mrb[0].mxu0
      %v2044 = vpop.f32.mrb[0].mxu0
      %v2045 = vadd.f32 %v1926, %v2044
      %v2046 = vpop.f32.mrb[0].mxu0
      %2047 = vmatprep.mubr.bf16.mxu0 0
      %2048 = vmatmul.mubr.bf16.gmra.mrb[0].mxu0 %v1948
      %v2049 = vpop.f32.mrb[0].mxu0
      %v2050 = vadd.f32 %v1926, %v2049
      %v2051 = vpop.f32.mrb[0].mxu0
      %v2052 = vpop.f32.mrb[0].mxu0
      %v2053 = vadd.f32 %v1926, %v2052
      %v2054 = vpop.f32.mrb[0].mxu0
      %2055 = vmatprep.mubr.bf16.mxu0 0
      %2056 = vmatmul.mubr.bf16.gmra.mrb[0].mxu0 %v1951
      %v2057 = vpop.f32.mrb[0].mxu0
      %v2058 = vadd.f32 %v1926, %v2057
      %v2059 = vpop.f32.mrb[0].mxu0
      %v2060 = vpop.f32.mrb[0].mxu0
      %v2061 = vadd.f32 %v1926, %v2060
      %v2062 = vpop.f32.mrb[0].mxu0
      %2063 = vmatprep.mubr.bf16.mxu0 0
      %2064 = vmatmul.mubr.bf16.gmra.mrb[0].mxu0 %v1954
      %v2065 = vpop.f32.mrb[0].mxu0
      %v2066 = vadd.f32 %v1926, %v2065
      %v2067 = vpop.f32.mrb[0].mxu0
      %v2068 = vpop.f32.mrb[0].mxu0
      %v2069 = vadd.f32 %v1926, %v2068
      %v2070 = vpop.f32.mrb[0].mxu0
      %2071 = vmatprep.mubr.bf16.mxu0 0
      %2072 = vmatmul.mubr.bf16.gmra.mrb[0].mxu0 %v1957
      %v2073 = vpop.f32.mrb[0].mxu0
      %v2074 = vadd.f32 %v1926, %v2073
      %v2075 = vpop.f32.mrb[0].mxu0
      %v2076 = vpop.f32.mrb[0].mxu0
      %v2077 = vadd.f32 %v1926, %v2076
      %v2078 = vpop.f32.mrb[0].mxu0
      %2079 = vmatprep.mubr.bf16.mxu0 0
      %2080 = vmatmul.mubr.bf16.gmra.mrb[0].mxu0 %v1960
      %v2081 = vpop.f32.mrb[0].mxu0
      %v2082 = vadd.f32 %v1926, %v2081
      %v2083 = vpop.f32.mrb[0].mxu0
      %v2084 = vpop.f32.mrb[0].mxu0
      %v2085 = vadd.f32 %v1926, %v2084
      %v2086 = vpop.f32.mrb[0].mxu0
      %2087 = vmatprep.mubr.bf16.mxu0 0
      %2088 = vmatmul.mubr.bf16.gmra.mrb[0].mxu0 %v1963
      %v2089 = vpop.f32.mrb[0].mxu0
      %v2090 = vadd.f32 %v1926, %v2089
      %v2091 = vpop.f32.mrb[0].mxu0
      %v2092 = vpop.f32.mrb[0].mxu0
      %v2093 = vadd.f32 %v1926, %v2092
      %v2094 = vpop.f32.mrb[0].mxu0
      %2095 = vmatprep.mubr.bf16.mxu0 0
      %2096 = vmatmul.mubr.bf16.gmra.mrb[0].mxu0 %v1966
      %v2097 = vpop.f32.mrb[0].mxu0
      %v2098 = vadd.f32 %v1926, %v2097
      %v2099 = vpop.f32.mrb[0].mxu0
      %v2100 = vpop.f32.mrb[0].mxu0
      %v2101 = vadd.f32 %v1926, %v2100
      %v2102 = vpop.f32.mrb[0].mxu0
      %2103 = vmatprep.mubr.bf16.mxu0 0
      %2104 = vmatmul.mubr.bf16.gmra.mrb[0].mxu0 %v1969
      %v2105 = vpop.f32.mrb[0].mxu0
      %v2106 = vadd.f32 %v1926, %v2105
      %v2107 = vpop.f32.mrb[0].mxu0
      %v2108 = vpop.f32.mrb[0].mxu0
      %v2109 = vadd.f32 %v1926, %v2108
      %v2110 = vpop.f32.mrb[0].mxu0
      %2111 = vmatprep.mubr.bf16.mxu0 0
      %2112 = vmatmul.mubr.bf16.gmra.mrb[0].mxu0 %v1972
      %v2113 = vpop.f32.mrb[0].mxu0
      %v2114 = vadd.f32 %v1926, %v2113
      %v2115 = vpop.f32.mrb[0].mxu0
      %v2116 = vpop.f32.mrb[0].mxu0
      %v2117 = vadd.f32 %v1926, %v2116
      %v2118 = vpop.f32.mrb[0].mxu0
      %2119 = vmatprep.mubr.bf16.mxu0 0
      %2120 = vmatmul.mubr.bf16.gmra.mrb[0].mxu0 %v1975
      %v2121 = vpop.f32.mrb[0].mxu0
      %v2122 = vadd.f32 %v1926, %v2121
      %v2123 = vpop.f32.mrb[0].mxu0
      %v2124 = vpop.f32.mrb[0].mxu0
      %v2125 = vadd.f32 %v1926, %v2124
      %v2126 = vpop.f32.mrb[0].mxu0
      %2127 = vmatprep.mubr.bf16.mxu0 0
      %2128 = vmatmul.mubr.bf16.gmra.mrb[0].mxu0 %v1978
      %v2129 = vpop.f32.mrb[0].mxu0
      %v2130 = vadd.f32 %v1926, %v2129
      %v2131 = vpop.f32.mrb[0].mxu0
      %v2132 = vpop.f32.mrb[0].mxu0
      %v2133 = vadd.f32 %v1926, %v2132
      %v2134 = vpop.f32.mrb[0].mxu0
      %2135 = vmatprep.mubr.bf16.mxu0 0
      %2136 = vmatmul.mubr.bf16.gmra.mrb[0].mxu0 %v1981
      %v2137 = vpop.f32.mrb[0].mxu0
      %v2138 = vadd.f32 %v1926, %v2137
      %v2139 = vpop.f32.mrb[0].mxu0
      %v2140 = vpop.f32.mrb[0].mxu0
      %v2141 = vadd.f32 %v1926, %v2140
      %v2142 = vpop.f32.mrb[0].mxu0
      %2143 = vdwg.mxu0
      %v2144 = vtanh.pop %v2018
      %v2145 = vtanh.pop %v2021
      %v2146 = vtanh.pop %v2026
      %v2147 = vtanh.pop %v2029
      %v2148 = vtanh.pop %v2034
      %v2149 = vtanh.pop %v2037
      %v2150 = vtanh.pop %v2042
      %v2151 = vtanh.pop %v2045
      %v2152 = vtanh.pop %v2050
      %v2153 = vtanh.pop %v2053
      %v2154 = vtanh.pop %v2058
      %v2155 = vtanh.pop %v2061
      %v2156 = vtanh.pop %v2066
      %v2157 = vtanh.pop %v2069
      %v2158 = vtanh.pop %v2074
      %v2159 = vtanh.pop %v2077
      %v2160 = vtanh.pop %v2082
      %v2161 = vtanh.pop %v2085
      %v2162 = vtanh.pop %v2090
      %v2163 = vtanh.pop %v2093
      %v2164 = vtanh.pop %v2098
      %v2165 = vtanh.pop %v2101
      %v2166 = vtanh.pop %v2106
      %v2167 = vtanh.pop %v2109
      %v2168 = vtanh.pop %v2114
      %v2169 = vtanh.pop %v2117
      %v2170 = vtanh.pop %v2122
      %v2171 = vtanh.pop %v2125
      %v2172 = vtanh.pop %v2130
      %v2173 = vtanh.pop %v2133
      %v2174 = vtanh.pop %v2138
      %v2175 = vtanh.pop %v2141
      %v2176 = vpack.c.bf16 %v2145, %v2144
      %v2177 = vpack.c.bf16 %v2147, %v2146
      %v2178 = vpack.c.bf16 %v2149, %v2148
      %v2179 = vpack.c.bf16 %v2151, %v2150
      %v2180 = vpack.c.bf16 %v2153, %v2152
      %v2181 = vpack.c.bf16 %v2155, %v2154
      %v2182 = vpack.c.bf16 %v2157, %v2156
      %v2183 = vpack.c.bf16 %v2159, %v2158
      %v2184 = vpack.c.bf16 %v2161, %v2160
      %v2185 = vpack.c.bf16 %v2163, %v2162
      %v2186 = vpack.c.bf16 %v2165, %v2164
      %v2187 = vpack.c.bf16 %v2167, %v2166
      %v2188 = vpack.c.bf16 %v2169, %v2168
      %v2189 = vpack.c.bf16 %v2171, %v2170
      %v2190 = vpack.c.bf16 %v2173, %v2172
      %v2191 = vpack.c.bf16 %v2175, %v2174
      %v2192 = vld [vmem:[%s4] sm:$0xf]
      %v2193 = vld [vmem:[%s4 + $0x4] sm:$0xf]
      %v2194 = vld [vmem:[%s4 + $0x8] sm:$0xf]
      %v2195 = vld [vmem:[%s4 + $0xc] sm:$0xf]
      %v2200 = vunpack.c.l.b16 %v2192
      %v2201 = vunpack.c.l.b16 %v2193
      %v2202 = vunpack.c.l.b16 %v2194
      %v2203 = vunpack.c.l.b16 %v2195
      %v2204 = vpack.c.b16 %v2201, %v2200
      %v2205 = vpack.c.b16 %v2203, %v2202
      %vm2208 = vcmask 261120
      %v2210 = vsel %vm2208, %v2176, 0
      %v2213 = vsel %vm2208, %v2177, 0
      %v2216 = vsel %vm2208, %v2178, 0
      %v2219 = vsel %vm2208, %v2179, 0
      %v2222 = vsel %vm2208, %v2180, 0
      %v2225 = vsel %vm2208, %v2181, 0
      %v2228 = vsel %vm2208, %v2182, 0
      %v2231 = vsel %vm2208, %v2183, 0
      %v2234 = vsel %vm2208, %v2184, 0
      %v2237 = vsel %vm2208, %v2185, 0
      %v2240 = vsel %vm2208, %v2186, 0
      %v2243 = vsel %vm2208, %v2187, 0
      %v2246 = vsel %vm2208, %v2188, 0
      %v2249 = vsel %vm2208, %v2189, 0
      %v2252 = vsel %vm2208, %v2190, 0
      %v2255 = vsel %vm2208, %v2191, 0
      %2257 = vmatprep.subr.bf16.mxu0 0
      %2258 = vmatpush1.bf16.msra.mxu0 %v2204
      %2259 = vmatprep.subr.bf16.mxu0 0
      %2260 = vmatpush1.bf16.msra.mxu0 %v2205
      %2261 = vmatprep.subr.bf16.mxu0 0
      %2262 = vmatpush1.bf16.msra.mxu0 0
      %2263 = vmatprep.subr.bf16.mxu0 0
      %2264 = vmatpush1.bf16.msra.mxu0 0
      %2265 = vmatprep.subr.bf16.mxu0 0
      %2266 = vmatpush1.bf16.msra.mxu0 0
      %2267 = vmatprep.subr.bf16.mxu0 0
      %2268 = vmatpush1.bf16.msra.mxu0 0
      %2269 = vmatprep.subr.bf16.mxu0 0
      %2270 = vmatpush1.bf16.msra.mxu0 0
      %2271 = vmatprep.subr.bf16.mxu0 0
      %2272 = vmatpush1.bf16.msra.mxu0 0
      %2273 = vmatprep.subr.bf16.mxu0 0
      %2274 = vmatpush1.bf16.msra.mxu0 0
      %2275 = vmatprep.subr.bf16.mxu0 0
      %2276 = vmatpush1.bf16.msra.mxu0 0
      %2277 = vmatprep.subr.bf16.mxu0 0
      %2278 = vmatpush1.bf16.msra.mxu0 0
      %2279 = vmatprep.subr.bf16.mxu0 0
      %2280 = vmatpush1.bf16.msra.mxu0 0
      %2281 = vmatprep.subr.bf16.mxu0 0
      %2282 = vmatpush1.bf16.msra.mxu0 0
      %2283 = vmatprep.subr.bf16.mxu0 0
      %2284 = vmatpush1.bf16.msra.mxu0 0
      %2285 = vmatprep.subr.bf16.mxu0 0
      %2286 = vmatpush1.bf16.msra.mxu0 0
      %2287 = vmatprep.subr.bf16.mxu0 0
      %2288 = vmatpush1.bf16.msra.mxu0 0
      %2289 = vmatprep.mubr.bf16.mxu0 0
      %2290 = vmatmul.mubr.bf16.gmra.mrb[0].mxu0 %v2210
      %v2291 = vpop.f32.mrb[0].mxu0
      %v2292 = vadd.f32 0.0, %v2291
      %v2293 = vpop.f32.mrb[0].mxu0
      %v2294 = vpop.f32.mrb[0].mxu0
      %v2295 = vadd.f32 0.0, %v2294
      %v2296 = vpop.f32.mrb[0].mxu0
      %2297 = vmatprep.mubr.bf16.mxu0 0
      %2298 = vmatmul.mubr.bf16.gmra.mrb[0].mxu0 %v2213
      %v2299 = vpop.f32.mrb[0].mxu0
      %v2300 = vadd.f32 0.0, %v2299
      %v2301 = vpop.f32.mrb[0].mxu0
      %v2302 = vpop.f32.mrb[0].mxu0
      %v2303 = vadd.f32 0.0, %v2302
      %v2304 = vpop.f32.mrb[0].mxu0
      %2305 = vmatprep.mubr.bf16.mxu0 0
      %2306 = vmatmul.mubr.bf16.gmra.mrb[0].mxu0 %v2216
      %v2307 = vpop.f32.mrb[0].mxu0
      %v2308 = vadd.f32 0.0, %v2307
      %v2309 = vpop.f32.mrb[0].mxu0
      %v2310 = vpop.f32.mrb[0].mxu0
      %v2311 = vadd.f32 0.0, %v2310
      %v2312 = vpop.f32.mrb[0].mxu0
      %2313 = vmatprep.mubr.bf16.mxu0 0
      %2314 = vmatmul.mubr.bf16.gmra.mrb[0].mxu0 %v2219
      %v2315 = vpop.f32.mrb[0].mxu0
      %v2316 = vadd.f32 0.0, %v2315
      %v2317 = vpop.f32.mrb[0].mxu0
      %v2318 = vpop.f32.mrb[0].mxu0
      %v2319 = vadd.f32 0.0, %v2318
      %v2320 = vpop.f32.mrb[0].mxu0
      %2321 = vmatprep.mubr.bf16.mxu0 0
      %2322 = vmatmul.mubr.bf16.gmra.mrb[0].mxu0 %v2222
      %v2323 = vpop.f32.mrb[0].mxu0
      %v2324 = vadd.f32 0.0, %v2323
      %v2325 = vpop.f32.mrb[0].mxu0
      %v2326 = vpop.f32.mrb[0].mxu0
      %v2327 = vadd.f32 0.0, %v2326
      %v2328 = vpop.f32.mrb[0].mxu0
      %2329 = vmatprep.mubr.bf16.mxu0 0
      %2330 = vmatmul.mubr.bf16.gmra.mrb[0].mxu0 %v2225
      %v2331 = vpop.f32.mrb[0].mxu0
      %v2332 = vadd.f32 0.0, %v2331
      %v2333 = vpop.f32.mrb[0].mxu0
      %v2334 = vpop.f32.mrb[0].mxu0
      %v2335 = vadd.f32 0.0, %v2334
      %v2336 = vpop.f32.mrb[0].mxu0
      %2337 = vmatprep.mubr.bf16.mxu0 0
      %2338 = vmatmul.mubr.bf16.gmra.mrb[0].mxu0 %v2228
      %v2339 = vpop.f32.mrb[0].mxu0
      %v2340 = vadd.f32 0.0, %v2339
      %v2341 = vpop.f32.mrb[0].mxu0
      %v2342 = vpop.f32.mrb[0].mxu0
      %v2343 = vadd.f32 0.0, %v2342
      %v2344 = vpop.f32.mrb[0].mxu0
      %2345 = vmatprep.mubr.bf16.mxu0 0
      %2346 = vmatmul.mubr.bf16.gmra.mrb[0].mxu0 %v2231
      %v2347 = vpop.f32.mrb[0].mxu0
      %v2348 = vadd.f32 0.0, %v2347
      %v2349 = vpop.f32.mrb[0].mxu0
      %v2350 = vpop.f32.mrb[0].mxu0
      %v2351 = vadd.f32 0.0, %v2350
      %v2352 = vpop.f32.mrb[0].mxu0
      %2353 = vmatprep.mubr.bf16.mxu0 0
      %2354 = vmatmul.mubr.bf16.gmra.mrb[0].mxu0 %v2234
      %v2355 = vpop.f32.mrb[0].mxu0
      %v2356 = vadd.f32 0.0, %v2355
      %v2357 = vpop.f32.mrb[0].mxu0
      %v2358 = vpop.f32.mrb[0].mxu0
      %v2359 = vadd.f32 0.0, %v2358
      %v2360 = vpop.f32.mrb[0].mxu0
      %2361 = vmatprep.mubr.bf16.mxu0 0
      %2362 = vmatmul.mubr.bf16.gmra.mrb[0].mxu0 %v2237
      %v2363 = vpop.f32.mrb[0].mxu0
      %v2364 = vadd.f32 0.0, %v2363
      %v2365 = vpop.f32.mrb[0].mxu0
      %v2366 = vpop.f32.mrb[0].mxu0
      %v2367 = vadd.f32 0.0, %v2366
      %v2368 = vpop.f32.mrb[0].mxu0
      %2369 = vmatprep.mubr.bf16.mxu0 0
      %2370 = vmatmul.mubr.bf16.gmra.mrb[0].mxu0 %v2240
      %v2371 = vpop.f32.mrb[0].mxu0
      %v2372 = vadd.f32 0.0, %v2371
      %v2373 = vpop.f32.mrb[0].mxu0
      %v2374 = vpop.f32.mrb[0].mxu0
      %v2375 = vadd.f32 0.0, %v2374
      %v2376 = vpop.f32.mrb[0].mxu0
      %2377 = vmatprep.mubr.bf16.mxu0 0
      %2378 = vmatmul.mubr.bf16.gmra.mrb[0].mxu0 %v2243
      %v2379 = vpop.f32.mrb[0].mxu0
      %v2380 = vadd.f32 0.0, %v2379
      %v2381 = vpop.f32.mrb[0].mxu0
      %v2382 = vpop.f32.mrb[0].mxu0
      %v2383 = vadd.f32 0.0, %v2382
      %v2384 = vpop.f32.mrb[0].mxu0
      %2385 = vmatprep.mubr.bf16.mxu0 0
      %2386 = vmatmul.mubr.bf16.gmra.mrb[0].mxu0 %v2246
      %v2387 = vpop.f32.mrb[0].mxu0
      %v2388 = vadd.f32 0.0, %v2387
      %v2389 = vpop.f32.mrb[0].mxu0
      %v2390 = vpop.f32.mrb[0].mxu0
      %v2391 = vadd.f32 0.0, %v2390
      %v2392 = vpop.f32.mrb[0].mxu0
      %2393 = vmatprep.mubr.bf16.mxu0 0
      %2394 = vmatmul.mubr.bf16.gmra.mrb[0].mxu0 %v2249
      %v2395 = vpop.f32.mrb[0].mxu0
      %v2396 = vadd.f32 0.0, %v2395
      %v2397 = vpop.f32.mrb[0].mxu0
      %v2398 = vpop.f32.mrb[0].mxu0
      %v2399 = vadd.f32 0.0, %v2398
      %v2400 = vpop.f32.mrb[0].mxu0
      %2401 = vmatprep.mubr.bf16.mxu0 0
      %2402 = vmatmul.mubr.bf16.gmra.mrb[0].mxu0 %v2252
      %v2403 = vpop.f32.mrb[0].mxu0
      %v2404 = vadd.f32 0.0, %v2403
      %v2405 = vpop.f32.mrb[0].mxu0
      %v2406 = vpop.f32.mrb[0].mxu0
      %v2407 = vadd.f32 0.0, %v2406
      %v2408 = vpop.f32.mrb[0].mxu0
      %2409 = vmatprep.mubr.bf16.mxu0 0
      %2410 = vmatmul.mubr.bf16.gmra.mrb[0].mxu0 %v2255
      %v2411 = vpop.f32.mrb[0].mxu0
      %v2412 = vadd.f32 0.0, %v2411
      %v2413 = vpop.f32.mrb[0].mxu0
      %v2414 = vpop.f32.mrb[0].mxu0
      %v2415 = vadd.f32 0.0, %v2414
      %v2416 = vpop.f32.mrb[0].mxu0
      %2417 = vdwg.mxu0
      %v2418 = vpack.c.bf16 %v2292, %v2292
      %v2419 = vpack.c.bf16 %v2295, %v2295
      %v2420 = vpack.c.bf16 %v2300, %v2300
      %v2421 = vpack.c.bf16 %v2303, %v2303
      %v2422 = vpack.c.bf16 %v2308, %v2308
      %v2423 = vpack.c.bf16 %v2311, %v2311
      %v2424 = vpack.c.bf16 %v2316, %v2316
      %v2425 = vpack.c.bf16 %v2319, %v2319
      %v2426 = vpack.c.bf16 %v2324, %v2324
      %v2427 = vpack.c.bf16 %v2327, %v2327
      %v2428 = vpack.c.bf16 %v2332, %v2332
      %v2429 = vpack.c.bf16 %v2335, %v2335
      %v2430 = vpack.c.bf16 %v2340, %v2340
      %v2431 = vpack.c.bf16 %v2343, %v2343
      %v2432 = vpack.c.bf16 %v2348, %v2348
      %v2433 = vpack.c.bf16 %v2351, %v2351
      %v2434 = vpack.c.bf16 %v2356, %v2356
      %v2435 = vpack.c.bf16 %v2359, %v2359
      %v2436 = vpack.c.bf16 %v2364, %v2364
      %v2437 = vpack.c.bf16 %v2367, %v2367
      %v2438 = vpack.c.bf16 %v2372, %v2372
      %v2439 = vpack.c.bf16 %v2375, %v2375
      %v2440 = vpack.c.bf16 %v2380, %v2380
      %v2441 = vpack.c.bf16 %v2383, %v2383
      %v2442 = vpack.c.bf16 %v2388, %v2388
      %v2443 = vpack.c.bf16 %v2391, %v2391
      %v2444 = vpack.c.bf16 %v2396, %v2396
      %v2445 = vpack.c.bf16 %v2399, %v2399
      %v2446 = vpack.c.bf16 %v2404, %v2404
      %v2447 = vpack.c.bf16 %v2407, %v2407
      %v2448 = vpack.c.bf16 %v2412, %v2412
      %v2449 = vpack.c.bf16 %v2415, %v2415
      %v2450 = vld [vmem:[%s5] sm:$0x1]
      %v2452 = vlaneseq
      %v2453 = vshrl.u32 %v2452, 7
      %v2454 = vsub.s32 0, %v2453
      %v2455 = vrot.slane %v2450, %v2454
      %v2458 = vsel %vm433, %v2418, 0
      %2460 = vmatprep.subr.bf16.mxu0 0
      %2461 = vmatpush1.bf16.msra.mxu0 %v2458
      %2462 = vmatprep.subr.bf16.mxu0 0
      %2463 = vmatpush1.bf16.msra.mxu0 0
      %2464 = vmatprep.subr.bf16.mxu0 0
      %2465 = vmatpush1.bf16.msra.mxu0 0
      %2466 = vmatprep.subr.bf16.mxu0 0
      %2467 = vmatpush1.bf16.msra.mxu0 0
      %2468 = vmatprep.subr.bf16.mxu0 0
      %2469 = vmatpush1.bf16.msra.mxu0 0
      %2470 = vmatprep.subr.bf16.mxu0 0
      %2471 = vmatpush1.bf16.msra.mxu0 0
      %2472 = vmatprep.subr.bf16.mxu0 0
      %2473 = vmatpush1.bf16.msra.mxu0 0
      %2474 = vmatprep.subr.bf16.mxu0 0
      %2475 = vmatpush1.bf16.msra.mxu0 0
      %2476 = vmatprep.subr.bf16.mxu0 0
      %2477 = vmatpush1.bf16.msra.mxu0 0
      %2478 = vmatprep.subr.bf16.mxu0 0
      %2479 = vmatpush1.bf16.msra.mxu0 0
      %2480 = vmatprep.subr.bf16.mxu0 0
      %2481 = vmatpush1.bf16.msra.mxu0 0
      %2482 = vmatprep.subr.bf16.mxu0 0
      %2483 = vmatpush1.bf16.msra.mxu0 0
      %2484 = vmatprep.subr.bf16.mxu0 0
      %2485 = vmatpush1.bf16.msra.mxu0 0
      %2486 = vmatprep.subr.bf16.mxu0 0
      %2487 = vmatpush1.bf16.msra.mxu0 0
      %2488 = vmatprep.subr.bf16.mxu0 0
      %2489 = vmatpush1.bf16.msra.mxu0 0
      %2490 = vmatprep.subr.bf16.mxu0 0
      %2491 = vmatpush1.bf16.msra.mxu0 0
      %2492 = vmatprep.mubr.bf16.mxu0 0
      %2493 = vmatmul.mubr.bf16.gmra.mrb[0].mxu0 %v431
      %v2494 = vpop.f32.mrb[0].mxu0
      %v2495 = vadd.f32 %v2455, %v2494
      %v2496 = vpop.f32.mrb[0].mxu0
      %v2497 = vpop.f32.mrb[0].mxu0
      %v2498 = vpop.f32.mrb[0].mxu0
      %2499 = vdwg.mxu0
      %v2501 = vsel %vm433, %v2419, 0
      %2503 = vmatprep.subr.bf16.mxu0 0
      %2504 = vmatpush1.bf16.msra.mxu0 %v2501
      %2505 = vmatprep.subr.bf16.mxu0 0
      %2506 = vmatpush1.bf16.msra.mxu0 0
      %2507 = vmatprep.subr.bf16.mxu0 0
      %2508 = vmatpush1.bf16.msra.mxu0 0
      %2509 = vmatprep.subr.bf16.mxu0 0
      %2510 = vmatpush1.bf16.msra.mxu0 0
      %2511 = vmatprep.subr.bf16.mxu0 0
      %2512 = vmatpush1.bf16.msra.mxu0 0
      %2513 = vmatprep.subr.bf16.mxu0 0
      %2514 = vmatpush1.bf16.msra.mxu0 0
      %2515 = vmatprep.subr.bf16.mxu0 0
      %2516 = vmatpush1.bf16.msra.mxu0 0
      %2517 = vmatprep.subr.bf16.mxu0 0
      %2518 = vmatpush1.bf16.msra.mxu0 0
      %2519 = vmatprep.subr.bf16.mxu0 0
      %2520 = vmatpush1.bf16.msra.mxu0 0
      %2521 = vmatprep.subr.bf16.mxu0 0
      %2522 = vmatpush1.bf16.msra.mxu0 0
      %2523 = vmatprep.subr.bf16.mxu0 0
      %2524 = vmatpush1.bf16.msra.mxu0 0
      %2525 = vmatprep.subr.bf16.mxu0 0
      %2526 = vmatpush1.bf16.msra.mxu0 0
      %2527 = vmatprep.subr.bf16.mxu0 0
      %2528 = vmatpush1.bf16.msra.mxu0 0
      %2529 = vmatprep.subr.bf16.mxu0 0
      %2530 = vmatpush1.bf16.msra.mxu0 0
      %2531 = vmatprep.subr.bf16.mxu0 0
      %2532 = vmatpush1.bf16.msra.mxu0 0
      %2533 = vmatprep.subr.bf16.mxu0 0
      %2534 = vmatpush1.bf16.msra.mxu0 0
      %2535 = vmatprep.mubr.bf16.mxu0 0
      %2536 = vmatmul.mubr.bf16.gmra.mrb[0].mxu0 %v478
      %v2537 = vpop.f32.mrb[0].mxu0
      %v2538 = vadd.f32 %v2455, %v2537
      %v2539 = vpop.f32.mrb[0].mxu0
      %v2540 = vpop.f32.mrb[0].mxu0
      %v2541 = vpop.f32.mrb[0].mxu0
      %2542 = vdwg.mxu0
      %v2544 = vsel %vm433, %v2420, 0
      %2546 = vmatprep.subr.bf16.mxu0 0
      %2547 = vmatpush1.bf16.msra.mxu0 %v2544
      %2548 = vmatprep.subr.bf16.mxu0 0
      %2549 = vmatpush1.bf16.msra.mxu0 0
      %2550 = vmatprep.subr.bf16.mxu0 0
      %2551 = vmatpush1.bf16.msra.mxu0 0
      %2552 = vmatprep.subr.bf16.mxu0 0
      %2553 = vmatpush1.bf16.msra.mxu0 0
      %2554 = vmatprep.subr.bf16.mxu0 0
      %2555 = vmatpush1.bf16.msra.mxu0 0
      %2556 = vmatprep.subr.bf16.mxu0 0
      %2557 = vmatpush1.bf16.msra.mxu0 0
      %2558 = vmatprep.subr.bf16.mxu0 0
      %2559 = vmatpush1.bf16.msra.mxu0 0
      %2560 = vmatprep.subr.bf16.mxu0 0
      %2561 = vmatpush1.bf16.msra.mxu0 0
      %2562 = vmatprep.subr.bf16.mxu0 0
      %2563 = vmatpush1.bf16.msra.mxu0 0
      %2564 = vmatprep.subr.bf16.mxu0 0
      %2565 = vmatpush1.bf16.msra.mxu0 0
      %2566 = vmatprep.subr.bf16.mxu0 0
      %2567 = vmatpush1.bf16.msra.mxu0 0
      %2568 = vmatprep.subr.bf16.mxu0 0
      %2569 = vmatpush1.bf16.msra.mxu0 0
      %2570 = vmatprep.subr.bf16.mxu0 0
      %2571 = vmatpush1.bf16.msra.mxu0 0
      %2572 = vmatprep.subr.bf16.mxu0 0
      %2573 = vmatpush1.bf16.msra.mxu0 0
      %2574 = vmatprep.subr.bf16.mxu0 0
      %2575 = vmatpush1.bf16.msra.mxu0 0
      %2576 = vmatprep.subr.bf16.mxu0 0
      %2577 = vmatpush1.bf16.msra.mxu0 0
      %2578 = vmatprep.mubr.bf16.mxu0 0
      %2579 = vmatmul.mubr.bf16.gmra.mrb[0].mxu0 %v524
      %v2580 = vpop.f32.mrb[0].mxu0
      %v2581 = vadd.f32 %v2455, %v2580
      %v2582 = vpop.f32.mrb[0].mxu0
      %v2583 = vpop.f32.mrb[0].mxu0
      %v2584 = vpop.f32.mrb[0].mxu0
      %2585 = vdwg.mxu0
      %v2587 = vsel %vm433, %v2421, 0
      %2589 = vmatprep.subr.bf16.mxu0 0
      %2590 = vmatpush1.bf16.msra.mxu0 %v2587
      %2591 = vmatprep.subr.bf16.mxu0 0
      %2592 = vmatpush1.bf16.msra.mxu0 0
      %2593 = vmatprep.subr.bf16.mxu0 0
      %2594 = vmatpush1.bf16.msra.mxu0 0
      %2595 = vmatprep.subr.bf16.mxu0 0
      %2596 = vmatpush1.bf16.msra.mxu0 0
      %2597 = vmatprep.subr.bf16.mxu0 0
      %2598 = vmatpush1.bf16.msra.mxu0 0
      %2599 = vmatprep.subr.bf16.mxu0 0
      %2600 = vmatpush1.bf16.msra.mxu0 0
      %2601 = vmatprep.subr.bf16.mxu0 0
      %2602 = vmatpush1.bf16.msra.mxu0 0
      %2603 = vmatprep.subr.bf16.mxu0 0
      %2604 = vmatpush1.bf16.msra.mxu0 0
      %2605 = vmatprep.subr.bf16.mxu0 0
      %2606 = vmatpush1.bf16.msra.mxu0 0
      %2607 = vmatprep.subr.bf16.mxu0 0
      %2608 = vmatpush1.bf16.msra.mxu0 0
      %2609 = vmatprep.subr.bf16.mxu0 0
      %2610 = vmatpush1.bf16.msra.mxu0 0
      %2611 = vmatprep.subr.bf16.mxu0 0
      %2612 = vmatpush1.bf16.msra.mxu0 0
      %2613 = vmatprep.subr.bf16.mxu0 0
      %2614 = vmatpush1.bf16.msra.mxu0 0
      %2615 = vmatprep.subr.bf16.mxu0 0
      %2616 = vmatpush1.bf16.msra.mxu0 0
      %2617 = vmatprep.subr.bf16.mxu0 0
      %2618 = vmatpush1.bf16.msra.mxu0 0
      %2619 = vmatprep.subr.bf16.mxu0 0
      %2620 = vmatpush1.bf16.msra.mxu0 0
      %2621 = vmatprep.mubr.bf16.mxu0 0
      %2622 = vmatmul.mubr.bf16.gmra.mrb[0].mxu0 %v570
      %v2623 = vpop.f32.mrb[0].mxu0
      %v2624 = vadd.f32 %v2455, %v2623
      %v2625 = vpop.f32.mrb[0].mxu0
      %v2626 = vpop.f32.mrb[0].mxu0
      %v2627 = vpop.f32.mrb[0].mxu0
      %2628 = vdwg.mxu0
      %v2630 = vsel %vm433, %v2422, 0
      %2632 = vmatprep.subr.bf16.mxu0 0
      %2633 = vmatpush1.bf16.msra.mxu0 %v2630
      %2634 = vmatprep.subr.bf16.mxu0 0
      %2635 = vmatpush1.bf16.msra.mxu0 0
      %2636 = vmatprep.subr.bf16.mxu0 0
      %2637 = vmatpush1.bf16.msra.mxu0 0
      %2638 = vmatprep.subr.bf16.mxu0 0
      %2639 = vmatpush1.bf16.msra.mxu0 0
      %2640 = vmatprep.subr.bf16.mxu0 0
      %2641 = vmatpush1.bf16.msra.mxu0 0
      %2642 = vmatprep.subr.bf16.mxu0 0
      %2643 = vmatpush1.bf16.msra.mxu0 0
      %2644 = vmatprep.subr.bf16.mxu0 0
      %2645 = vmatpush1.bf16.msra.mxu0 0
      %2646 = vmatprep.subr.bf16.mxu0 0
      %2647 = vmatpush1.bf16.msra.mxu0 0
      %2648 = vmatprep.subr.bf16.mxu0 0
      %2649 = vmatpush1.bf16.msra.mxu0 0
      %2650 = vmatprep.subr.bf16.mxu0 0
      %2651 = vmatpush1.bf16.msra.mxu0 0
      %2652 = vmatprep.subr.bf16.mxu0 0
      %2653 = vmatpush1.bf16.msra.mxu0 0
      %2654 = vmatprep.subr.bf16.mxu0 0
      %2655 = vmatpush1.bf16.msra.mxu0 0
      %2656 = vmatprep.subr.bf16.mxu0 0
      %2657 = vmatpush1.bf16.msra.mxu0 0
      %2658 = vmatprep.subr.bf16.mxu0 0
      %2659 = vmatpush1.bf16.msra.mxu0 0
      %2660 = vmatprep.subr.bf16.mxu0 0
      %2661 = vmatpush1.bf16.msra.mxu0 0
      %2662 = vmatprep.subr.bf16.mxu0 0
      %2663 = vmatpush1.bf16.msra.mxu0 0
      %2664 = vmatprep.mubr.bf16.mxu0 0
      %2665 = vmatmul.mubr.bf16.gmra.mrb[0].mxu0 %v616
      %v2666 = vpop.f32.mrb[0].mxu0
      %v2667 = vadd.f32 %v2455, %v2666
      %v2668 = vpop.f32.mrb[0].mxu0
      %v2669 = vpop.f32.mrb[0].mxu0
      %v2670 = vpop.f32.mrb[0].mxu0
      %2671 = vdwg.mxu0
      %v2673 = vsel %vm433, %v2423, 0
      %2675 = vmatprep.subr.bf16.mxu0 0
      %2676 = vmatpush1.bf16.msra.mxu0 %v2673
      %2677 = vmatprep.subr.bf16.mxu0 0
      %2678 = vmatpush1.bf16.msra.mxu0 0
      %2679 = vmatprep.subr.bf16.mxu0 0
      %2680 = vmatpush1.bf16.msra.mxu0 0
      %2681 = vmatprep.subr.bf16.mxu0 0
      %2682 = vmatpush1.bf16.msra.mxu0 0
      %2683 = vmatprep.subr.bf16.mxu0 0
      %2684 = vmatpush1.bf16.msra.mxu0 0
      %2685 = vmatprep.subr.bf16.mxu0 0
      %2686 = vmatpush1.bf16.msra.mxu0 0
      %2687 = vmatprep.subr.bf16.mxu0 0
      %2688 = vmatpush1.bf16.msra.mxu0 0
      %2689 = vmatprep.subr.bf16.mxu0 0
      %2690 = vmatpush1.bf16.msra.mxu0 0
      %2691 = vmatprep.subr.bf16.mxu0 0
      %2692 = vmatpush1.bf16.msra.mxu0 0
      %2693 = vmatprep.subr.bf16.mxu0 0
      %2694 = vmatpush1.bf16.msra.mxu0 0
      %2695 = vmatprep.subr.bf16.mxu0 0
      %2696 = vmatpush1.bf16.msra.mxu0 0
      %2697 = vmatprep.subr.bf16.mxu0 0
      %2698 = vmatpush1.bf16.msra.mxu0 0
      %2699 = vmatprep.subr.bf16.mxu0 0
      %2700 = vmatpush1.bf16.msra.mxu0 0
      %2701 = vmatprep.subr.bf16.mxu0 0
      %2702 = vmatpush1.bf16.msra.mxu0 0
      %2703 = vmatprep.subr.bf16.mxu0 0
      %2704 = vmatpush1.bf16.msra.mxu0 0
      %2705 = vmatprep.subr.bf16.mxu0 0
      %2706 = vmatpush1.bf16.msra.mxu0 0
      %2707 = vmatprep.mubr.bf16.mxu0 0
      %2708 = vmatmul.mubr.bf16.gmra.mrb[0].mxu0 %v662
      %v2709 = vpop.f32.mrb[0].mxu0
      %v2710 = vadd.f32 %v2455, %v2709
      %v2711 = vpop.f32.mrb[0].mxu0
      %v2712 = vpop.f32.mrb[0].mxu0
      %v2713 = vpop.f32.mrb[0].mxu0
      %2714 = vdwg.mxu0
      %v2716 = vsel %vm433, %v2424, 0
      %2718 = vmatprep.subr.bf16.mxu0 0
      %2719 = vmatpush1.bf16.msra.mxu0 %v2716
      %2720 = vmatprep.subr.bf16.mxu0 0
      %2721 = vmatpush1.bf16.msra.mxu0 0
      %2722 = vmatprep.subr.bf16.mxu0 0
      %2723 = vmatpush1.bf16.msra.mxu0 0
      %2724 = vmatprep.subr.bf16.mxu0 0
      %2725 = vmatpush1.bf16.msra.mxu0 0
      %2726 = vmatprep.subr.bf16.mxu0 0
      %2727 = vmatpush1.bf16.msra.mxu0 0
      %2728 = vmatprep.subr.bf16.mxu0 0
      %2729 = vmatpush1.bf16.msra.mxu0 0
      %2730 = vmatprep.subr.bf16.mxu0 0
      %2731 = vmatpush1.bf16.msra.mxu0 0
      %2732 = vmatprep.subr.bf16.mxu0 0
      %2733 = vmatpush1.bf16.msra.mxu0 0
      %2734 = vmatprep.subr.bf16.mxu0 0
      %2735 = vmatpush1.bf16.msra.mxu0 0
      %2736 = vmatprep.subr.bf16.mxu0 0
      %2737 = vmatpush1.bf16.msra.mxu0 0
      %2738 = vmatprep.subr.bf16.mxu0 0
      %2739 = vmatpush1.bf16.msra.mxu0 0
      %2740 = vmatprep.subr.bf16.mxu0 0
      %2741 = vmatpush1.bf16.msra.mxu0 0
      %2742 = vmatprep.subr.bf16.mxu0 0
      %2743 = vmatpush1.bf16.msra.mxu0 0
      %2744 = vmatprep.subr.bf16.mxu0 0
      %2745 = vmatpush1.bf16.msra.mxu0 0
      %2746 = vmatprep.subr.bf16.mxu0 0
      %2747 = vmatpush1.bf16.msra.mxu0 0
      %2748 = vmatprep.subr.bf16.mxu0 0
      %2749 = vmatpush1.bf16.msra.mxu0 0
      %2750 = vmatprep.mubr.bf16.mxu0 0
      %2751 = vmatmul.mubr.bf16.gmra.mrb[0].mxu0 %v708
      %v2752 = vpop.f32.mrb[0].mxu0
      %v2753 = vadd.f32 %v2455, %v2752
      %v2754 = vpop.f32.mrb[0].mxu0
      %v2755 = vpop.f32.mrb[0].mxu0
      %v2756 = vpop.f32.mrb[0].mxu0
      %2757 = vdwg.mxu0
      %v2759 = vsel %vm433, %v2425, 0
      %2761 = vmatprep.subr.bf16.mxu0 0
      %2762 = vmatpush1.bf16.msra.mxu0 %v2759
      %2763 = vmatprep.subr.bf16.mxu0 0
      %2764 = vmatpush1.bf16.msra.mxu0 0
      %2765 = vmatprep.subr.bf16.mxu0 0
      %2766 = vmatpush1.bf16.msra.mxu0 0
      %2767 = vmatprep.subr.bf16.mxu0 0
      %2768 = vmatpush1.bf16.msra.mxu0 0
      %2769 = vmatprep.subr.bf16.mxu0 0
      %2770 = vmatpush1.bf16.msra.mxu0 0
      %2771 = vmatprep.subr.bf16.mxu0 0
      %2772 = vmatpush1.bf16.msra.mxu0 0
      %2773 = vmatprep.subr.bf16.mxu0 0
      %2774 = vmatpush1.bf16.msra.mxu0 0
      %2775 = vmatprep.subr.bf16.mxu0 0
      %2776 = vmatpush1.bf16.msra.mxu0 0
      %2777 = vmatprep.subr.bf16.mxu0 0
      %2778 = vmatpush1.bf16.msra.mxu0 0
      %2779 = vmatprep.subr.bf16.mxu0 0
      %2780 = vmatpush1.bf16.msra.mxu0 0
      %2781 = vmatprep.subr.bf16.mxu0 0
      %2782 = vmatpush1.bf16.msra.mxu0 0
      %2783 = vmatprep.subr.bf16.mxu0 0
      %2784 = vmatpush1.bf16.msra.mxu0 0
      %2785 = vmatprep.subr.bf16.mxu0 0
      %2786 = vmatpush1.bf16.msra.mxu0 0
      %2787 = vmatprep.subr.bf16.mxu0 0
      %2788 = vmatpush1.bf16.msra.mxu0 0
      %2789 = vmatprep.subr.bf16.mxu0 0
      %2790 = vmatpush1.bf16.msra.mxu0 0
      %2791 = vmatprep.subr.bf16.mxu0 0
      %2792 = vmatpush1.bf16.msra.mxu0 0
      %2793 = vmatprep.mubr.bf16.mxu0 0
      %2794 = vmatmul.mubr.bf16.gmra.mrb[0].mxu0 %v754
      %v2795 = vpop.f32.mrb[0].mxu0
      %v2796 = vadd.f32 %v2455, %v2795
      %v2797 = vpop.f32.mrb[0].mxu0
      %v2798 = vpop.f32.mrb[0].mxu0
      %v2799 = vpop.f32.mrb[0].mxu0
      %2800 = vdwg.mxu0
      %v2802 = vsel %vm433, %v2426, 0
      %2804 = vmatprep.subr.bf16.mxu0 0
      %2805 = vmatpush1.bf16.msra.mxu0 %v2802
      %2806 = vmatprep.subr.bf16.mxu0 0
      %2807 = vmatpush1.bf16.msra.mxu0 0
      %2808 = vmatprep.subr.bf16.mxu0 0
      %2809 = vmatpush1.bf16.msra.mxu0 0
      %2810 = vmatprep.subr.bf16.mxu0 0
      %2811 = vmatpush1.bf16.msra.mxu0 0
      %2812 = vmatprep.subr.bf16.mxu0 0
      %2813 = vmatpush1.bf16.msra.mxu0 0
      %2814 = vmatprep.subr.bf16.mxu0 0
      %2815 = vmatpush1.bf16.msra.mxu0 0
      %2816 = vmatprep.subr.bf16.mxu0 0
      %2817 = vmatpush1.bf16.msra.mxu0 0
      %2818 = vmatprep.subr.bf16.mxu0 0
      %2819 = vmatpush1.bf16.msra.mxu0 0
      %2820 = vmatprep.subr.bf16.mxu0 0
      %2821 = vmatpush1.bf16.msra.mxu0 0
      %2822 = vmatprep.subr.bf16.mxu0 0
      %2823 = vmatpush1.bf16.msra.mxu0 0
      %2824 = vmatprep.subr.bf16.mxu0 0
      %2825 = vmatpush1.bf16.msra.mxu0 0
      %2826 = vmatprep.subr.bf16.mxu0 0
      %2827 = vmatpush1.bf16.msra.mxu0 0
      %2828 = vmatprep.subr.bf16.mxu0 0
      %2829 = vmatpush1.bf16.msra.mxu0 0
      %2830 = vmatprep.subr.bf16.mxu0 0
      %2831 = vmatpush1.bf16.msra.mxu0 0
      %2832 = vmatprep.subr.bf16.mxu0 0
      %2833 = vmatpush1.bf16.msra.mxu0 0
      %2834 = vmatprep.subr.bf16.mxu0 0
      %2835 = vmatpush1.bf16.msra.mxu0 0
      %2836 = vmatprep.mubr.bf16.mxu0 0
      %2837 = vmatmul.mubr.bf16.gmra.mrb[0].mxu0 %v800
      %v2838 = vpop.f32.mrb[0].mxu0
      %v2839 = vadd.f32 %v2455, %v2838
      %v2840 = vpop.f32.mrb[0].mxu0
      %v2841 = vpop.f32.mrb[0].mxu0
      %v2842 = vpop.f32.mrb[0].mxu0
      %2843 = vdwg.mxu0
      %v2845 = vsel %vm433, %v2427, 0
      %2847 = vmatprep.subr.bf16.mxu0 0
      %2848 = vmatpush1.bf16.msra.mxu0 %v2845
      %2849 = vmatprep.subr.bf16.mxu0 0
      %2850 = vmatpush1.bf16.msra.mxu0 0
      %2851 = vmatprep.subr.bf16.mxu0 0
      %2852 = vmatpush1.bf16.msra.mxu0 0
      %2853 = vmatprep.subr.bf16.mxu0 0
      %2854 = vmatpush1.bf16.msra.mxu0 0
      %2855 = vmatprep.subr.bf16.mxu0 0
      %2856 = vmatpush1.bf16.msra.mxu0 0
      %2857 = vmatprep.subr.bf16.mxu0 0
      %2858 = vmatpush1.bf16.msra.mxu0 0
      %2859 = vmatprep.subr.bf16.mxu0 0
      %2860 = vmatpush1.bf16.msra.mxu0 0
      %2861 = vmatprep.subr.bf16.mxu0 0
      %2862 = vmatpush1.bf16.msra.mxu0 0
      %2863 = vmatprep.subr.bf16.mxu0 0
      %2864 = vmatpush1.bf16.msra.mxu0 0
      %2865 = vmatprep.subr.bf16.mxu0 0
      %2866 = vmatpush1.bf16.msra.mxu0 0
      %2867 = vmatprep.subr.bf16.mxu0 0
      %2868 = vmatpush1.bf16.msra.mxu0 0
      %2869 = vmatprep.subr.bf16.mxu0 0
      %2870 = vmatpush1.bf16.msra.mxu0 0
      %2871 = vmatprep.subr.bf16.mxu0 0
      %2872 = vmatpush1.bf16.msra.mxu0 0
      %2873 = vmatprep.subr.bf16.mxu0 0
      %2874 = vmatpush1.bf16.msra.mxu0 0
      %2875 = vmatprep.subr.bf16.mxu0 0
      %2876 = vmatpush1.bf16.msra.mxu0 0
      %2877 = vmatprep.subr.bf16.mxu0 0
      %2878 = vmatpush1.bf16.msra.mxu0 0
      %2879 = vmatprep.mubr.bf16.mxu0 0
      %2880 = vmatmul.mubr.bf16.gmra.mrb[0].mxu0 %v846
      %v2881 = vpop.f32.mrb[0].mxu0
      %v2882 = vadd.f32 %v2455, %v2881
      %v2883 = vpop.f32.mrb[0].mxu0
      %v2884 = vpop.f32.mrb[0].mxu0
      %v2885 = vpop.f32.mrb[0].mxu0
      %2886 = vdwg.mxu0
      %v2888 = vsel %vm433, %v2428, 0
      %2890 = vmatprep.subr.bf16.mxu0 0
      %2891 = vmatpush1.bf16.msra.mxu0 %v2888
      %2892 = vmatprep.subr.bf16.mxu0 0
      %2893 = vmatpush1.bf16.msra.mxu0 0
      %2894 = vmatprep.subr.bf16.mxu0 0
      %2895 = vmatpush1.bf16.msra.mxu0 0
      %2896 = vmatprep.subr.bf16.mxu0 0
      %2897 = vmatpush1.bf16.msra.mxu0 0
      %2898 = vmatprep.subr.bf16.mxu0 0
      %2899 = vmatpush1.bf16.msra.mxu0 0
      %2900 = vmatprep.subr.bf16.mxu0 0
      %2901 = vmatpush1.bf16.msra.mxu0 0
      %2902 = vmatprep.subr.bf16.mxu0 0
      %2903 = vmatpush1.bf16.msra.mxu0 0
      %2904 = vmatprep.subr.bf16.mxu0 0
      %2905 = vmatpush1.bf16.msra.mxu0 0
      %2906 = vmatprep.subr.bf16.mxu0 0
      %2907 = vmatpush1.bf16.msra.mxu0 0
      %2908 = vmatprep.subr.bf16.mxu0 0
      %2909 = vmatpush1.bf16.msra.mxu0 0
      %2910 = vmatprep.subr.bf16.mxu0 0
      %2911 = vmatpush1.bf16.msra.mxu0 0
      %2912 = vmatprep.subr.bf16.mxu0 0
      %2913 = vmatpush1.bf16.msra.mxu0 0
      %2914 = vmatprep.subr.bf16.mxu0 0
      %2915 = vmatpush1.bf16.msra.mxu0 0
      %2916 = vmatprep.subr.bf16.mxu0 0
      %2917 = vmatpush1.bf16.msra.mxu0 0
      %2918 = vmatprep.subr.bf16.mxu0 0
      %2919 = vmatpush1.bf16.msra.mxu0 0
      %2920 = vmatprep.subr.bf16.mxu0 0
      %2921 = vmatpush1.bf16.msra.mxu0 0
      %2922 = vmatprep.mubr.bf16.mxu0 0
      %2923 = vmatmul.mubr.bf16.gmra.mrb[0].mxu0 %v892
      %v2924 = vpop.f32.mrb[0].mxu0
      %v2925 = vadd.f32 %v2455, %v2924
      %v2926 = vpop.f32.mrb[0].mxu0
      %v2927 = vpop.f32.mrb[0].mxu0
      %v2928 = vpop.f32.mrb[0].mxu0
      %2929 = vdwg.mxu0
      %v2931 = vsel %vm433, %v2429, 0
      %2933 = vmatprep.subr.bf16.mxu0 0
      %2934 = vmatpush1.bf16.msra.mxu0 %v2931
      %2935 = vmatprep.subr.bf16.mxu0 0
      %2936 = vmatpush1.bf16.msra.mxu0 0
      %2937 = vmatprep.subr.bf16.mxu0 0
      %2938 = vmatpush1.bf16.msra.mxu0 0
      %2939 = vmatprep.subr.bf16.mxu0 0
      %2940 = vmatpush1.bf16.msra.mxu0 0
      %2941 = vmatprep.subr.bf16.mxu0 0
      %2942 = vmatpush1.bf16.msra.mxu0 0
      %2943 = vmatprep.subr.bf16.mxu0 0
      %2944 = vmatpush1.bf16.msra.mxu0 0
      %2945 = vmatprep.subr.bf16.mxu0 0
      %2946 = vmatpush1.bf16.msra.mxu0 0
      %2947 = vmatprep.subr.bf16.mxu0 0
      %2948 = vmatpush1.bf16.msra.mxu0 0
      %2949 = vmatprep.subr.bf16.mxu0 0
      %2950 = vmatpush1.bf16.msra.mxu0 0
      %2951 = vmatprep.subr.bf16.mxu0 0
      %2952 = vmatpush1.bf16.msra.mxu0 0
      %2953 = vmatprep.subr.bf16.mxu0 0
      %2954 = vmatpush1.bf16.msra.mxu0 0
      %2955 = vmatprep.subr.bf16.mxu0 0
      %2956 = vmatpush1.bf16.msra.mxu0 0
      %2957 = vmatprep.subr.bf16.mxu0 0
      %2958 = vmatpush1.bf16.msra.mxu0 0
      %2959 = vmatprep.subr.bf16.mxu0 0
      %2960 = vmatpush1.bf16.msra.mxu0 0
      %2961 = vmatprep.subr.bf16.mxu0 0
      %2962 = vmatpush1.bf16.msra.mxu0 0
      %2963 = vmatprep.subr.bf16.mxu0 0
      %2964 = vmatpush1.bf16.msra.mxu0 0
      %2965 = vmatprep.mubr.bf16.mxu0 0
      %2966 = vmatmul.mubr.bf16.gmra.mrb[0].mxu0 %v938
      %v2967 = vpop.f32.mrb[0].mxu0
      %v2968 = vadd.f32 %v2455, %v2967
      %v2969 = vpop.f32.mrb[0].mxu0
      %v2970 = vpop.f32.mrb[0].mxu0
      %v2971 = vpop.f32.mrb[0].mxu0
      %2972 = vdwg.mxu0
      %v2974 = vsel %vm433, %v2430, 0
      %2976 = vmatprep.subr.bf16.mxu0 0
      %2977 = vmatpush1.bf16.msra.mxu0 %v2974
      %2978 = vmatprep.subr.bf16.mxu0 0
      %2979 = vmatpush1.bf16.msra.mxu0 0
      %2980 = vmatprep.subr.bf16.mxu0 0
      %2981 = vmatpush1.bf16.msra.mxu0 0
      %2982 = vmatprep.subr.bf16.mxu0 0
      %2983 = vmatpush1.bf16.msra.mxu0 0
      %2984 = vmatprep.subr.bf16.mxu0 0
      %2985 = vmatpush1.bf16.msra.mxu0 0
      %2986 = vmatprep.subr.bf16.mxu0 0
      %2987 = vmatpush1.bf16.msra.mxu0 0
      %2988 = vmatprep.subr.bf16.mxu0 0
      %2989 = vmatpush1.bf16.msra.mxu0 0
      %2990 = vmatprep.subr.bf16.mxu0 0
      %2991 = vmatpush1.bf16.msra.mxu0 0
      %2992 = vmatprep.subr.bf16.mxu0 0
      %2993 = vmatpush1.bf16.msra.mxu0 0
      %2994 = vmatprep.subr.bf16.mxu0 0
      %2995 = vmatpush1.bf16.msra.mxu0 0
      %2996 = vmatprep.subr.bf16.mxu0 0
      %2997 = vmatpush1.bf16.msra.mxu0 0
      %2998 = vmatprep.subr.bf16.mxu0 0
      %2999 = vmatpush1.bf16.msra.mxu0 0
      %3000 = vmatprep.subr.bf16.mxu0 0
      %3001 = vmatpush1.bf16.msra.mxu0 0
      %3002 = vmatprep.subr.bf16.mxu0 0
      %3003 = vmatpush1.bf16.msra.mxu0 0
      %3004 = vmatprep.subr.bf16.mxu0 0
      %3005 = vmatpush1.bf16.msra.mxu0 0
      %3006 = vmatprep.subr.bf16.mxu0 0
      %3007 = vmatpush1.bf16.msra.mxu0 0
      %3008 = vmatprep.mubr.bf16.mxu0 0
      %3009 = vmatmul.mubr.bf16.gmra.mrb[0].mxu0 %v984
      %v3010 = vpop.f32.mrb[0].mxu0
      %v3011 = vadd.f32 %v2455, %v3010
      %v3012 = vpop.f32.mrb[0].mxu0
      %v3013 = vpop.f32.mrb[0].mxu0
      %v3014 = vpop.f32.mrb[0].mxu0
      %3015 = vdwg.mxu0
      %v3017 = vsel %vm433, %v2431, 0
      %3019 = vmatprep.subr.bf16.mxu0 0
      %3020 = vmatpush1.bf16.msra.mxu0 %v3017
      %3021 = vmatprep.subr.bf16.mxu0 0
      %3022 = vmatpush1.bf16.msra.mxu0 0
      %3023 = vmatprep.subr.bf16.mxu0 0
      %3024 = vmatpush1.bf16.msra.mxu0 0
      %3025 = vmatprep.subr.bf16.mxu0 0
      %3026 = vmatpush1.bf16.msra.mxu0 0
      %3027 = vmatprep.subr.bf16.mxu0 0
      %3028 = vmatpush1.bf16.msra.mxu0 0
      %3029 = vmatprep.subr.bf16.mxu0 0
      %3030 = vmatpush1.bf16.msra.mxu0 0
      %3031 = vmatprep.subr.bf16.mxu0 0
      %3032 = vmatpush1.bf16.msra.mxu0 0
      %3033 = vmatprep.subr.bf16.mxu0 0
      %3034 = vmatpush1.bf16.msra.mxu0 0
      %3035 = vmatprep.subr.bf16.mxu0 0
      %3036 = vmatpush1.bf16.msra.mxu0 0
      %3037 = vmatprep.subr.bf16.mxu0 0
      %3038 = vmatpush1.bf16.msra.mxu0 0
      %3039 = vmatprep.subr.bf16.mxu0 0
      %3040 = vmatpush1.bf16.msra.mxu0 0
      %3041 = vmatprep.subr.bf16.mxu0 0
      %3042 = vmatpush1.bf16.msra.mxu0 0
      %3043 = vmatprep.subr.bf16.mxu0 0
      %3044 = vmatpush1.bf16.msra.mxu0 0
      %3045 = vmatprep.subr.bf16.mxu0 0
      %3046 = vmatpush1.bf16.msra.mxu0 0
      %3047 = vmatprep.subr.bf16.mxu0 0
      %3048 = vmatpush1.bf16.msra.mxu0 0
      %3049 = vmatprep.subr.bf16.mxu0 0
      %3050 = vmatpush1.bf16.msra.mxu0 0
      %3051 = vmatprep.mubr.bf16.mxu0 0
      %3052 = vmatmul.mubr.bf16.gmra.mrb[0].mxu0 %v1030
      %v3053 = vpop.f32.mrb[0].mxu0
      %v3054 = vadd.f32 %v2455, %v3053
      %v3055 = vpop.f32.mrb[0].mxu0
      %v3056 = vpop.f32.mrb[0].mxu0
      %v3057 = vpop.f32.mrb[0].mxu0
      %3058 = vdwg.mxu0
      %v3060 = vsel %vm433, %v2432, 0
      %3062 = vmatprep.subr.bf16.mxu0 0
      %3063 = vmatpush1.bf16.msra.mxu0 %v3060
      %3064 = vmatprep.subr.bf16.mxu0 0
      %3065 = vmatpush1.bf16.msra.mxu0 0
      %3066 = vmatprep.subr.bf16.mxu0 0
      %3067 = vmatpush1.bf16.msra.mxu0 0
      %3068 = vmatprep.subr.bf16.mxu0 0
      %3069 = vmatpush1.bf16.msra.mxu0 0
      %3070 = vmatprep.subr.bf16.mxu0 0
      %3071 = vmatpush1.bf16.msra.mxu0 0
      %3072 = vmatprep.subr.bf16.mxu0 0
      %3073 = vmatpush1.bf16.msra.mxu0 0
      %3074 = vmatprep.subr.bf16.mxu0 0
      %3075 = vmatpush1.bf16.msra.mxu0 0
      %3076 = vmatprep.subr.bf16.mxu0 0
      %3077 = vmatpush1.bf16.msra.mxu0 0
      %3078 = vmatprep.subr.bf16.mxu0 0
      %3079 = vmatpush1.bf16.msra.mxu0 0
      %3080 = vmatprep.subr.bf16.mxu0 0
      %3081 = vmatpush1.bf16.msra.mxu0 0
      %3082 = vmatprep.subr.bf16.mxu0 0
      %3083 = vmatpush1.bf16.msra.mxu0 0
      %3084 = vmatprep.subr.bf16.mxu0 0
      %3085 = vmatpush1.bf16.msra.mxu0 0
      %3086 = vmatprep.subr.bf16.mxu0 0
      %3087 = vmatpush1.bf16.msra.mxu0 0
      %3088 = vmatprep.subr.bf16.mxu0 0
      %3089 = vmatpush1.bf16.msra.mxu0 0
      %3090 = vmatprep.subr.bf16.mxu0 0
      %3091 = vmatpush1.bf16.msra.mxu0 0
      %3092 = vmatprep.subr.bf16.mxu0 0
      %3093 = vmatpush1.bf16.msra.mxu0 0
      %3094 = vmatprep.mubr.bf16.mxu0 0
      %3095 = vmatmul.mubr.bf16.gmra.mrb[0].mxu0 %v1076
      %v3096 = vpop.f32.mrb[0].mxu0
      %v3097 = vadd.f32 %v2455, %v3096
      %v3098 = vpop.f32.mrb[0].mxu0
      %v3099 = vpop.f32.mrb[0].mxu0
      %v3100 = vpop.f32.mrb[0].mxu0
      %3101 = vdwg.mxu0
      %v3103 = vsel %vm433, %v2433, 0
      %3105 = vmatprep.subr.bf16.mxu0 0
      %3106 = vmatpush1.bf16.msra.mxu0 %v3103
      %3107 = vmatprep.subr.bf16.mxu0 0
      %3108 = vmatpush1.bf16.msra.mxu0 0
      %3109 = vmatprep.subr.bf16.mxu0 0
      %3110 = vmatpush1.bf16.msra.mxu0 0
      %3111 = vmatprep.subr.bf16.mxu0 0
      %3112 = vmatpush1.bf16.msra.mxu0 0
      %3113 = vmatprep.subr.bf16.mxu0 0
      %3114 = vmatpush1.bf16.msra.mxu0 0
      %3115 = vmatprep.subr.bf16.mxu0 0
      %3116 = vmatpush1.bf16.msra.mxu0 0
      %3117 = vmatprep.subr.bf16.mxu0 0
      %3118 = vmatpush1.bf16.msra.mxu0 0
      %3119 = vmatprep.subr.bf16.mxu0 0
      %3120 = vmatpush1.bf16.msra.mxu0 0
      %3121 = vmatprep.subr.bf16.mxu0 0
      %3122 = vmatpush1.bf16.msra.mxu0 0
      %3123 = vmatprep.subr.bf16.mxu0 0
      %3124 = vmatpush1.bf16.msra.mxu0 0
      %3125 = vmatprep.subr.bf16.mxu0 0
      %3126 = vmatpush1.bf16.msra.mxu0 0
      %3127 = vmatprep.subr.bf16.mxu0 0
      %3128 = vmatpush1.bf16.msra.mxu0 0
      %3129 = vmatprep.subr.bf16.mxu0 0
      %3130 = vmatpush1.bf16.msra.mxu0 0
      %3131 = vmatprep.subr.bf16.mxu0 0
      %3132 = vmatpush1.bf16.msra.mxu0 0
      %3133 = vmatprep.subr.bf16.mxu0 0
      %3134 = vmatpush1.bf16.msra.mxu0 0
      %3135 = vmatprep.subr.bf16.mxu0 0
      %3136 = vmatpush1.bf16.msra.mxu0 0
      %3137 = vmatprep.mubr.bf16.mxu0 0
      %3138 = vmatmul.mubr.bf16.gmra.mrb[0].mxu0 %v1122
      %v3139 = vpop.f32.mrb[0].mxu0
      %v3140 = vadd.f32 %v2455, %v3139
      %v3141 = vpop.f32.mrb[0].mxu0
      %v3142 = vpop.f32.mrb[0].mxu0
      %v3143 = vpop.f32.mrb[0].mxu0
      %3144 = vdwg.mxu0
      %v3146 = vsel %vm433, %v2434, 0
      %3148 = vmatprep.subr.bf16.mxu0 0
      %3149 = vmatpush1.bf16.msra.mxu0 %v3146
      %3150 = vmatprep.subr.bf16.mxu0 0
      %3151 = vmatpush1.bf16.msra.mxu0 0
      %3152 = vmatprep.subr.bf16.mxu0 0
      %3153 = vmatpush1.bf16.msra.mxu0 0
      %3154 = vmatprep.subr.bf16.mxu0 0
      %3155 = vmatpush1.bf16.msra.mxu0 0
      %3156 = vmatprep.subr.bf16.mxu0 0
      %3157 = vmatpush1.bf16.msra.mxu0 0
      %3158 = vmatprep.subr.bf16.mxu0 0
      %3159 = vmatpush1.bf16.msra.mxu0 0
      %3160 = vmatprep.subr.bf16.mxu0 0
      %3161 = vmatpush1.bf16.msra.mxu0 0
      %3162 = vmatprep.subr.bf16.mxu0 0
      %3163 = vmatpush1.bf16.msra.mxu0 0
      %3164 = vmatprep.subr.bf16.mxu0 0
      %3165 = vmatpush1.bf16.msra.mxu0 0
      %3166 = vmatprep.subr.bf16.mxu0 0
      %3167 = vmatpush1.bf16.msra.mxu0 0
      %3168 = vmatprep.subr.bf16.mxu0 0
      %3169 = vmatpush1.bf16.msra.mxu0 0
      %3170 = vmatprep.subr.bf16.mxu0 0
      %3171 = vmatpush1.bf16.msra.mxu0 0
      %3172 = vmatprep.subr.bf16.mxu0 0
      %3173 = vmatpush1.bf16.msra.mxu0 0
      %3174 = vmatprep.subr.bf16.mxu0 0
      %3175 = vmatpush1.bf16.msra.mxu0 0
      %3176 = vmatprep.subr.bf16.mxu0 0
      %3177 = vmatpush1.bf16.msra.mxu0 0
      %3178 = vmatprep.subr.bf16.mxu0 0
      %3179 = vmatpush1.bf16.msra.mxu0 0
      %3180 = vmatprep.mubr.bf16.mxu0 0
      %3181 = vmatmul.mubr.bf16.gmra.mrb[0].mxu0 %v1168
      %v3182 = vpop.f32.mrb[0].mxu0
      %v3183 = vadd.f32 %v2455, %v3182
      %v3184 = vpop.f32.mrb[0].mxu0
      %v3185 = vpop.f32.mrb[0].mxu0
      %v3186 = vpop.f32.mrb[0].mxu0
      %3187 = vdwg.mxu0
      %v3189 = vsel %vm433, %v2435, 0
      %3191 = vmatprep.subr.bf16.mxu0 0
      %3192 = vmatpush1.bf16.msra.mxu0 %v3189
      %3193 = vmatprep.subr.bf16.mxu0 0
      %3194 = vmatpush1.bf16.msra.mxu0 0
      %3195 = vmatprep.subr.bf16.mxu0 0
      %3196 = vmatpush1.bf16.msra.mxu0 0
      %3197 = vmatprep.subr.bf16.mxu0 0
      %3198 = vmatpush1.bf16.msra.mxu0 0
      %3199 = vmatprep.subr.bf16.mxu0 0
      %3200 = vmatpush1.bf16.msra.mxu0 0
      %3201 = vmatprep.subr.bf16.mxu0 0
      %3202 = vmatpush1.bf16.msra.mxu0 0
      %3203 = vmatprep.subr.bf16.mxu0 0
      %3204 = vmatpush1.bf16.msra.mxu0 0
      %3205 = vmatprep.subr.bf16.mxu0 0
      %3206 = vmatpush1.bf16.msra.mxu0 0
      %3207 = vmatprep.subr.bf16.mxu0 0
      %3208 = vmatpush1.bf16.msra.mxu0 0
      %3209 = vmatprep.subr.bf16.mxu0 0
      %3210 = vmatpush1.bf16.msra.mxu0 0
      %3211 = vmatprep.subr.bf16.mxu0 0
      %3212 = vmatpush1.bf16.msra.mxu0 0
      %3213 = vmatprep.subr.bf16.mxu0 0
      %3214 = vmatpush1.bf16.msra.mxu0 0
      %3215 = vmatprep.subr.bf16.mxu0 0
      %3216 = vmatpush1.bf16.msra.mxu0 0
      %3217 = vmatprep.subr.bf16.mxu0 0
      %3218 = vmatpush1.bf16.msra.mxu0 0
      %3219 = vmatprep.subr.bf16.mxu0 0
      %3220 = vmatpush1.bf16.msra.mxu0 0
      %3221 = vmatprep.subr.bf16.mxu0 0
      %3222 = vmatpush1.bf16.msra.mxu0 0
      %3223 = vmatprep.mubr.bf16.mxu0 0
      %3224 = vmatmul.mubr.bf16.gmra.mrb[0].mxu0 %v1214
      %v3225 = vpop.f32.mrb[0].mxu0
      %v3226 = vadd.f32 %v2455, %v3225
      %v3227 = vpop.f32.mrb[0].mxu0
      %v3228 = vpop.f32.mrb[0].mxu0
      %v3229 = vpop.f32.mrb[0].mxu0
      %3230 = vdwg.mxu0
      %v3232 = vsel %vm433, %v2436, 0
      %3234 = vmatprep.subr.bf16.mxu0 0
      %3235 = vmatpush1.bf16.msra.mxu0 %v3232
      %3236 = vmatprep.subr.bf16.mxu0 0
      %3237 = vmatpush1.bf16.msra.mxu0 0
      %3238 = vmatprep.subr.bf16.mxu0 0
      %3239 = vmatpush1.bf16.msra.mxu0 0
      %3240 = vmatprep.subr.bf16.mxu0 0
      %3241 = vmatpush1.bf16.msra.mxu0 0
      %3242 = vmatprep.subr.bf16.mxu0 0
      %3243 = vmatpush1.bf16.msra.mxu0 0
      %3244 = vmatprep.subr.bf16.mxu0 0
      %3245 = vmatpush1.bf16.msra.mxu0 0
      %3246 = vmatprep.subr.bf16.mxu0 0
      %3247 = vmatpush1.bf16.msra.mxu0 0
      %3248 = vmatprep.subr.bf16.mxu0 0
      %3249 = vmatpush1.bf16.msra.mxu0 0
      %3250 = vmatprep.subr.bf16.mxu0 0
      %3251 = vmatpush1.bf16.msra.mxu0 0
      %3252 = vmatprep.subr.bf16.mxu0 0
      %3253 = vmatpush1.bf16.msra.mxu0 0
      %3254 = vmatprep.subr.bf16.mxu0 0
      %3255 = vmatpush1.bf16.msra.mxu0 0
      %3256 = vmatprep.subr.bf16.mxu0 0
      %3257 = vmatpush1.bf16.msra.mxu0 0
      %3258 = vmatprep.subr.bf16.mxu0 0
      %3259 = vmatpush1.bf16.msra.mxu0 0
      %3260 = vmatprep.subr.bf16.mxu0 0
      %3261 = vmatpush1.bf16.msra.mxu0 0
      %3262 = vmatprep.subr.bf16.mxu0 0
      %3263 = vmatpush1.bf16.msra.mxu0 0
      %3264 = vmatprep.subr.bf16.mxu0 0
      %3265 = vmatpush1.bf16.msra.mxu0 0
      %3266 = vmatprep.mubr.bf16.mxu0 0
      %3267 = vmatmul.mubr.bf16.gmra.mrb[0].mxu0 %v1260
      %v3268 = vpop.f32.mrb[0].mxu0
      %v3269 = vadd.f32 %v2455, %v3268
      %v3270 = vpop.f32.mrb[0].mxu0
      %v3271 = vpop.f32.mrb[0].mxu0
      %v3272 = vpop.f32.mrb[0].mxu0
      %3273 = vdwg.mxu0
      %v3275 = vsel %vm433, %v2437, 0
      %3277 = vmatprep.subr.bf16.mxu0 0
      %3278 = vmatpush1.bf16.msra.mxu0 %v3275
      %3279 = vmatprep.subr.bf16.mxu0 0
      %3280 = vmatpush1.bf16.msra.mxu0 0
      %3281 = vmatprep.subr.bf16.mxu0 0
      %3282 = vmatpush1.bf16.msra.mxu0 0
      %3283 = vmatprep.subr.bf16.mxu0 0
      %3284 = vmatpush1.bf16.msra.mxu0 0
      %3285 = vmatprep.subr.bf16.mxu0 0
      %3286 = vmatpush1.bf16.msra.mxu0 0
      %3287 = vmatprep.subr.bf16.mxu0 0
      %3288 = vmatpush1.bf16.msra.mxu0 0
      %3289 = vmatprep.subr.bf16.mxu0 0
      %3290 = vmatpush1.bf16.msra.mxu0 0
      %3291 = vmatprep.subr.bf16.mxu0 0
      %3292 = vmatpush1.bf16.msra.mxu0 0
      %3293 = vmatprep.subr.bf16.mxu0 0
      %3294 = vmatpush1.bf16.msra.mxu0 0
      %3295 = vmatprep.subr.bf16.mxu0 0
      %3296 = vmatpush1.bf16.msra.mxu0 0
      %3297 = vmatprep.subr.bf16.mxu0 0
      %3298 = vmatpush1.bf16.msra.mxu0 0
      %3299 = vmatprep.subr.bf16.mxu0 0
      %3300 = vmatpush1.bf16.msra.mxu0 0
      %3301 = vmatprep.subr.bf16.mxu0 0
      %3302 = vmatpush1.bf16.msra.mxu0 0
      %3303 = vmatprep.subr.bf16.mxu0 0
      %3304 = vmatpush1.bf16.msra.mxu0 0
      %3305 = vmatprep.subr.bf16.mxu0 0
      %3306 = vmatpush1.bf16.msra.mxu0 0
      %3307 = vmatprep.subr.bf16.mxu0 0
      %3308 = vmatpush1.bf16.msra.mxu0 0
      %3309 = vmatprep.mubr.bf16.mxu0 0
      %3310 = vmatmul.mubr.bf16.gmra.mrb[0].mxu0 %v1306
      %v3311 = vpop.f32.mrb[0].mxu0
      %v3312 = vadd.f32 %v2455, %v3311
      %v3313 = vpop.f32.mrb[0].mxu0
      %v3314 = vpop.f32.mrb[0].mxu0
      %v3315 = vpop.f32.mrb[0].mxu0
      %3316 = vdwg.mxu0
      %v3318 = vsel %vm433, %v2438, 0
      %3320 = vmatprep.subr.bf16.mxu0 0
      %3321 = vmatpush1.bf16.msra.mxu0 %v3318
      %3322 = vmatprep.subr.bf16.mxu0 0
      %3323 = vmatpush1.bf16.msra.mxu0 0
      %3324 = vmatprep.subr.bf16.mxu0 0
      %3325 = vmatpush1.bf16.msra.mxu0 0
      %3326 = vmatprep.subr.bf16.mxu0 0
      %3327 = vmatpush1.bf16.msra.mxu0 0
      %3328 = vmatprep.subr.bf16.mxu0 0
      %3329 = vmatpush1.bf16.msra.mxu0 0
      %3330 = vmatprep.subr.bf16.mxu0 0
      %3331 = vmatpush1.bf16.msra.mxu0 0
      %3332 = vmatprep.subr.bf16.mxu0 0
      %3333 = vmatpush1.bf16.msra.mxu0 0
      %3334 = vmatprep.subr.bf16.mxu0 0
      %3335 = vmatpush1.bf16.msra.mxu0 0
      %3336 = vmatprep.subr.bf16.mxu0 0
      %3337 = vmatpush1.bf16.msra.mxu0 0
      %3338 = vmatprep.subr.bf16.mxu0 0
      %3339 = vmatpush1.bf16.msra.mxu0 0
      %3340 = vmatprep.subr.bf16.mxu0 0
      %3341 = vmatpush1.bf16.msra.mxu0 0
      %3342 = vmatprep.subr.bf16.mxu0 0
      %3343 = vmatpush1.bf16.msra.mxu0 0
      %3344 = vmatprep.subr.bf16.mxu0 0
      %3345 = vmatpush1.bf16.msra.mxu0 0
      %3346 = vmatprep.subr.bf16.mxu0 0
      %3347 = vmatpush1.bf16.msra.mxu0 0
      %3348 = vmatprep.subr.bf16.mxu0 0
      %3349 = vmatpush1.bf16.msra.mxu0 0
      %3350 = vmatprep.subr.bf16.mxu0 0
      %3351 = vmatpush1.bf16.msra.mxu0 0
      %3352 = vmatprep.mubr.bf16.mxu0 0
      %3353 = vmatmul.mubr.bf16.gmra.mrb[0].mxu0 %v1352
      %v3354 = vpop.f32.mrb[0].mxu0
      %v3355 = vadd.f32 %v2455, %v3354
      %v3356 = vpop.f32.mrb[0].mxu0
      %v3357 = vpop.f32.mrb[0].mxu0
      %v3358 = vpop.f32.mrb[0].mxu0
      %3359 = vdwg.mxu0
      %v3361 = vsel %vm433, %v2439, 0
      %3363 = vmatprep.subr.bf16.mxu0 0
      %3364 = vmatpush1.bf16.msra.mxu0 %v3361
      %3365 = vmatprep.subr.bf16.mxu0 0
      %3366 = vmatpush1.bf16.msra.mxu0 0
      %3367 = vmatprep.subr.bf16.mxu0 0
      %3368 = vmatpush1.bf16.msra.mxu0 0
      %3369 = vmatprep.subr.bf16.mxu0 0
      %3370 = vmatpush1.bf16.msra.mxu0 0
      %3371 = vmatprep.subr.bf16.mxu0 0
      %3372 = vmatpush1.bf16.msra.mxu0 0
      %3373 = vmatprep.subr.bf16.mxu0 0
      %3374 = vmatpush1.bf16.msra.mxu0 0
      %3375 = vmatprep.subr.bf16.mxu0 0
      %3376 = vmatpush1.bf16.msra.mxu0 0
      %3377 = vmatprep.subr.bf16.mxu0 0
      %3378 = vmatpush1.bf16.msra.mxu0 0
      %3379 = vmatprep.subr.bf16.mxu0 0
      %3380 = vmatpush1.bf16.msra.mxu0 0
      %3381 = vmatprep.subr.bf16.mxu0 0
      %3382 = vmatpush1.bf16.msra.mxu0 0
      %3383 = vmatprep.subr.bf16.mxu0 0
      %3384 = vmatpush1.bf16.msra.mxu0 0
      %3385 = vmatprep.subr.bf16.mxu0 0
      %3386 = vmatpush1.bf16.msra.mxu0 0
      %3387 = vmatprep.subr.bf16.mxu0 0
      %3388 = vmatpush1.bf16.msra.mxu0 0
      %3389 = vmatprep.subr.bf16.mxu0 0
      %3390 = vmatpush1.bf16.msra.mxu0 0
      %3391 = vmatprep.subr.bf16.mxu0 0
      %3392 = vmatpush1.bf16.msra.mxu0 0
      %3393 = vmatprep.subr.bf16.mxu0 0
      %3394 = vmatpush1.bf16.msra.mxu0 0
      %3395 = vmatprep.mubr.bf16.mxu0 0
      %3396 = vmatmul.mubr.bf16.gmra.mrb[0].mxu0 %v1398
      %v3397 = vpop.f32.mrb[0].mxu0
      %v3398 = vadd.f32 %v2455, %v3397
      %v3399 = vpop.f32.mrb[0].mxu0
      %v3400 = vpop.f32.mrb[0].mxu0
      %v3401 = vpop.f32.mrb[0].mxu0
      %3402 = vdwg.mxu0
      %v3404 = vsel %vm433, %v2440, 0
      %3406 = vmatprep.subr.bf16.mxu0 0
      %3407 = vmatpush1.bf16.msra.mxu0 %v3404
      %3408 = vmatprep.subr.bf16.mxu0 0
      %3409 = vmatpush1.bf16.msra.mxu0 0
      %3410 = vmatprep.subr.bf16.mxu0 0
      %3411 = vmatpush1.bf16.msra.mxu0 0
      %3412 = vmatprep.subr.bf16.mxu0 0
      %3413 = vmatpush1.bf16.msra.mxu0 0
      %3414 = vmatprep.subr.bf16.mxu0 0
      %3415 = vmatpush1.bf16.msra.mxu0 0
      %3416 = vmatprep.subr.bf16.mxu0 0
      %3417 = vmatpush1.bf16.msra.mxu0 0
      %3418 = vmatprep.subr.bf16.mxu0 0
      %3419 = vmatpush1.bf16.msra.mxu0 0
      %3420 = vmatprep.subr.bf16.mxu0 0
      %3421 = vmatpush1.bf16.msra.mxu0 0
      %3422 = vmatprep.subr.bf16.mxu0 0
      %3423 = vmatpush1.bf16.msra.mxu0 0
      %3424 = vmatprep.subr.bf16.mxu0 0
      %3425 = vmatpush1.bf16.msra.mxu0 0
      %3426 = vmatprep.subr.bf16.mxu0 0
      %3427 = vmatpush1.bf16.msra.mxu0 0
      %3428 = vmatprep.subr.bf16.mxu0 0
      %3429 = vmatpush1.bf16.msra.mxu0 0
      %3430 = vmatprep.subr.bf16.mxu0 0
      %3431 = vmatpush1.bf16.msra.mxu0 0
      %3432 = vmatprep.subr.bf16.mxu0 0
      %3433 = vmatpush1.bf16.msra.mxu0 0
      %3434 = vmatprep.subr.bf16.mxu0 0
      %3435 = vmatpush1.bf16.msra.mxu0 0
      %3436 = vmatprep.subr.bf16.mxu0 0
      %3437 = vmatpush1.bf16.msra.mxu0 0
      %3438 = vmatprep.mubr.bf16.mxu0 0
      %3439 = vmatmul.mubr.bf16.gmra.mrb[0].mxu0 %v1444
      %v3440 = vpop.f32.mrb[0].mxu0
      %v3441 = vadd.f32 %v2455, %v3440
      %v3442 = vpop.f32.mrb[0].mxu0
      %v3443 = vpop.f32.mrb[0].mxu0
      %v3444 = vpop.f32.mrb[0].mxu0
      %3445 = vdwg.mxu0
      %v3447 = vsel %vm433, %v2441, 0
      %3449 = vmatprep.subr.bf16.mxu0 0
      %3450 = vmatpush1.bf16.msra.mxu0 %v3447
      %3451 = vmatprep.subr.bf16.mxu0 0
      %3452 = vmatpush1.bf16.msra.mxu0 0
      %3453 = vmatprep.subr.bf16.mxu0 0
      %3454 = vmatpush1.bf16.msra.mxu0 0
      %3455 = vmatprep.subr.bf16.mxu0 0
      %3456 = vmatpush1.bf16.msra.mxu0 0
      %3457 = vmatprep.subr.bf16.mxu0 0
      %3458 = vmatpush1.bf16.msra.mxu0 0
      %3459 = vmatprep.subr.bf16.mxu0 0
      %3460 = vmatpush1.bf16.msra.mxu0 0
      %3461 = vmatprep.subr.bf16.mxu0 0
      %3462 = vmatpush1.bf16.msra.mxu0 0
      %3463 = vmatprep.subr.bf16.mxu0 0
      %3464 = vmatpush1.bf16.msra.mxu0 0
      %3465 = vmatprep.subr.bf16.mxu0 0
      %3466 = vmatpush1.bf16.msra.mxu0 0
      %3467 = vmatprep.subr.bf16.mxu0 0
      %3468 = vmatpush1.bf16.msra.mxu0 0
      %3469 = vmatprep.subr.bf16.mxu0 0
      %3470 = vmatpush1.bf16.msra.mxu0 0
      %3471 = vmatprep.subr.bf16.mxu0 0
      %3472 = vmatpush1.bf16.msra.mxu0 0
      %3473 = vmatprep.subr.bf16.mxu0 0
      %3474 = vmatpush1.bf16.msra.mxu0 0
      %3475 = vmatprep.subr.bf16.mxu0 0
      %3476 = vmatpush1.bf16.msra.mxu0 0
      %3477 = vmatprep.subr.bf16.mxu0 0
      %3478 = vmatpush1.bf16.msra.mxu0 0
      %3479 = vmatprep.subr.bf16.mxu0 0
      %3480 = vmatpush1.bf16.msra.mxu0 0
      %3481 = vmatprep.mubr.bf16.mxu0 0
      %3482 = vmatmul.mubr.bf16.gmra.mrb[0].mxu0 %v1490
      %v3483 = vpop.f32.mrb[0].mxu0
      %v3484 = vadd.f32 %v2455, %v3483
      %v3485 = vpop.f32.mrb[0].mxu0
      %v3486 = vpop.f32.mrb[0].mxu0
      %v3487 = vpop.f32.mrb[0].mxu0
      %3488 = vdwg.mxu0
      %v3490 = vsel %vm433, %v2442, 0
      %3492 = vmatprep.subr.bf16.mxu0 0
      %3493 = vmatpush1.bf16.msra.mxu0 %v3490
      %3494 = vmatprep.subr.bf16.mxu0 0
      %3495 = vmatpush1.bf16.msra.mxu0 0
      %3496 = vmatprep.subr.bf16.mxu0 0
      %3497 = vmatpush1.bf16.msra.mxu0 0
      %3498 = vmatprep.subr.bf16.mxu0 0
      %3499 = vmatpush1.bf16.msra.mxu0 0
      %3500 = vmatprep.subr.bf16.mxu0 0
      %3501 = vmatpush1.bf16.msra.mxu0 0
      %3502 = vmatprep.subr.bf16.mxu0 0
      %3503 = vmatpush1.bf16.msra.mxu0 0
      %3504 = vmatprep.subr.bf16.mxu0 0
      %3505 = vmatpush1.bf16.msra.mxu0 0
      %3506 = vmatprep.subr.bf16.mxu0 0
      %3507 = vmatpush1.bf16.msra.mxu0 0
      %3508 = vmatprep.subr.bf16.mxu0 0
      %3509 = vmatpush1.bf16.msra.mxu0 0
      %3510 = vmatprep.subr.bf16.mxu0 0
      %3511 = vmatpush1.bf16.msra.mxu0 0
      %3512 = vmatprep.subr.bf16.mxu0 0
      %3513 = vmatpush1.bf16.msra.mxu0 0
      %3514 = vmatprep.subr.bf16.mxu0 0
      %3515 = vmatpush1.bf16.msra.mxu0 0
      %3516 = vmatprep.subr.bf16.mxu0 0
      %3517 = vmatpush1.bf16.msra.mxu0 0
      %3518 = vmatprep.subr.bf16.mxu0 0
      %3519 = vmatpush1.bf16.msra.mxu0 0
      %3520 = vmatprep.subr.bf16.mxu0 0
      %3521 = vmatpush1.bf16.msra.mxu0 0
      %3522 = vmatprep.subr.bf16.mxu0 0
      %3523 = vmatpush1.bf16.msra.mxu0 0
      %3524 = vmatprep.mubr.bf16.mxu0 0
      %3525 = vmatmul.mubr.bf16.gmra.mrb[0].mxu0 %v1536
      %v3526 = vpop.f32.mrb[0].mxu0
      %v3527 = vadd.f32 %v2455, %v3526
      %v3528 = vpop.f32.mrb[0].mxu0
      %v3529 = vpop.f32.mrb[0].mxu0
      %v3530 = vpop.f32.mrb[0].mxu0
      %3531 = vdwg.mxu0
      %v3533 = vsel %vm433, %v2443, 0
      %3535 = vmatprep.subr.bf16.mxu0 0
      %3536 = vmatpush1.bf16.msra.mxu0 %v3533
      %3537 = vmatprep.subr.bf16.mxu0 0
      %3538 = vmatpush1.bf16.msra.mxu0 0
      %3539 = vmatprep.subr.bf16.mxu0 0
      %3540 = vmatpush1.bf16.msra.mxu0 0
      %3541 = vmatprep.subr.bf16.mxu0 0
      %3542 = vmatpush1.bf16.msra.mxu0 0
      %3543 = vmatprep.subr.bf16.mxu0 0
      %3544 = vmatpush1.bf16.msra.mxu0 0
      %3545 = vmatprep.subr.bf16.mxu0 0
      %3546 = vmatpush1.bf16.msra.mxu0 0
      %3547 = vmatprep.subr.bf16.mxu0 0
      %3548 = vmatpush1.bf16.msra.mxu0 0
      %3549 = vmatprep.subr.bf16.mxu0 0
      %3550 = vmatpush1.bf16.msra.mxu0 0
      %3551 = vmatprep.subr.bf16.mxu0 0
      %3552 = vmatpush1.bf16.msra.mxu0 0
      %3553 = vmatprep.subr.bf16.mxu0 0
      %3554 = vmatpush1.bf16.msra.mxu0 0
      %3555 = vmatprep.subr.bf16.mxu0 0
      %3556 = vmatpush1.bf16.msra.mxu0 0
      %3557 = vmatprep.subr.bf16.mxu0 0
      %3558 = vmatpush1.bf16.msra.mxu0 0
      %3559 = vmatprep.subr.bf16.mxu0 0
      %3560 = vmatpush1.bf16.msra.mxu0 0
      %3561 = vmatprep.subr.bf16.mxu0 0
      %3562 = vmatpush1.bf16.msra.mxu0 0
      %3563 = vmatprep.subr.bf16.mxu0 0
      %3564 = vmatpush1.bf16.msra.mxu0 0
      %3565 = vmatprep.subr.bf16.mxu0 0
      %3566 = vmatpush1.bf16.msra.mxu0 0
      %3567 = vmatprep.mubr.bf16.mxu0 0
      %3568 = vmatmul.mubr.bf16.gmra.mrb[0].mxu0 %v1582
      %v3569 = vpop.f32.mrb[0].mxu0
      %v3570 = vadd.f32 %v2455, %v3569
      %v3571 = vpop.f32.mrb[0].mxu0
      %v3572 = vpop.f32.mrb[0].mxu0
      %v3573 = vpop.f32.mrb[0].mxu0
      %3574 = vdwg.mxu0
      %v3576 = vsel %vm433, %v2444, 0
      %3578 = vmatprep.subr.bf16.mxu0 0
      %3579 = vmatpush1.bf16.msra.mxu0 %v3576
      %3580 = vmatprep.subr.bf16.mxu0 0
      %3581 = vmatpush1.bf16.msra.mxu0 0
      %3582 = vmatprep.subr.bf16.mxu0 0
      %3583 = vmatpush1.bf16.msra.mxu0 0
      %3584 = vmatprep.subr.bf16.mxu0 0
      %3585 = vmatpush1.bf16.msra.mxu0 0
      %3586 = vmatprep.subr.bf16.mxu0 0
      %3587 = vmatpush1.bf16.msra.mxu0 0
      %3588 = vmatprep.subr.bf16.mxu0 0
      %3589 = vmatpush1.bf16.msra.mxu0 0
      %3590 = vmatprep.subr.bf16.mxu0 0
      %3591 = vmatpush1.bf16.msra.mxu0 0
      %3592 = vmatprep.subr.bf16.mxu0 0
      %3593 = vmatpush1.bf16.msra.mxu0 0
      %3594 = vmatprep.subr.bf16.mxu0 0
      %3595 = vmatpush1.bf16.msra.mxu0 0
      %3596 = vmatprep.subr.bf16.mxu0 0
      %3597 = vmatpush1.bf16.msra.mxu0 0
      %3598 = vmatprep.subr.bf16.mxu0 0
      %3599 = vmatpush1.bf16.msra.mxu0 0
      %3600 = vmatprep.subr.bf16.mxu0 0
      %3601 = vmatpush1.bf16.msra.mxu0 0
      %3602 = vmatprep.subr.bf16.mxu0 0
      %3603 = vmatpush1.bf16.msra.mxu0 0
      %3604 = vmatprep.subr.bf16.mxu0 0
      %3605 = vmatpush1.bf16.msra.mxu0 0
      %3606 = vmatprep.subr.bf16.mxu0 0
      %3607 = vmatpush1.bf16.msra.mxu0 0
      %3608 = vmatprep.subr.bf16.mxu0 0
      %3609 = vmatpush1.bf16.msra.mxu0 0
      %3610 = vmatprep.mubr.bf16.mxu0 0
      %3611 = vmatmul.mubr.bf16.gmra.mrb[0].mxu0 %v1628
      %v3612 = vpop.f32.mrb[0].mxu0
      %v3613 = vadd.f32 %v2455, %v3612
      %v3614 = vpop.f32.mrb[0].mxu0
      %v3615 = vpop.f32.mrb[0].mxu0
      %v3616 = vpop.f32.mrb[0].mxu0
      %3617 = vdwg.mxu0
      %v3619 = vsel %vm433, %v2445, 0
      %3621 = vmatprep.subr.bf16.mxu0 0
      %3622 = vmatpush1.bf16.msra.mxu0 %v3619
      %3623 = vmatprep.subr.bf16.mxu0 0
      %3624 = vmatpush1.bf16.msra.mxu0 0
      %3625 = vmatprep.subr.bf16.mxu0 0
      %3626 = vmatpush1.bf16.msra.mxu0 0
      %3627 = vmatprep.subr.bf16.mxu0 0
      %3628 = vmatpush1.bf16.msra.mxu0 0
      %3629 = vmatprep.subr.bf16.mxu0 0
      %3630 = vmatpush1.bf16.msra.mxu0 0
      %3631 = vmatprep.subr.bf16.mxu0 0
      %3632 = vmatpush1.bf16.msra.mxu0 0
      %3633 = vmatprep.subr.bf16.mxu0 0
      %3634 = vmatpush1.bf16.msra.mxu0 0
      %3635 = vmatprep.subr.bf16.mxu0 0
      %3636 = vmatpush1.bf16.msra.mxu0 0
      %3637 = vmatprep.subr.bf16.mxu0 0
      %3638 = vmatpush1.bf16.msra.mxu0 0
      %3639 = vmatprep.subr.bf16.mxu0 0
      %3640 = vmatpush1.bf16.msra.mxu0 0
      %3641 = vmatprep.subr.bf16.mxu0 0
      %3642 = vmatpush1.bf16.msra.mxu0 0
      %3643 = vmatprep.subr.bf16.mxu0 0
      %3644 = vmatpush1.bf16.msra.mxu0 0
      %3645 = vmatprep.subr.bf16.mxu0 0
      %3646 = vmatpush1.bf16.msra.mxu0 0
      %3647 = vmatprep.subr.bf16.mxu0 0
      %3648 = vmatpush1.bf16.msra.mxu0 0
      %3649 = vmatprep.subr.bf16.mxu0 0
      %3650 = vmatpush1.bf16.msra.mxu0 0
      %3651 = vmatprep.subr.bf16.mxu0 0
      %3652 = vmatpush1.bf16.msra.mxu0 0
      %3653 = vmatprep.mubr.bf16.mxu0 0
      %3654 = vmatmul.mubr.bf16.gmra.mrb[0].mxu0 %v1674
      %v3655 = vpop.f32.mrb[0].mxu0
      %v3656 = vadd.f32 %v2455, %v3655
      %v3657 = vpop.f32.mrb[0].mxu0
      %v3658 = vpop.f32.mrb[0].mxu0
      %v3659 = vpop.f32.mrb[0].mxu0
      %3660 = vdwg.mxu0
      %v3662 = vsel %vm433, %v2446, 0
      %3664 = vmatprep.subr.bf16.mxu0 0
      %3665 = vmatpush1.bf16.msra.mxu0 %v3662
      %3666 = vmatprep.subr.bf16.mxu0 0
      %3667 = vmatpush1.bf16.msra.mxu0 0
      %3668 = vmatprep.subr.bf16.mxu0 0
      %3669 = vmatpush1.bf16.msra.mxu0 0
      %3670 = vmatprep.subr.bf16.mxu0 0
      %3671 = vmatpush1.bf16.msra.mxu0 0
      %3672 = vmatprep.subr.bf16.mxu0 0
      %3673 = vmatpush1.bf16.msra.mxu0 0
      %3674 = vmatprep.subr.bf16.mxu0 0
      %3675 = vmatpush1.bf16.msra.mxu0 0
      %3676 = vmatprep.subr.bf16.mxu0 0
      %3677 = vmatpush1.bf16.msra.mxu0 0
      %3678 = vmatprep.subr.bf16.mxu0 0
      %3679 = vmatpush1.bf16.msra.mxu0 0
      %3680 = vmatprep.subr.bf16.mxu0 0
      %3681 = vmatpush1.bf16.msra.mxu0 0
      %3682 = vmatprep.subr.bf16.mxu0 0
      %3683 = vmatpush1.bf16.msra.mxu0 0
      %3684 = vmatprep.subr.bf16.mxu0 0
      %3685 = vmatpush1.bf16.msra.mxu0 0
      %3686 = vmatprep.subr.bf16.mxu0 0
      %3687 = vmatpush1.bf16.msra.mxu0 0
      %3688 = vmatprep.subr.bf16.mxu0 0
      %3689 = vmatpush1.bf16.msra.mxu0 0
      %3690 = vmatprep.subr.bf16.mxu0 0
      %3691 = vmatpush1.bf16.msra.mxu0 0
      %3692 = vmatprep.subr.bf16.mxu0 0
      %3693 = vmatpush1.bf16.msra.mxu0 0
      %3694 = vmatprep.subr.bf16.mxu0 0
      %3695 = vmatpush1.bf16.msra.mxu0 0
      %3696 = vmatprep.mubr.bf16.mxu0 0
      %3697 = vmatmul.mubr.bf16.gmra.mrb[0].mxu0 %v1720
      %v3698 = vpop.f32.mrb[0].mxu0
      %v3699 = vadd.f32 %v2455, %v3698
      %v3700 = vpop.f32.mrb[0].mxu0
      %v3701 = vpop.f32.mrb[0].mxu0
      %v3702 = vpop.f32.mrb[0].mxu0
      %3703 = vdwg.mxu0
      %v3705 = vsel %vm433, %v2447, 0
      %3707 = vmatprep.subr.bf16.mxu0 0
      %3708 = vmatpush1.bf16.msra.mxu0 %v3705
      %3709 = vmatprep.subr.bf16.mxu0 0
      %3710 = vmatpush1.bf16.msra.mxu0 0
      %3711 = vmatprep.subr.bf16.mxu0 0
      %3712 = vmatpush1.bf16.msra.mxu0 0
      %3713 = vmatprep.subr.bf16.mxu0 0
      %3714 = vmatpush1.bf16.msra.mxu0 0
      %3715 = vmatprep.subr.bf16.mxu0 0
      %3716 = vmatpush1.bf16.msra.mxu0 0
      %3717 = vmatprep.subr.bf16.mxu0 0
      %3718 = vmatpush1.bf16.msra.mxu0 0
      %3719 = vmatprep.subr.bf16.mxu0 0
      %3720 = vmatpush1.bf16.msra.mxu0 0
      %3721 = vmatprep.subr.bf16.mxu0 0
      %3722 = vmatpush1.bf16.msra.mxu0 0
      %3723 = vmatprep.subr.bf16.mxu0 0
      %3724 = vmatpush1.bf16.msra.mxu0 0
      %3725 = vmatprep.subr.bf16.mxu0 0
      %3726 = vmatpush1.bf16.msra.mxu0 0
      %3727 = vmatprep.subr.bf16.mxu0 0
      %3728 = vmatpush1.bf16.msra.mxu0 0
      %3729 = vmatprep.subr.bf16.mxu0 0
      %3730 = vmatpush1.bf16.msra.mxu0 0
      %3731 = vmatprep.subr.bf16.mxu0 0
      %3732 = vmatpush1.bf16.msra.mxu0 0
      %3733 = vmatprep.subr.bf16.mxu0 0
      %3734 = vmatpush1.bf16.msra.mxu0 0
      %3735 = vmatprep.subr.bf16.mxu0 0
      %3736 = vmatpush1.bf16.msra.mxu0 0
      %3737 = vmatprep.subr.bf16.mxu0 0
      %3738 = vmatpush1.bf16.msra.mxu0 0
      %3739 = vmatprep.mubr.bf16.mxu0 0
      %3740 = vmatmul.mubr.bf16.gmra.mrb[0].mxu0 %v1766
      %v3741 = vpop.f32.mrb[0].mxu0
      %v3742 = vadd.f32 %v2455, %v3741
      %v3743 = vpop.f32.mrb[0].mxu0
      %v3744 = vpop.f32.mrb[0].mxu0
      %v3745 = vpop.f32.mrb[0].mxu0
      %3746 = vdwg.mxu0
      %v3748 = vsel %vm433, %v2448, 0
      %3750 = vmatprep.subr.bf16.mxu0 0
      %3751 = vmatpush1.bf16.msra.mxu0 %v3748
      %3752 = vmatprep.subr.bf16.mxu0 0
      %3753 = vmatpush1.bf16.msra.mxu0 0
      %3754 = vmatprep.subr.bf16.mxu0 0
      %3755 = vmatpush1.bf16.msra.mxu0 0
      %3756 = vmatprep.subr.bf16.mxu0 0
      %3757 = vmatpush1.bf16.msra.mxu0 0
      %3758 = vmatprep.subr.bf16.mxu0 0
      %3759 = vmatpush1.bf16.msra.mxu0 0
      %3760 = vmatprep.subr.bf16.mxu0 0
      %3761 = vmatpush1.bf16.msra.mxu0 0
      %3762 = vmatprep.subr.bf16.mxu0 0
      %3763 = vmatpush1.bf16.msra.mxu0 0
      %3764 = vmatprep.subr.bf16.mxu0 0
      %3765 = vmatpush1.bf16.msra.mxu0 0
      %3766 = vmatprep.subr.bf16.mxu0 0
      %3767 = vmatpush1.bf16.msra.mxu0 0
      %3768 = vmatprep.subr.bf16.mxu0 0
      %3769 = vmatpush1.bf16.msra.mxu0 0
      %3770 = vmatprep.subr.bf16.mxu0 0
      %3771 = vmatpush1.bf16.msra.mxu0 0
      %3772 = vmatprep.subr.bf16.mxu0 0
      %3773 = vmatpush1.bf16.msra.mxu0 0
      %3774 = vmatprep.subr.bf16.mxu0 0
      %3775 = vmatpush1.bf16.msra.mxu0 0
      %3776 = vmatprep.subr.bf16.mxu0 0
      %3777 = vmatpush1.bf16.msra.mxu0 0
      %3778 = vmatprep.subr.bf16.mxu0 0
      %3779 = vmatpush1.bf16.msra.mxu0 0
      %3780 = vmatprep.subr.bf16.mxu0 0
      %3781 = vmatpush1.bf16.msra.mxu0 0
      %3782 = vmatprep.mubr.bf16.mxu0 0
      %3783 = vmatmul.mubr.bf16.gmra.mrb[0].mxu0 %v1812
      %v3784 = vpop.f32.mrb[0].mxu0
      %v3785 = vadd.f32 %v2455, %v3784
      %v3786 = vpop.f32.mrb[0].mxu0
      %v3787 = vpop.f32.mrb[0].mxu0
      %v3788 = vpop.f32.mrb[0].mxu0
      %3789 = vdwg.mxu0
      %v3791 = vsel %vm433, %v2449, 0
      %3793 = vmatprep.subr.bf16.mxu0 0
      %3794 = vmatpush1.bf16.msra.mxu0 %v3791
      %3795 = vmatprep.subr.bf16.mxu0 0
      %3796 = vmatpush1.bf16.msra.mxu0 0
      %3797 = vmatprep.subr.bf16.mxu0 0
      %3798 = vmatpush1.bf16.msra.mxu0 0
      %3799 = vmatprep.subr.bf16.mxu0 0
      %3800 = vmatpush1.bf16.msra.mxu0 0
      %3801 = vmatprep.subr.bf16.mxu0 0
      %3802 = vmatpush1.bf16.msra.mxu0 0
      %3803 = vmatprep.subr.bf16.mxu0 0
      %3804 = vmatpush1.bf16.msra.mxu0 0
      %3805 = vmatprep.subr.bf16.mxu0 0
      %3806 = vmatpush1.bf16.msra.mxu0 0
      %3807 = vmatprep.subr.bf16.mxu0 0
      %3808 = vmatpush1.bf16.msra.mxu0 0
      %3809 = vmatprep.subr.bf16.mxu0 0
      %3810 = vmatpush1.bf16.msra.mxu0 0
      %3811 = vmatprep.subr.bf16.mxu0 0
      %3812 = vmatpush1.bf16.msra.mxu0 0
      %3813 = vmatprep.subr.bf16.mxu0 0
      %3814 = vmatpush1.bf16.msra.mxu0 0
      %3815 = vmatprep.subr.bf16.mxu0 0
      %3816 = vmatpush1.bf16.msra.mxu0 0
      %3817 = vmatprep.subr.bf16.mxu0 0
      %3818 = vmatpush1.bf16.msra.mxu0 0
      %3819 = vmatprep.subr.bf16.mxu0 0
      %3820 = vmatpush1.bf16.msra.mxu0 0
      %3821 = vmatprep.subr.bf16.mxu0 0
      %3822 = vmatpush1.bf16.msra.mxu0 0
      %3823 = vmatprep.subr.bf16.mxu0 0
      %3824 = vmatpush1.bf16.msra.mxu0 0
      %3825 = vmatprep.mubr.bf16.mxu0 0
      %3826 = vmatmul.mubr.bf16.gmra.mrb[0].mxu0 %v1858
      %v3827 = vpop.f32.mrb[0].mxu0
      %v3828 = vadd.f32 %v2455, %v3827
      %v3829 = vpop.f32.mrb[0].mxu0
      %v3830 = vpop.f32.mrb[0].mxu0
      %v3831 = vpop.f32.mrb[0].mxu0
      %3832 = vdwg.mxu0
      %v3833 = vtanh.pop %v2495
      %v3834 = vtanh.pop %v2538
      %v3835 = vtanh.pop %v2581
      %v3836 = vtanh.pop %v2624
      %v3837 = vtanh.pop %v2667
      %v3838 = vtanh.pop %v2710
      %v3839 = vtanh.pop %v2753
      %v3840 = vtanh.pop %v2796
      %v3841 = vtanh.pop %v2839
      %v3842 = vtanh.pop %v2882
      %v3843 = vtanh.pop %v2925
      %v3844 = vtanh.pop %v2968
      %v3845 = vtanh.pop %v3011
      %v3846 = vtanh.pop %v3054
      %v3847 = vtanh.pop %v3097
      %v3848 = vtanh.pop %v3140
      %v3849 = vtanh.pop %v3183
      %v3850 = vtanh.pop %v3226
      %v3851 = vtanh.pop %v3269
      %v3852 = vtanh.pop %v3312
      %v3853 = vtanh.pop %v3355
      %v3854 = vtanh.pop %v3398
      %v3855 = vtanh.pop %v3441
      %v3856 = vtanh.pop %v3484
      %v3857 = vtanh.pop %v3527
      %v3858 = vtanh.pop %v3570
      %v3859 = vtanh.pop %v3613
      %v3860 = vtanh.pop %v3656
      %v3861 = vtanh.pop %v3699
      %v3862 = vtanh.pop %v3742
      %v3863 = vtanh.pop %v3785
      %v3864 = vtanh.pop %v3828
      %v3865 = vpack.c.bf16 %v3833, %v3833
      %v3866 = vpack.c.bf16 %v3834, %v3834
      %v3867 = vpack.c.bf16 %v3835, %v3835
      %v3868 = vpack.c.bf16 %v3836, %v3836
      %v3869 = vpack.c.bf16 %v3837, %v3837
      %v3870 = vpack.c.bf16 %v3838, %v3838
      %v3871 = vpack.c.bf16 %v3839, %v3839
      %v3872 = vpack.c.bf16 %v3840, %v3840
      %v3873 = vpack.c.bf16 %v3841, %v3841
      %v3874 = vpack.c.bf16 %v3842, %v3842
      %v3875 = vpack.c.bf16 %v3843, %v3843
      %v3876 = vpack.c.bf16 %v3844, %v3844
      %v3877 = vpack.c.bf16 %v3845, %v3845
      %v3878 = vpack.c.bf16 %v3846, %v3846
      %v3879 = vpack.c.bf16 %v3847, %v3847
      %v3880 = vpack.c.bf16 %v3848, %v3848
      %v3881 = vpack.c.bf16 %v3849, %v3849
      %v3882 = vpack.c.bf16 %v3850, %v3850
      %v3883 = vpack.c.bf16 %v3851, %v3851
      %v3884 = vpack.c.bf16 %v3852, %v3852
      %v3885 = vpack.c.bf16 %v3853, %v3853
      %v3886 = vpack.c.bf16 %v3854, %v3854
      %v3887 = vpack.c.bf16 %v3855, %v3855
      %v3888 = vpack.c.bf16 %v3856, %v3856
      %v3889 = vpack.c.bf16 %v3857, %v3857
      %v3890 = vpack.c.bf16 %v3858, %v3858
      %v3891 = vpack.c.bf16 %v3859, %v3859
      %v3892 = vpack.c.bf16 %v3860, %v3860
      %v3893 = vpack.c.bf16 %v3861, %v3861
      %v3894 = vpack.c.bf16 %v3862, %v3862
      %v3895 = vpack.c.bf16 %v3863, %v3863
      %v3896 = vpack.c.bf16 %v3864, %v3864
      %v3898 = vsel %vm433, %v3865, 0
      %3900 = vmatprep.subr.bf16.mxu0 0
      %3901 = vmatpush1.bf16.msra.mxu0 %v3898
      %3902 = vmatprep.subr.bf16.mxu0 0
      %3903 = vmatpush1.bf16.msra.mxu0 0
      %3904 = vmatprep.subr.bf16.mxu0 0
      %3905 = vmatpush1.bf16.msra.mxu0 0
      %3906 = vmatprep.subr.bf16.mxu0 0
      %3907 = vmatpush1.bf16.msra.mxu0 0
      %3908 = vmatprep.subr.bf16.mxu0 0
      %3909 = vmatpush1.bf16.msra.mxu0 0
      %3910 = vmatprep.subr.bf16.mxu0 0
      %3911 = vmatpush1.bf16.msra.mxu0 0
      %3912 = vmatprep.subr.bf16.mxu0 0
      %3913 = vmatpush1.bf16.msra.mxu0 0
      %3914 = vmatprep.subr.bf16.mxu0 0
      %3915 = vmatpush1.bf16.msra.mxu0 0
      %3916 = vmatprep.subr.bf16.mxu0 0
      %3917 = vmatpush1.bf16.msra.mxu0 0
      %3918 = vmatprep.subr.bf16.mxu0 0
      %3919 = vmatpush1.bf16.msra.mxu0 0
      %3920 = vmatprep.subr.bf16.mxu0 0
      %3921 = vmatpush1.bf16.msra.mxu0 0
      %3922 = vmatprep.subr.bf16.mxu0 0
      %3923 = vmatpush1.bf16.msra.mxu0 0
      %3924 = vmatprep.subr.bf16.mxu0 0
      %3925 = vmatpush1.bf16.msra.mxu0 0
      %3926 = vmatprep.subr.bf16.mxu0 0
      %3927 = vmatpush1.bf16.msra.mxu0 0
      %3928 = vmatprep.subr.bf16.mxu0 0
      %3929 = vmatpush1.bf16.msra.mxu0 0
      %3930 = vmatprep.subr.bf16.mxu0 0
      %3931 = vmatpush1.bf16.msra.mxu0 0
      %3932 = vmatprep.mubr.bf16.mxu0 0
      %3933 = vmatmul.mubr.bf16.gmra.mrb[0].mxu0 %v431
      %v3934 = vpop.f32.mrb[0].mxu0
      %v3935 = vadd.f32 0.0, %v3934
      %v3936 = vpop.f32.mrb[0].mxu0
      %v3937 = vpop.f32.mrb[0].mxu0
      %v3938 = vpop.f32.mrb[0].mxu0
      %3939 = vdwg.mxu0
      %v3941 = vsel %vm433, %v3866, 0
      %3943 = vmatprep.subr.bf16.mxu0 0
      %3944 = vmatpush1.bf16.msra.mxu0 %v3941
      %3945 = vmatprep.subr.bf16.mxu0 0
      %3946 = vmatpush1.bf16.msra.mxu0 0
      %3947 = vmatprep.subr.bf16.mxu0 0
      %3948 = vmatpush1.bf16.msra.mxu0 0
      %3949 = vmatprep.subr.bf16.mxu0 0
      %3950 = vmatpush1.bf16.msra.mxu0 0
      %3951 = vmatprep.subr.bf16.mxu0 0
      %3952 = vmatpush1.bf16.msra.mxu0 0
      %3953 = vmatprep.subr.bf16.mxu0 0
      %3954 = vmatpush1.bf16.msra.mxu0 0
      %3955 = vmatprep.subr.bf16.mxu0 0
      %3956 = vmatpush1.bf16.msra.mxu0 0
      %3957 = vmatprep.subr.bf16.mxu0 0
      %3958 = vmatpush1.bf16.msra.mxu0 0
      %3959 = vmatprep.subr.bf16.mxu0 0
      %3960 = vmatpush1.bf16.msra.mxu0 0
      %3961 = vmatprep.subr.bf16.mxu0 0
      %3962 = vmatpush1.bf16.msra.mxu0 0
      %3963 = vmatprep.subr.bf16.mxu0 0
      %3964 = vmatpush1.bf16.msra.mxu0 0
      %3965 = vmatprep.subr.bf16.mxu0 0
      %3966 = vmatpush1.bf16.msra.mxu0 0
      %3967 = vmatprep.subr.bf16.mxu0 0
      %3968 = vmatpush1.bf16.msra.mxu0 0
      %3969 = vmatprep.subr.bf16.mxu0 0
      %3970 = vmatpush1.bf16.msra.mxu0 0
      %3971 = vmatprep.subr.bf16.mxu0 0
      %3972 = vmatpush1.bf16.msra.mxu0 0
      %3973 = vmatprep.subr.bf16.mxu0 0
      %3974 = vmatpush1.bf16.msra.mxu0 0
      %3975 = vmatprep.mubr.bf16.mxu0 0
      %3976 = vmatmul.mubr.bf16.gmra.mrb[0].mxu0 %v478
      %v3977 = vpop.f32.mrb[0].mxu0
      %v3978 = vadd.f32 0.0, %v3977
      %v3979 = vpop.f32.mrb[0].mxu0
      %v3980 = vpop.f32.mrb[0].mxu0
      %v3981 = vpop.f32.mrb[0].mxu0
      %3982 = vdwg.mxu0
      %v3984 = vsel %vm433, %v3867, 0
      %3986 = vmatprep.subr.bf16.mxu0 0
      %3987 = vmatpush1.bf16.msra.mxu0 %v3984
      %3988 = vmatprep.subr.bf16.mxu0 0
      %3989 = vmatpush1.bf16.msra.mxu0 0
      %3990 = vmatprep.subr.bf16.mxu0 0
      %3991 = vmatpush1.bf16.msra.mxu0 0
      %3992 = vmatprep.subr.bf16.mxu0 0
      %3993 = vmatpush1.bf16.msra.mxu0 0
      %3994 = vmatprep.subr.bf16.mxu0 0
      %3995 = vmatpush1.bf16.msra.mxu0 0
      %3996 = vmatprep.subr.bf16.mxu0 0
      %3997 = vmatpush1.bf16.msra.mxu0 0
      %3998 = vmatprep.subr.bf16.mxu0 0
      %3999 = vmatpush1.bf16.msra.mxu0 0
      %4000 = vmatprep.subr.bf16.mxu0 0
      %4001 = vmatpush1.bf16.msra.mxu0 0
      %4002 = vmatprep.subr.bf16.mxu0 0
      %4003 = vmatpush1.bf16.msra.mxu0 0
      %4004 = vmatprep.subr.bf16.mxu0 0
      %4005 = vmatpush1.bf16.msra.mxu0 0
      %4006 = vmatprep.subr.bf16.mxu0 0
      %4007 = vmatpush1.bf16.msra.mxu0 0
      %4008 = vmatprep.subr.bf16.mxu0 0
      %4009 = vmatpush1.bf16.msra.mxu0 0
      %4010 = vmatprep.subr.bf16.mxu0 0
      %4011 = vmatpush1.bf16.msra.mxu0 0
      %4012 = vmatprep.subr.bf16.mxu0 0
      %4013 = vmatpush1.bf16.msra.mxu0 0
      %4014 = vmatprep.subr.bf16.mxu0 0
      %4015 = vmatpush1.bf16.msra.mxu0 0
      %4016 = vmatprep.subr.bf16.mxu0 0
      %4017 = vmatpush1.bf16.msra.mxu0 0
      %4018 = vmatprep.mubr.bf16.mxu0 0
      %4019 = vmatmul.mubr.bf16.gmra.mrb[0].mxu0 %v524
      %v4020 = vpop.f32.mrb[0].mxu0
      %v4021 = vadd.f32 0.0, %v4020
      %v4022 = vpop.f32.mrb[0].mxu0
      %v4023 = vpop.f32.mrb[0].mxu0
      %v4024 = vpop.f32.mrb[0].mxu0
      %4025 = vdwg.mxu0
      %v4027 = vsel %vm433, %v3868, 0
      %4029 = vmatprep.subr.bf16.mxu0 0
      %4030 = vmatpush1.bf16.msra.mxu0 %v4027
      %4031 = vmatprep.subr.bf16.mxu0 0
      %4032 = vmatpush1.bf16.msra.mxu0 0
      %4033 = vmatprep.subr.bf16.mxu0 0
      %4034 = vmatpush1.bf16.msra.mxu0 0
      %4035 = vmatprep.subr.bf16.mxu0 0
      %4036 = vmatpush1.bf16.msra.mxu0 0
      %4037 = vmatprep.subr.bf16.mxu0 0
      %4038 = vmatpush1.bf16.msra.mxu0 0
      %4039 = vmatprep.subr.bf16.mxu0 0
      %4040 = vmatpush1.bf16.msra.mxu0 0
      %4041 = vmatprep.subr.bf16.mxu0 0
      %4042 = vmatpush1.bf16.msra.mxu0 0
      %4043 = vmatprep.subr.bf16.mxu0 0
      %4044 = vmatpush1.bf16.msra.mxu0 0
      %4045 = vmatprep.subr.bf16.mxu0 0
      %4046 = vmatpush1.bf16.msra.mxu0 0
      %4047 = vmatprep.subr.bf16.mxu0 0
      %4048 = vmatpush1.bf16.msra.mxu0 0
      %4049 = vmatprep.subr.bf16.mxu0 0
      %4050 = vmatpush1.bf16.msra.mxu0 0
      %4051 = vmatprep.subr.bf16.mxu0 0
      %4052 = vmatpush1.bf16.msra.mxu0 0
      %4053 = vmatprep.subr.bf16.mxu0 0
      %4054 = vmatpush1.bf16.msra.mxu0 0
      %4055 = vmatprep.subr.bf16.mxu0 0
      %4056 = vmatpush1.bf16.msra.mxu0 0
      %4057 = vmatprep.subr.bf16.mxu0 0
      %4058 = vmatpush1.bf16.msra.mxu0 0
      %4059 = vmatprep.subr.bf16.mxu0 0
      %4060 = vmatpush1.bf16.msra.mxu0 0
      %4061 = vmatprep.mubr.bf16.mxu0 0
      %4062 = vmatmul.mubr.bf16.gmra.mrb[0].mxu0 %v570
      %v4063 = vpop.f32.mrb[0].mxu0
      %v4064 = vadd.f32 0.0, %v4063
      %v4065 = vpop.f32.mrb[0].mxu0
      %v4066 = vpop.f32.mrb[0].mxu0
      %v4067 = vpop.f32.mrb[0].mxu0
      %4068 = vdwg.mxu0
      %v4070 = vsel %vm433, %v3869, 0
      %4072 = vmatprep.subr.bf16.mxu0 0
      %4073 = vmatpush1.bf16.msra.mxu0 %v4070
      %4074 = vmatprep.subr.bf16.mxu0 0
      %4075 = vmatpush1.bf16.msra.mxu0 0
      %4076 = vmatprep.subr.bf16.mxu0 0
      %4077 = vmatpush1.bf16.msra.mxu0 0
      %4078 = vmatprep.subr.bf16.mxu0 0
      %4079 = vmatpush1.bf16.msra.mxu0 0
      %4080 = vmatprep.subr.bf16.mxu0 0
      %4081 = vmatpush1.bf16.msra.mxu0 0
      %4082 = vmatprep.subr.bf16.mxu0 0
      %4083 = vmatpush1.bf16.msra.mxu0 0
      %4084 = vmatprep.subr.bf16.mxu0 0
      %4085 = vmatpush1.bf16.msra.mxu0 0
      %4086 = vmatprep.subr.bf16.mxu0 0
      %4087 = vmatpush1.bf16.msra.mxu0 0
      %4088 = vmatprep.subr.bf16.mxu0 0
      %4089 = vmatpush1.bf16.msra.mxu0 0
      %4090 = vmatprep.subr.bf16.mxu0 0
      %4091 = vmatpush1.bf16.msra.mxu0 0
      %4092 = vmatprep.subr.bf16.mxu0 0
      %4093 = vmatpush1.bf16.msra.mxu0 0
      %4094 = vmatprep.subr.bf16.mxu0 0
      %4095 = vmatpush1.bf16.msra.mxu0 0
      %4096 = vmatprep.subr.bf16.mxu0 0
      %4097 = vmatpush1.bf16.msra.mxu0 0
      %4098 = vmatprep.subr.bf16.mxu0 0
      %4099 = vmatpush1.bf16.msra.mxu0 0
      %4100 = vmatprep.subr.bf16.mxu0 0
      %4101 = vmatpush1.bf16.msra.mxu0 0
      %4102 = vmatprep.subr.bf16.mxu0 0
      %4103 = vmatpush1.bf16.msra.mxu0 0
      %4104 = vmatprep.mubr.bf16.mxu0 0
      %4105 = vmatmul.mubr.bf16.gmra.mrb[0].mxu0 %v616
      %v4106 = vpop.f32.mrb[0].mxu0
      %v4107 = vadd.f32 0.0, %v4106
      %v4108 = vpop.f32.mrb[0].mxu0
      %v4109 = vpop.f32.mrb[0].mxu0
      %v4110 = vpop.f32.mrb[0].mxu0
      %4111 = vdwg.mxu0
      %v4113 = vsel %vm433, %v3870, 0
      %4115 = vmatprep.subr.bf16.mxu0 0
      %4116 = vmatpush1.bf16.msra.mxu0 %v4113
      %4117 = vmatprep.subr.bf16.mxu0 0
      %4118 = vmatpush1.bf16.msra.mxu0 0
      %4119 = vmatprep.subr.bf16.mxu0 0
      %4120 = vmatpush1.bf16.msra.mxu0 0
      %4121 = vmatprep.subr.bf16.mxu0 0
      %4122 = vmatpush1.bf16.msra.mxu0 0
      %4123 = vmatprep.subr.bf16.mxu0 0
      %4124 = vmatpush1.bf16.msra.mxu0 0
      %4125 = vmatprep.subr.bf16.mxu0 0
      %4126 = vmatpush1.bf16.msra.mxu0 0
      %4127 = vmatprep.subr.bf16.mxu0 0
      %4128 = vmatpush1.bf16.msra.mxu0 0
      %4129 = vmatprep.subr.bf16.mxu0 0
      %4130 = vmatpush1.bf16.msra.mxu0 0
      %4131 = vmatprep.subr.bf16.mxu0 0
      %4132 = vmatpush1.bf16.msra.mxu0 0
      %4133 = vmatprep.subr.bf16.mxu0 0
      %4134 = vmatpush1.bf16.msra.mxu0 0
      %4135 = vmatprep.subr.bf16.mxu0 0
      %4136 = vmatpush1.bf16.msra.mxu0 0
      %4137 = vmatprep.subr.bf16.mxu0 0
      %4138 = vmatpush1.bf16.msra.mxu0 0
      %4139 = vmatprep.subr.bf16.mxu0 0
      %4140 = vmatpush1.bf16.msra.mxu0 0
      %4141 = vmatprep.subr.bf16.mxu0 0
      %4142 = vmatpush1.bf16.msra.mxu0 0
      %4143 = vmatprep.subr.bf16.mxu0 0
      %4144 = vmatpush1.bf16.msra.mxu0 0
      %4145 = vmatprep.subr.bf16.mxu0 0
      %4146 = vmatpush1.bf16.msra.mxu0 0
      %4147 = vmatprep.mubr.bf16.mxu0 0
      %4148 = vmatmul.mubr.bf16.gmra.mrb[0].mxu0 %v662
      %v4149 = vpop.f32.mrb[0].mxu0
      %v4150 = vadd.f32 0.0, %v4149
      %v4151 = vpop.f32.mrb[0].mxu0
      %v4152 = vpop.f32.mrb[0].mxu0
      %v4153 = vpop.f32.mrb[0].mxu0
      %4154 = vdwg.mxu0
      %v4156 = vsel %vm433, %v3871, 0
      %4158 = vmatprep.subr.bf16.mxu0 0
      %4159 = vmatpush1.bf16.msra.mxu0 %v4156
      %4160 = vmatprep.subr.bf16.mxu0 0
      %4161 = vmatpush1.bf16.msra.mxu0 0
      %4162 = vmatprep.subr.bf16.mxu0 0
      %4163 = vmatpush1.bf16.msra.mxu0 0
      %4164 = vmatprep.subr.bf16.mxu0 0
      %4165 = vmatpush1.bf16.msra.mxu0 0
      %4166 = vmatprep.subr.bf16.mxu0 0
      %4167 = vmatpush1.bf16.msra.mxu0 0
      %4168 = vmatprep.subr.bf16.mxu0 0
      %4169 = vmatpush1.bf16.msra.mxu0 0
      %4170 = vmatprep.subr.bf16.mxu0 0
      %4171 = vmatpush1.bf16.msra.mxu0 0
      %4172 = vmatprep.subr.bf16.mxu0 0
      %4173 = vmatpush1.bf16.msra.mxu0 0
      %4174 = vmatprep.subr.bf16.mxu0 0
      %4175 = vmatpush1.bf16.msra.mxu0 0
      %4176 = vmatprep.subr.bf16.mxu0 0
      %4177 = vmatpush1.bf16.msra.mxu0 0
      %4178 = vmatprep.subr.bf16.mxu0 0
      %4179 = vmatpush1.bf16.msra.mxu0 0
      %4180 = vmatprep.subr.bf16.mxu0 0
      %4181 = vmatpush1.bf16.msra.mxu0 0
      %4182 = vmatprep.subr.bf16.mxu0 0
      %4183 = vmatpush1.bf16.msra.mxu0 0
      %4184 = vmatprep.subr.bf16.mxu0 0
      %4185 = vmatpush1.bf16.msra.mxu0 0
      %4186 = vmatprep.subr.bf16.mxu0 0
      %4187 = vmatpush1.bf16.msra.mxu0 0
      %4188 = vmatprep.subr.bf16.mxu0 0
      %4189 = vmatpush1.bf16.msra.mxu0 0
      %4190 = vmatprep.mubr.bf16.mxu0 0
      %4191 = vmatmul.mubr.bf16.gmra.mrb[0].mxu0 %v708
      %v4192 = vpop.f32.mrb[0].mxu0
      %v4193 = vadd.f32 0.0, %v4192
      %v4194 = vpop.f32.mrb[0].mxu0
      %v4195 = vpop.f32.mrb[0].mxu0
      %v4196 = vpop.f32.mrb[0].mxu0
      %4197 = vdwg.mxu0
      %v4199 = vsel %vm433, %v3872, 0
      %4201 = vmatprep.subr.bf16.mxu0 0
      %4202 = vmatpush1.bf16.msra.mxu0 %v4199
      %4203 = vmatprep.subr.bf16.mxu0 0
      %4204 = vmatpush1.bf16.msra.mxu0 0
      %4205 = vmatprep.subr.bf16.mxu0 0
      %4206 = vmatpush1.bf16.msra.mxu0 0
      %4207 = vmatprep.subr.bf16.mxu0 0
      %4208 = vmatpush1.bf16.msra.mxu0 0
      %4209 = vmatprep.subr.bf16.mxu0 0
      %4210 = vmatpush1.bf16.msra.mxu0 0
      %4211 = vmatprep.subr.bf16.mxu0 0
      %4212 = vmatpush1.bf16.msra.mxu0 0
      %4213 = vmatprep.subr.bf16.mxu0 0
      %4214 = vmatpush1.bf16.msra.mxu0 0
      %4215 = vmatprep.subr.bf16.mxu0 0
      %4216 = vmatpush1.bf16.msra.mxu0 0
      %4217 = vmatprep.subr.bf16.mxu0 0
      %4218 = vmatpush1.bf16.msra.mxu0 0
      %4219 = vmatprep.subr.bf16.mxu0 0
      %4220 = vmatpush1.bf16.msra.mxu0 0
      %4221 = vmatprep.subr.bf16.mxu0 0
      %4222 = vmatpush1.bf16.msra.mxu0 0
      %4223 = vmatprep.subr.bf16.mxu0 0
      %4224 = vmatpush1.bf16.msra.mxu0 0
      %4225 = vmatprep.subr.bf16.mxu0 0
      %4226 = vmatpush1.bf16.msra.mxu0 0
      %4227 = vmatprep.subr.bf16.mxu0 0
      %4228 = vmatpush1.bf16.msra.mxu0 0
      %4229 = vmatprep.subr.bf16.mxu0 0
      %4230 = vmatpush1.bf16.msra.mxu0 0
      %4231 = vmatprep.subr.bf16.mxu0 0
      %4232 = vmatpush1.bf16.msra.mxu0 0
      %4233 = vmatprep.mubr.bf16.mxu0 0
      %4234 = vmatmul.mubr.bf16.gmra.mrb[0].mxu0 %v754
      %v4235 = vpop.f32.mrb[0].mxu0
      %v4236 = vadd.f32 0.0, %v4235
      %v4237 = vpop.f32.mrb[0].mxu0
      %v4238 = vpop.f32.mrb[0].mxu0
      %v4239 = vpop.f32.mrb[0].mxu0
      %4240 = vdwg.mxu0
      %v4242 = vsel %vm433, %v3873, 0
      %4244 = vmatprep.subr.bf16.mxu0 0
      %4245 = vmatpush1.bf16.msra.mxu0 %v4242
      %4246 = vmatprep.subr.bf16.mxu0 0
      %4247 = vmatpush1.bf16.msra.mxu0 0
      %4248 = vmatprep.subr.bf16.mxu0 0
      %4249 = vmatpush1.bf16.msra.mxu0 0
      %4250 = vmatprep.subr.bf16.mxu0 0
      %4251 = vmatpush1.bf16.msra.mxu0 0
      %4252 = vmatprep.subr.bf16.mxu0 0
      %4253 = vmatpush1.bf16.msra.mxu0 0
      %4254 = vmatprep.subr.bf16.mxu0 0
      %4255 = vmatpush1.bf16.msra.mxu0 0
      %4256 = vmatprep.subr.bf16.mxu0 0
      %4257 = vmatpush1.bf16.msra.mxu0 0
      %4258 = vmatprep.subr.bf16.mxu0 0
      %4259 = vmatpush1.bf16.msra.mxu0 0
      %4260 = vmatprep.subr.bf16.mxu0 0
      %4261 = vmatpush1.bf16.msra.mxu0 0
      %4262 = vmatprep.subr.bf16.mxu0 0
      %4263 = vmatpush1.bf16.msra.mxu0 0
      %4264 = vmatprep.subr.bf16.mxu0 0
      %4265 = vmatpush1.bf16.msra.mxu0 0
      %4266 = vmatprep.subr.bf16.mxu0 0
      %4267 = vmatpush1.bf16.msra.mxu0 0
      %4268 = vmatprep.subr.bf16.mxu0 0
      %4269 = vmatpush1.bf16.msra.mxu0 0
      %4270 = vmatprep.subr.bf16.mxu0 0
      %4271 = vmatpush1.bf16.msra.mxu0 0
      %4272 = vmatprep.subr.bf16.mxu0 0
      %4273 = vmatpush1.bf16.msra.mxu0 0
      %4274 = vmatprep.subr.bf16.mxu0 0
      %4275 = vmatpush1.bf16.msra.mxu0 0
      %4276 = vmatprep.mubr.bf16.mxu0 0
      %4277 = vmatmul.mubr.bf16.gmra.mrb[0].mxu0 %v800
      %v4278 = vpop.f32.mrb[0].mxu0
      %v4279 = vadd.f32 0.0, %v4278
      %v4280 = vpop.f32.mrb[0].mxu0
      %v4281 = vpop.f32.mrb[0].mxu0
      %v4282 = vpop.f32.mrb[0].mxu0
      %4283 = vdwg.mxu0
      %v4285 = vsel %vm433, %v3874, 0
      %4287 = vmatprep.subr.bf16.mxu0 0
      %4288 = vmatpush1.bf16.msra.mxu0 %v4285
      %4289 = vmatprep.subr.bf16.mxu0 0
      %4290 = vmatpush1.bf16.msra.mxu0 0
      %4291 = vmatprep.subr.bf16.mxu0 0
      %4292 = vmatpush1.bf16.msra.mxu0 0
      %4293 = vmatprep.subr.bf16.mxu0 0
      %4294 = vmatpush1.bf16.msra.mxu0 0
      %4295 = vmatprep.subr.bf16.mxu0 0
      %4296 = vmatpush1.bf16.msra.mxu0 0
      %4297 = vmatprep.subr.bf16.mxu0 0
      %4298 = vmatpush1.bf16.msra.mxu0 0
      %4299 = vmatprep.subr.bf16.mxu0 0
      %4300 = vmatpush1.bf16.msra.mxu0 0
      %4301 = vmatprep.subr.bf16.mxu0 0
      %4302 = vmatpush1.bf16.msra.mxu0 0
      %4303 = vmatprep.subr.bf16.mxu0 0
      %4304 = vmatpush1.bf16.msra.mxu0 0
      %4305 = vmatprep.subr.bf16.mxu0 0
      %4306 = vmatpush1.bf16.msra.mxu0 0
      %4307 = vmatprep.subr.bf16.mxu0 0
      %4308 = vmatpush1.bf16.msra.mxu0 0
      %4309 = vmatprep.subr.bf16.mxu0 0
      %4310 = vmatpush1.bf16.msra.mxu0 0
      %4311 = vmatprep.subr.bf16.mxu0 0
      %4312 = vmatpush1.bf16.msra.mxu0 0
      %4313 = vmatprep.subr.bf16.mxu0 0
      %4314 = vmatpush1.bf16.msra.mxu0 0
      %4315 = vmatprep.subr.bf16.mxu0 0
      %4316 = vmatpush1.bf16.msra.mxu0 0
      %4317 = vmatprep.subr.bf16.mxu0 0
      %4318 = vmatpush1.bf16.msra.mxu0 0
      %4319 = vmatprep.mubr.bf16.mxu0 0
      %4320 = vmatmul.mubr.bf16.gmra.mrb[0].mxu0 %v846
      %v4321 = vpop.f32.mrb[0].mxu0
      %v4322 = vadd.f32 0.0, %v4321
      %v4323 = vpop.f32.mrb[0].mxu0
      %v4324 = vpop.f32.mrb[0].mxu0
      %v4325 = vpop.f32.mrb[0].mxu0
      %4326 = vdwg.mxu0
      %v4328 = vsel %vm433, %v3875, 0
      %4330 = vmatprep.subr.bf16.mxu0 0
      %4331 = vmatpush1.bf16.msra.mxu0 %v4328
      %4332 = vmatprep.subr.bf16.mxu0 0
      %4333 = vmatpush1.bf16.msra.mxu0 0
      %4334 = vmatprep.subr.bf16.mxu0 0
      %4335 = vmatpush1.bf16.msra.mxu0 0
      %4336 = vmatprep.subr.bf16.mxu0 0
      %4337 = vmatpush1.bf16.msra.mxu0 0
      %4338 = vmatprep.subr.bf16.mxu0 0
      %4339 = vmatpush1.bf16.msra.mxu0 0
      %4340 = vmatprep.subr.bf16.mxu0 0
      %4341 = vmatpush1.bf16.msra.mxu0 0
      %4342 = vmatprep.subr.bf16.mxu0 0
      %4343 = vmatpush1.bf16.msra.mxu0 0
      %4344 = vmatprep.subr.bf16.mxu0 0
      %4345 = vmatpush1.bf16.msra.mxu0 0
      %4346 = vmatprep.subr.bf16.mxu0 0
      %4347 = vmatpush1.bf16.msra.mxu0 0
      %4348 = vmatprep.subr.bf16.mxu0 0
      %4349 = vmatpush1.bf16.msra.mxu0 0
      %4350 = vmatprep.subr.bf16.mxu0 0
      %4351 = vmatpush1.bf16.msra.mxu0 0
      %4352 = vmatprep.subr.bf16.mxu0 0
      %4353 = vmatpush1.bf16.msra.mxu0 0
      %4354 = vmatprep.subr.bf16.mxu0 0
      %4355 = vmatpush1.bf16.msra.mxu0 0
      %4356 = vmatprep.subr.bf16.mxu0 0
      %4357 = vmatpush1.bf16.msra.mxu0 0
      %4358 = vmatprep.subr.bf16.mxu0 0
      %4359 = vmatpush1.bf16.msra.mxu0 0
      %4360 = vmatprep.subr.bf16.mxu0 0
      %4361 = vmatpush1.bf16.msra.mxu0 0
      %4362 = vmatprep.mubr.bf16.mxu0 0
      %4363 = vmatmul.mubr.bf16.gmra.mrb[0].mxu0 %v892
      %v4364 = vpop.f32.mrb[0].mxu0
      %v4365 = vadd.f32 0.0, %v4364
      %v4366 = vpop.f32.mrb[0].mxu0
      %v4367 = vpop.f32.mrb[0].mxu0
      %v4368 = vpop.f32.mrb[0].mxu0
      %4369 = vdwg.mxu0
      %v4371 = vsel %vm433, %v3876, 0
      %4373 = vmatprep.subr.bf16.mxu0 0
      %4374 = vmatpush1.bf16.msra.mxu0 %v4371
      %4375 = vmatprep.subr.bf16.mxu0 0
      %4376 = vmatpush1.bf16.msra.mxu0 0
      %4377 = vmatprep.subr.bf16.mxu0 0
      %4378 = vmatpush1.bf16.msra.mxu0 0
      %4379 = vmatprep.subr.bf16.mxu0 0
      %4380 = vmatpush1.bf16.msra.mxu0 0
      %4381 = vmatprep.subr.bf16.mxu0 0
      %4382 = vmatpush1.bf16.msra.mxu0 0
      %4383 = vmatprep.subr.bf16.mxu0 0
      %4384 = vmatpush1.bf16.msra.mxu0 0
      %4385 = vmatprep.subr.bf16.mxu0 0
      %4386 = vmatpush1.bf16.msra.mxu0 0
      %4387 = vmatprep.subr.bf16.mxu0 0
      %4388 = vmatpush1.bf16.msra.mxu0 0
      %4389 = vmatprep.subr.bf16.mxu0 0
      %4390 = vmatpush1.bf16.msra.mxu0 0
      %4391 = vmatprep.subr.bf16.mxu0 0
      %4392 = vmatpush1.bf16.msra.mxu0 0
      %4393 = vmatprep.subr.bf16.mxu0 0
      %4394 = vmatpush1.bf16.msra.mxu0 0
      %4395 = vmatprep.subr.bf16.mxu0 0
      %4396 = vmatpush1.bf16.msra.mxu0 0
      %4397 = vmatprep.subr.bf16.mxu0 0
      %4398 = vmatpush1.bf16.msra.mxu0 0
      %4399 = vmatprep.subr.bf16.mxu0 0
      %4400 = vmatpush1.bf16.msra.mxu0 0
      %4401 = vmatprep.subr.bf16.mxu0 0
      %4402 = vmatpush1.bf16.msra.mxu0 0
      %4403 = vmatprep.subr.bf16.mxu0 0
      %4404 = vmatpush1.bf16.msra.mxu0 0
      %4405 = vmatprep.mubr.bf16.mxu0 0
      %4406 = vmatmul.mubr.bf16.gmra.mrb[0].mxu0 %v938
      %v4407 = vpop.f32.mrb[0].mxu0
      %v4408 = vadd.f32 0.0, %v4407
      %v4409 = vpop.f32.mrb[0].mxu0
      %v4410 = vpop.f32.mrb[0].mxu0
      %v4411 = vpop.f32.mrb[0].mxu0
      %4412 = vdwg.mxu0
      %v4414 = vsel %vm433, %v3877, 0
      %4416 = vmatprep.subr.bf16.mxu0 0
      %4417 = vmatpush1.bf16.msra.mxu0 %v4414
      %4418 = vmatprep.subr.bf16.mxu0 0
      %4419 = vmatpush1.bf16.msra.mxu0 0
      %4420 = vmatprep.subr.bf16.mxu0 0
      %4421 = vmatpush1.bf16.msra.mxu0 0
      %4422 = vmatprep.subr.bf16.mxu0 0
      %4423 = vmatpush1.bf16.msra.mxu0 0
      %4424 = vmatprep.subr.bf16.mxu0 0
      %4425 = vmatpush1.bf16.msra.mxu0 0
      %4426 = vmatprep.subr.bf16.mxu0 0
      %4427 = vmatpush1.bf16.msra.mxu0 0
      %4428 = vmatprep.subr.bf16.mxu0 0
      %4429 = vmatpush1.bf16.msra.mxu0 0
      %4430 = vmatprep.subr.bf16.mxu0 0
      %4431 = vmatpush1.bf16.msra.mxu0 0
      %4432 = vmatprep.subr.bf16.mxu0 0
      %4433 = vmatpush1.bf16.msra.mxu0 0
      %4434 = vmatprep.subr.bf16.mxu0 0
      %4435 = vmatpush1.bf16.msra.mxu0 0
      %4436 = vmatprep.subr.bf16.mxu0 0
      %4437 = vmatpush1.bf16.msra.mxu0 0
      %4438 = vmatprep.subr.bf16.mxu0 0
      %4439 = vmatpush1.bf16.msra.mxu0 0
      %4440 = vmatprep.subr.bf16.mxu0 0
      %4441 = vmatpush1.bf16.msra.mxu0 0
      %4442 = vmatprep.subr.bf16.mxu0 0
      %4443 = vmatpush1.bf16.msra.mxu0 0
      %4444 = vmatprep.subr.bf16.mxu0 0
      %4445 = vmatpush1.bf16.msra.mxu0 0
      %4446 = vmatprep.subr.bf16.mxu0 0
      %4447 = vmatpush1.bf16.msra.mxu0 0
      %4448 = vmatprep.mubr.bf16.mxu0 0
      %4449 = vmatmul.mubr.bf16.gmra.mrb[0].mxu0 %v984
      %v4450 = vpop.f32.mrb[0].mxu0
      %v4451 = vadd.f32 0.0, %v4450
      %v4452 = vpop.f32.mrb[0].mxu0
      %v4453 = vpop.f32.mrb[0].mxu0
      %v4454 = vpop.f32.mrb[0].mxu0
      %4455 = vdwg.mxu0
      %v4457 = vsel %vm433, %v3878, 0
      %4459 = vmatprep.subr.bf16.mxu0 0
      %4460 = vmatpush1.bf16.msra.mxu0 %v4457
      %4461 = vmatprep.subr.bf16.mxu0 0
      %4462 = vmatpush1.bf16.msra.mxu0 0
      %4463 = vmatprep.subr.bf16.mxu0 0
      %4464 = vmatpush1.bf16.msra.mxu0 0
      %4465 = vmatprep.subr.bf16.mxu0 0
      %4466 = vmatpush1.bf16.msra.mxu0 0
      %4467 = vmatprep.subr.bf16.mxu0 0
      %4468 = vmatpush1.bf16.msra.mxu0 0
      %4469 = vmatprep.subr.bf16.mxu0 0
      %4470 = vmatpush1.bf16.msra.mxu0 0
      %4471 = vmatprep.subr.bf16.mxu0 0
      %4472 = vmatpush1.bf16.msra.mxu0 0
      %4473 = vmatprep.subr.bf16.mxu0 0
      %4474 = vmatpush1.bf16.msra.mxu0 0
      %4475 = vmatprep.subr.bf16.mxu0 0
      %4476 = vmatpush1.bf16.msra.mxu0 0
      %4477 = vmatprep.subr.bf16.mxu0 0
      %4478 = vmatpush1.bf16.msra.mxu0 0
      %4479 = vmatprep.subr.bf16.mxu0 0
      %4480 = vmatpush1.bf16.msra.mxu0 0
      %4481 = vmatprep.subr.bf16.mxu0 0
      %4482 = vmatpush1.bf16.msra.mxu0 0
      %4483 = vmatprep.subr.bf16.mxu0 0
      %4484 = vmatpush1.bf16.msra.mxu0 0
      %4485 = vmatprep.subr.bf16.mxu0 0
      %4486 = vmatpush1.bf16.msra.mxu0 0
      %4487 = vmatprep.subr.bf16.mxu0 0
      %4488 = vmatpush1.bf16.msra.mxu0 0
      %4489 = vmatprep.subr.bf16.mxu0 0
      %4490 = vmatpush1.bf16.msra.mxu0 0
      %4491 = vmatprep.mubr.bf16.mxu0 0
      %4492 = vmatmul.mubr.bf16.gmra.mrb[0].mxu0 %v1030
      %v4493 = vpop.f32.mrb[0].mxu0
      %v4494 = vadd.f32 0.0, %v4493
      %v4495 = vpop.f32.mrb[0].mxu0
      %v4496 = vpop.f32.mrb[0].mxu0
      %v4497 = vpop.f32.mrb[0].mxu0
      %4498 = vdwg.mxu0
      %v4500 = vsel %vm433, %v3879, 0
      %4502 = vmatprep.subr.bf16.mxu0 0
      %4503 = vmatpush1.bf16.msra.mxu0 %v4500
      %4504 = vmatprep.subr.bf16.mxu0 0
      %4505 = vmatpush1.bf16.msra.mxu0 0
      %4506 = vmatprep.subr.bf16.mxu0 0
      %4507 = vmatpush1.bf16.msra.mxu0 0
      %4508 = vmatprep.subr.bf16.mxu0 0
      %4509 = vmatpush1.bf16.msra.mxu0 0
      %4510 = vmatprep.subr.bf16.mxu0 0
      %4511 = vmatpush1.bf16.msra.mxu0 0
      %4512 = vmatprep.subr.bf16.mxu0 0
      %4513 = vmatpush1.bf16.msra.mxu0 0
      %4514 = vmatprep.subr.bf16.mxu0 0
      %4515 = vmatpush1.bf16.msra.mxu0 0
      %4516 = vmatprep.subr.bf16.mxu0 0
      %4517 = vmatpush1.bf16.msra.mxu0 0
      %4518 = vmatprep.subr.bf16.mxu0 0
      %4519 = vmatpush1.bf16.msra.mxu0 0
      %4520 = vmatprep.subr.bf16.mxu0 0
      %4521 = vmatpush1.bf16.msra.mxu0 0
      %4522 = vmatprep.subr.bf16.mxu0 0
      %4523 = vmatpush1.bf16.msra.mxu0 0
      %4524 = vmatprep.subr.bf16.mxu0 0
      %4525 = vmatpush1.bf16.msra.mxu0 0
      %4526 = vmatprep.subr.bf16.mxu0 0
      %4527 = vmatpush1.bf16.msra.mxu0 0
      %4528 = vmatprep.subr.bf16.mxu0 0
      %4529 = vmatpush1.bf16.msra.mxu0 0
      %4530 = vmatprep.subr.bf16.mxu0 0
      %4531 = vmatpush1.bf16.msra.mxu0 0
      %4532 = vmatprep.subr.bf16.mxu0 0
      %4533 = vmatpush1.bf16.msra.mxu0 0
      %4534 = vmatprep.mubr.bf16.mxu0 0
      %4535 = vmatmul.mubr.bf16.gmra.mrb[0].mxu0 %v1076
      %v4536 = vpop.f32.mrb[0].mxu0
      %v4537 = vadd.f32 0.0, %v4536
      %v4538 = vpop.f32.mrb[0].mxu0
      %v4539 = vpop.f32.mrb[0].mxu0
      %v4540 = vpop.f32.mrb[0].mxu0
      %4541 = vdwg.mxu0
      %v4543 = vsel %vm433, %v3880, 0
      %4545 = vmatprep.subr.bf16.mxu0 0
      %4546 = vmatpush1.bf16.msra.mxu0 %v4543
      %4547 = vmatprep.subr.bf16.mxu0 0
      %4548 = vmatpush1.bf16.msra.mxu0 0
      %4549 = vmatprep.subr.bf16.mxu0 0
      %4550 = vmatpush1.bf16.msra.mxu0 0
      %4551 = vmatprep.subr.bf16.mxu0 0
      %4552 = vmatpush1.bf16.msra.mxu0 0
      %4553 = vmatprep.subr.bf16.mxu0 0
      %4554 = vmatpush1.bf16.msra.mxu0 0
      %4555 = vmatprep.subr.bf16.mxu0 0
      %4556 = vmatpush1.bf16.msra.mxu0 0
      %4557 = vmatprep.subr.bf16.mxu0 0
      %4558 = vmatpush1.bf16.msra.mxu0 0
      %4559 = vmatprep.subr.bf16.mxu0 0
      %4560 = vmatpush1.bf16.msra.mxu0 0
      %4561 = vmatprep.subr.bf16.mxu0 0
      %4562 = vmatpush1.bf16.msra.mxu0 0
      %4563 = vmatprep.subr.bf16.mxu0 0
      %4564 = vmatpush1.bf16.msra.mxu0 0
      %4565 = vmatprep.subr.bf16.mxu0 0
      %4566 = vmatpush1.bf16.msra.mxu0 0
      %4567 = vmatprep.subr.bf16.mxu0 0
      %4568 = vmatpush1.bf16.msra.mxu0 0
      %4569 = vmatprep.subr.bf16.mxu0 0
      %4570 = vmatpush1.bf16.msra.mxu0 0
      %4571 = vmatprep.subr.bf16.mxu0 0
      %4572 = vmatpush1.bf16.msra.mxu0 0
      %4573 = vmatprep.subr.bf16.mxu0 0
      %4574 = vmatpush1.bf16.msra.mxu0 0
      %4575 = vmatprep.subr.bf16.mxu0 0
      %4576 = vmatpush1.bf16.msra.mxu0 0
      %4577 = vmatprep.mubr.bf16.mxu0 0
      %4578 = vmatmul.mubr.bf16.gmra.mrb[0].mxu0 %v1122
      %v4579 = vpop.f32.mrb[0].mxu0
      %v4580 = vadd.f32 0.0, %v4579
      %v4581 = vpop.f32.mrb[0].mxu0
      %v4582 = vpop.f32.mrb[0].mxu0
      %v4583 = vpop.f32.mrb[0].mxu0
      %4584 = vdwg.mxu0
      %v4586 = vsel %vm433, %v3881, 0
      %4588 = vmatprep.subr.bf16.mxu0 0
      %4589 = vmatpush1.bf16.msra.mxu0 %v4586
      %4590 = vmatprep.subr.bf16.mxu0 0
      %4591 = vmatpush1.bf16.msra.mxu0 0
      %4592 = vmatprep.subr.bf16.mxu0 0
      %4593 = vmatpush1.bf16.msra.mxu0 0
      %4594 = vmatprep.subr.bf16.mxu0 0
      %4595 = vmatpush1.bf16.msra.mxu0 0
      %4596 = vmatprep.subr.bf16.mxu0 0
      %4597 = vmatpush1.bf16.msra.mxu0 0
      %4598 = vmatprep.subr.bf16.mxu0 0
      %4599 = vmatpush1.bf16.msra.mxu0 0
      %4600 = vmatprep.subr.bf16.mxu0 0
      %4601 = vmatpush1.bf16.msra.mxu0 0
      %4602 = vmatprep.subr.bf16.mxu0 0
      %4603 = vmatpush1.bf16.msra.mxu0 0
      %4604 = vmatprep.subr.bf16.mxu0 0
      %4605 = vmatpush1.bf16.msra.mxu0 0
      %4606 = vmatprep.subr.bf16.mxu0 0
      %4607 = vmatpush1.bf16.msra.mxu0 0
      %4608 = vmatprep.subr.bf16.mxu0 0
      %4609 = vmatpush1.bf16.msra.mxu0 0
      %4610 = vmatprep.subr.bf16.mxu0 0
      %4611 = vmatpush1.bf16.msra.mxu0 0
      %4612 = vmatprep.subr.bf16.mxu0 0
      %4613 = vmatpush1.bf16.msra.mxu0 0
      %4614 = vmatprep.subr.bf16.mxu0 0
      %4615 = vmatpush1.bf16.msra.mxu0 0
      %4616 = vmatprep.subr.bf16.mxu0 0
      %4617 = vmatpush1.bf16.msra.mxu0 0
      %4618 = vmatprep.subr.bf16.mxu0 0
      %4619 = vmatpush1.bf16.msra.mxu0 0
      %4620 = vmatprep.mubr.bf16.mxu0 0
      %4621 = vmatmul.mubr.bf16.gmra.mrb[0].mxu0 %v1168
      %v4622 = vpop.f32.mrb[0].mxu0
      %v4623 = vadd.f32 0.0, %v4622
      %v4624 = vpop.f32.mrb[0].mxu0
      %v4625 = vpop.f32.mrb[0].mxu0
      %v4626 = vpop.f32.mrb[0].mxu0
      %4627 = vdwg.mxu0
      %v4629 = vsel %vm433, %v3882, 0
      %4631 = vmatprep.subr.bf16.mxu0 0
      %4632 = vmatpush1.bf16.msra.mxu0 %v4629
      %4633 = vmatprep.subr.bf16.mxu0 0
      %4634 = vmatpush1.bf16.msra.mxu0 0
      %4635 = vmatprep.subr.bf16.mxu0 0
      %4636 = vmatpush1.bf16.msra.mxu0 0
      %4637 = vmatprep.subr.bf16.mxu0 0
      %4638 = vmatpush1.bf16.msra.mxu0 0
      %4639 = vmatprep.subr.bf16.mxu0 0
      %4640 = vmatpush1.bf16.msra.mxu0 0
      %4641 = vmatprep.subr.bf16.mxu0 0
      %4642 = vmatpush1.bf16.msra.mxu0 0
      %4643 = vmatprep.subr.bf16.mxu0 0
      %4644 = vmatpush1.bf16.msra.mxu0 0
      %4645 = vmatprep.subr.bf16.mxu0 0
      %4646 = vmatpush1.bf16.msra.mxu0 0
      %4647 = vmatprep.subr.bf16.mxu0 0
      %4648 = vmatpush1.bf16.msra.mxu0 0
      %4649 = vmatprep.subr.bf16.mxu0 0
      %4650 = vmatpush1.bf16.msra.mxu0 0
      %4651 = vmatprep.subr.bf16.mxu0 0
      %4652 = vmatpush1.bf16.msra.mxu0 0
      %4653 = vmatprep.subr.bf16.mxu0 0
      %4654 = vmatpush1.bf16.msra.mxu0 0
      %4655 = vmatprep.subr.bf16.mxu0 0
      %4656 = vmatpush1.bf16.msra.mxu0 0
      %4657 = vmatprep.subr.bf16.mxu0 0
      %4658 = vmatpush1.bf16.msra.mxu0 0
      %4659 = vmatprep.subr.bf16.mxu0 0
      %4660 = vmatpush1.bf16.msra.mxu0 0
      %4661 = vmatprep.subr.bf16.mxu0 0
      %4662 = vmatpush1.bf16.msra.mxu0 0
      %4663 = vmatprep.mubr.bf16.mxu0 0
      %4664 = vmatmul.mubr.bf16.gmra.mrb[0].mxu0 %v1214
      %v4665 = vpop.f32.mrb[0].mxu0
      %v4666 = vadd.f32 0.0, %v4665
      %v4667 = vpop.f32.mrb[0].mxu0
      %v4668 = vpop.f32.mrb[0].mxu0
      %v4669 = vpop.f32.mrb[0].mxu0
      %4670 = vdwg.mxu0
      %v4672 = vsel %vm433, %v3883, 0
      %4674 = vmatprep.subr.bf16.mxu0 0
      %4675 = vmatpush1.bf16.msra.mxu0 %v4672
      %4676 = vmatprep.subr.bf16.mxu0 0
      %4677 = vmatpush1.bf16.msra.mxu0 0
      %4678 = vmatprep.subr.bf16.mxu0 0
      %4679 = vmatpush1.bf16.msra.mxu0 0
      %4680 = vmatprep.subr.bf16.mxu0 0
      %4681 = vmatpush1.bf16.msra.mxu0 0
      %4682 = vmatprep.subr.bf16.mxu0 0
      %4683 = vmatpush1.bf16.msra.mxu0 0
      %4684 = vmatprep.subr.bf16.mxu0 0
      %4685 = vmatpush1.bf16.msra.mxu0 0
      %4686 = vmatprep.subr.bf16.mxu0 0
      %4687 = vmatpush1.bf16.msra.mxu0 0
      %4688 = vmatprep.subr.bf16.mxu0 0
      %4689 = vmatpush1.bf16.msra.mxu0 0
      %4690 = vmatprep.subr.bf16.mxu0 0
      %4691 = vmatpush1.bf16.msra.mxu0 0
      %4692 = vmatprep.subr.bf16.mxu0 0
      %4693 = vmatpush1.bf16.msra.mxu0 0
      %4694 = vmatprep.subr.bf16.mxu0 0
      %4695 = vmatpush1.bf16.msra.mxu0 0
      %4696 = vmatprep.subr.bf16.mxu0 0
      %4697 = vmatpush1.bf16.msra.mxu0 0
      %4698 = vmatprep.subr.bf16.mxu0 0
      %4699 = vmatpush1.bf16.msra.mxu0 0
      %4700 = vmatprep.subr.bf16.mxu0 0
      %4701 = vmatpush1.bf16.msra.mxu0 0
      %4702 = vmatprep.subr.bf16.mxu0 0
      %4703 = vmatpush1.bf16.msra.mxu0 0
      %4704 = vmatprep.subr.bf16.mxu0 0
      %4705 = vmatpush1.bf16.msra.mxu0 0
      %4706 = vmatprep.mubr.bf16.mxu0 0
      %4707 = vmatmul.mubr.bf16.gmra.mrb[0].mxu0 %v1260
      %v4708 = vpop.f32.mrb[0].mxu0
      %v4709 = vadd.f32 0.0, %v4708
      %v4710 = vpop.f32.mrb[0].mxu0
      %v4711 = vpop.f32.mrb[0].mxu0
      %v4712 = vpop.f32.mrb[0].mxu0
      %4713 = vdwg.mxu0
      %v4715 = vsel %vm433, %v3884, 0
      %4717 = vmatprep.subr.bf16.mxu0 0
      %4718 = vmatpush1.bf16.msra.mxu0 %v4715
      %4719 = vmatprep.subr.bf16.mxu0 0
      %4720 = vmatpush1.bf16.msra.mxu0 0
      %4721 = vmatprep.subr.bf16.mxu0 0
      %4722 = vmatpush1.bf16.msra.mxu0 0
      %4723 = vmatprep.subr.bf16.mxu0 0
      %4724 = vmatpush1.bf16.msra.mxu0 0
      %4725 = vmatprep.subr.bf16.mxu0 0
      %4726 = vmatpush1.bf16.msra.mxu0 0
      %4727 = vmatprep.subr.bf16.mxu0 0
      %4728 = vmatpush1.bf16.msra.mxu0 0
      %4729 = vmatprep.subr.bf16.mxu0 0
      %4730 = vmatpush1.bf16.msra.mxu0 0
      %4731 = vmatprep.subr.bf16.mxu0 0
      %4732 = vmatpush1.bf16.msra.mxu0 0
      %4733 = vmatprep.subr.bf16.mxu0 0
      %4734 = vmatpush1.bf16.msra.mxu0 0
      %4735 = vmatprep.subr.bf16.mxu0 0
      %4736 = vmatpush1.bf16.msra.mxu0 0
      %4737 = vmatprep.subr.bf16.mxu0 0
      %4738 = vmatpush1.bf16.msra.mxu0 0
      %4739 = vmatprep.subr.bf16.mxu0 0
      %4740 = vmatpush1.bf16.msra.mxu0 0
      %4741 = vmatprep.subr.bf16.mxu0 0
      %4742 = vmatpush1.bf16.msra.mxu0 0
      %4743 = vmatprep.subr.bf16.mxu0 0
      %4744 = vmatpush1.bf16.msra.mxu0 0
      %4745 = vmatprep.subr.bf16.mxu0 0
      %4746 = vmatpush1.bf16.msra.mxu0 0
      %4747 = vmatprep.subr.bf16.mxu0 0
      %4748 = vmatpush1.bf16.msra.mxu0 0
      %4749 = vmatprep.mubr.bf16.mxu0 0
      %4750 = vmatmul.mubr.bf16.gmra.mrb[0].mxu0 %v1306
      %v4751 = vpop.f32.mrb[0].mxu0
      %v4752 = vadd.f32 0.0, %v4751
      %v4753 = vpop.f32.mrb[0].mxu0
      %v4754 = vpop.f32.mrb[0].mxu0
      %v4755 = vpop.f32.mrb[0].mxu0
      %4756 = vdwg.mxu0
      %v4758 = vsel %vm433, %v3885, 0
      %4760 = vmatprep.subr.bf16.mxu0 0
      %4761 = vmatpush1.bf16.msra.mxu0 %v4758
      %4762 = vmatprep.subr.bf16.mxu0 0
      %4763 = vmatpush1.bf16.msra.mxu0 0
      %4764 = vmatprep.subr.bf16.mxu0 0
      %4765 = vmatpush1.bf16.msra.mxu0 0
      %4766 = vmatprep.subr.bf16.mxu0 0
      %4767 = vmatpush1.bf16.msra.mxu0 0
      %4768 = vmatprep.subr.bf16.mxu0 0
      %4769 = vmatpush1.bf16.msra.mxu0 0
      %4770 = vmatprep.subr.bf16.mxu0 0
      %4771 = vmatpush1.bf16.msra.mxu0 0
      %4772 = vmatprep.subr.bf16.mxu0 0
      %4773 = vmatpush1.bf16.msra.mxu0 0
      %4774 = vmatprep.subr.bf16.mxu0 0
      %4775 = vmatpush1.bf16.msra.mxu0 0
      %4776 = vmatprep.subr.bf16.mxu0 0
      %4777 = vmatpush1.bf16.msra.mxu0 0
      %4778 = vmatprep.subr.bf16.mxu0 0
      %4779 = vmatpush1.bf16.msra.mxu0 0
      %4780 = vmatprep.subr.bf16.mxu0 0
      %4781 = vmatpush1.bf16.msra.mxu0 0
      %4782 = vmatprep.subr.bf16.mxu0 0
      %4783 = vmatpush1.bf16.msra.mxu0 0
      %4784 = vmatprep.subr.bf16.mxu0 0
      %4785 = vmatpush1.bf16.msra.mxu0 0
      %4786 = vmatprep.subr.bf16.mxu0 0
      %4787 = vmatpush1.bf16.msra.mxu0 0
      %4788 = vmatprep.subr.bf16.mxu0 0
      %4789 = vmatpush1.bf16.msra.mxu0 0
      %4790 = vmatprep.subr.bf16.mxu0 0
      %4791 = vmatpush1.bf16.msra.mxu0 0
      %4792 = vmatprep.mubr.bf16.mxu0 0
      %4793 = vmatmul.mubr.bf16.gmra.mrb[0].mxu0 %v1352
      %v4794 = vpop.f32.mrb[0].mxu0
      %v4795 = vadd.f32 0.0, %v4794
      %v4796 = vpop.f32.mrb[0].mxu0
      %v4797 = vpop.f32.mrb[0].mxu0
      %v4798 = vpop.f32.mrb[0].mxu0
      %4799 = vdwg.mxu0
      %v4801 = vsel %vm433, %v3886, 0
      %4803 = vmatprep.subr.bf16.mxu0 0
      %4804 = vmatpush1.bf16.msra.mxu0 %v4801
      %4805 = vmatprep.subr.bf16.mxu0 0
      %4806 = vmatpush1.bf16.msra.mxu0 0
      %4807 = vmatprep.subr.bf16.mxu0 0
      %4808 = vmatpush1.bf16.msra.mxu0 0
      %4809 = vmatprep.subr.bf16.mxu0 0
      %4810 = vmatpush1.bf16.msra.mxu0 0
      %4811 = vmatprep.subr.bf16.mxu0 0
      %4812 = vmatpush1.bf16.msra.mxu0 0
      %4813 = vmatprep.subr.bf16.mxu0 0
      %4814 = vmatpush1.bf16.msra.mxu0 0
      %4815 = vmatprep.subr.bf16.mxu0 0
      %4816 = vmatpush1.bf16.msra.mxu0 0
      %4817 = vmatprep.subr.bf16.mxu0 0
      %4818 = vmatpush1.bf16.msra.mxu0 0
      %4819 = vmatprep.subr.bf16.mxu0 0
      %4820 = vmatpush1.bf16.msra.mxu0 0
      %4821 = vmatprep.subr.bf16.mxu0 0
      %4822 = vmatpush1.bf16.msra.mxu0 0
      %4823 = vmatprep.subr.bf16.mxu0 0
      %4824 = vmatpush1.bf16.msra.mxu0 0
      %4825 = vmatprep.subr.bf16.mxu0 0
      %4826 = vmatpush1.bf16.msra.mxu0 0
      %4827 = vmatprep.subr.bf16.mxu0 0
      %4828 = vmatpush1.bf16.msra.mxu0 0
      %4829 = vmatprep.subr.bf16.mxu0 0
      %4830 = vmatpush1.bf16.msra.mxu0 0
      %4831 = vmatprep.subr.bf16.mxu0 0
      %4832 = vmatpush1.bf16.msra.mxu0 0
      %4833 = vmatprep.subr.bf16.mxu0 0
      %4834 = vmatpush1.bf16.msra.mxu0 0
      %4835 = vmatprep.mubr.bf16.mxu0 0
      %4836 = vmatmul.mubr.bf16.gmra.mrb[0].mxu0 %v1398
      %v4837 = vpop.f32.mrb[0].mxu0
      %v4838 = vadd.f32 0.0, %v4837
      %v4839 = vpop.f32.mrb[0].mxu0
      %v4840 = vpop.f32.mrb[0].mxu0
      %v4841 = vpop.f32.mrb[0].mxu0
      %4842 = vdwg.mxu0
      %v4844 = vsel %vm433, %v3887, 0
      %4846 = vmatprep.subr.bf16.mxu0 0
      %4847 = vmatpush1.bf16.msra.mxu0 %v4844
      %4848 = vmatprep.subr.bf16.mxu0 0
      %4849 = vmatpush1.bf16.msra.mxu0 0
      %4850 = vmatprep.subr.bf16.mxu0 0
      %4851 = vmatpush1.bf16.msra.mxu0 0
      %4852 = vmatprep.subr.bf16.mxu0 0
      %4853 = vmatpush1.bf16.msra.mxu0 0
      %4854 = vmatprep.subr.bf16.mxu0 0
      %4855 = vmatpush1.bf16.msra.mxu0 0
      %4856 = vmatprep.subr.bf16.mxu0 0
      %4857 = vmatpush1.bf16.msra.mxu0 0
      %4858 = vmatprep.subr.bf16.mxu0 0
      %4859 = vmatpush1.bf16.msra.mxu0 0
      %4860 = vmatprep.subr.bf16.mxu0 0
      %4861 = vmatpush1.bf16.msra.mxu0 0
      %4862 = vmatprep.subr.bf16.mxu0 0
      %4863 = vmatpush1.bf16.msra.mxu0 0
      %4864 = vmatprep.subr.bf16.mxu0 0
      %4865 = vmatpush1.bf16.msra.mxu0 0
      %4866 = vmatprep.subr.bf16.mxu0 0
      %4867 = vmatpush1.bf16.msra.mxu0 0
      %4868 = vmatprep.subr.bf16.mxu0 0
      %4869 = vmatpush1.bf16.msra.mxu0 0
      %4870 = vmatprep.subr.bf16.mxu0 0
      %4871 = vmatpush1.bf16.msra.mxu0 0
      %4872 = vmatprep.subr.bf16.mxu0 0
      %4873 = vmatpush1.bf16.msra.mxu0 0
      %4874 = vmatprep.subr.bf16.mxu0 0
      %4875 = vmatpush1.bf16.msra.mxu0 0
      %4876 = vmatprep.subr.bf16.mxu0 0
      %4877 = vmatpush1.bf16.msra.mxu0 0
      %4878 = vmatprep.mubr.bf16.mxu0 0
      %4879 = vmatmul.mubr.bf16.gmra.mrb[0].mxu0 %v1444
      %v4880 = vpop.f32.mrb[0].mxu0
      %v4881 = vadd.f32 0.0, %v4880
      %v4882 = vpop.f32.mrb[0].mxu0
      %v4883 = vpop.f32.mrb[0].mxu0
      %v4884 = vpop.f32.mrb[0].mxu0
      %4885 = vdwg.mxu0
      %v4887 = vsel %vm433, %v3888, 0
      %4889 = vmatprep.subr.bf16.mxu0 0
      %4890 = vmatpush1.bf16.msra.mxu0 %v4887
      %4891 = vmatprep.subr.bf16.mxu0 0
      %4892 = vmatpush1.bf16.msra.mxu0 0
      %4893 = vmatprep.subr.bf16.mxu0 0
      %4894 = vmatpush1.bf16.msra.mxu0 0
      %4895 = vmatprep.subr.bf16.mxu0 0
      %4896 = vmatpush1.bf16.msra.mxu0 0
      %4897 = vmatprep.subr.bf16.mxu0 0
      %4898 = vmatpush1.bf16.msra.mxu0 0
      %4899 = vmatprep.subr.bf16.mxu0 0
      %4900 = vmatpush1.bf16.msra.mxu0 0
      %4901 = vmatprep.subr.bf16.mxu0 0
      %4902 = vmatpush1.bf16.msra.mxu0 0
      %4903 = vmatprep.subr.bf16.mxu0 0
      %4904 = vmatpush1.bf16.msra.mxu0 0
      %4905 = vmatprep.subr.bf16.mxu0 0
      %4906 = vmatpush1.bf16.msra.mxu0 0
      %4907 = vmatprep.subr.bf16.mxu0 0
      %4908 = vmatpush1.bf16.msra.mxu0 0
      %4909 = vmatprep.subr.bf16.mxu0 0
      %4910 = vmatpush1.bf16.msra.mxu0 0
      %4911 = vmatprep.subr.bf16.mxu0 0
      %4912 = vmatpush1.bf16.msra.mxu0 0
      %4913 = vmatprep.subr.bf16.mxu0 0
      %4914 = vmatpush1.bf16.msra.mxu0 0
      %4915 = vmatprep.subr.bf16.mxu0 0
      %4916 = vmatpush1.bf16.msra.mxu0 0
      %4917 = vmatprep.subr.bf16.mxu0 0
      %4918 = vmatpush1.bf16.msra.mxu0 0
      %4919 = vmatprep.subr.bf16.mxu0 0
      %4920 = vmatpush1.bf16.msra.mxu0 0
      %4921 = vmatprep.mubr.bf16.mxu0 0
      %4922 = vmatmul.mubr.bf16.gmra.mrb[0].mxu0 %v1490
      %v4923 = vpop.f32.mrb[0].mxu0
      %v4924 = vadd.f32 0.0, %v4923
      %v4925 = vpop.f32.mrb[0].mxu0
      %v4926 = vpop.f32.mrb[0].mxu0
      %v4927 = vpop.f32.mrb[0].mxu0
      %4928 = vdwg.mxu0
      %v4930 = vsel %vm433, %v3889, 0
      %4932 = vmatprep.subr.bf16.mxu0 0
      %4933 = vmatpush1.bf16.msra.mxu0 %v4930
      %4934 = vmatprep.subr.bf16.mxu0 0
      %4935 = vmatpush1.bf16.msra.mxu0 0
      %4936 = vmatprep.subr.bf16.mxu0 0
      %4937 = vmatpush1.bf16.msra.mxu0 0
      %4938 = vmatprep.subr.bf16.mxu0 0
      %4939 = vmatpush1.bf16.msra.mxu0 0
      %4940 = vmatprep.subr.bf16.mxu0 0
      %4941 = vmatpush1.bf16.msra.mxu0 0
      %4942 = vmatprep.subr.bf16.mxu0 0
      %4943 = vmatpush1.bf16.msra.mxu0 0
      %4944 = vmatprep.subr.bf16.mxu0 0
      %4945 = vmatpush1.bf16.msra.mxu0 0
      %4946 = vmatprep.subr.bf16.mxu0 0
      %4947 = vmatpush1.bf16.msra.mxu0 0
      %4948 = vmatprep.subr.bf16.mxu0 0
      %4949 = vmatpush1.bf16.msra.mxu0 0
      %4950 = vmatprep.subr.bf16.mxu0 0
      %4951 = vmatpush1.bf16.msra.mxu0 0
      %4952 = vmatprep.subr.bf16.mxu0 0
      %4953 = vmatpush1.bf16.msra.mxu0 0
      %4954 = vmatprep.subr.bf16.mxu0 0
      %4955 = vmatpush1.bf16.msra.mxu0 0
      %4956 = vmatprep.subr.bf16.mxu0 0
      %4957 = vmatpush1.bf16.msra.mxu0 0
      %4958 = vmatprep.subr.bf16.mxu0 0
      %4959 = vmatpush1.bf16.msra.mxu0 0
      %4960 = vmatprep.subr.bf16.mxu0 0
      %4961 = vmatpush1.bf16.msra.mxu0 0
      %4962 = vmatprep.subr.bf16.mxu0 0
      %4963 = vmatpush1.bf16.msra.mxu0 0
      %4964 = vmatprep.mubr.bf16.mxu0 0
      %4965 = vmatmul.mubr.bf16.gmra.mrb[0].mxu0 %v1536
      %v4966 = vpop.f32.mrb[0].mxu0
      %v4967 = vadd.f32 0.0, %v4966
      %v4968 = vpop.f32.mrb[0].mxu0
      %v4969 = vpop.f32.mrb[0].mxu0
      %v4970 = vpop.f32.mrb[0].mxu0
      %4971 = vdwg.mxu0
      %v4973 = vsel %vm433, %v3890, 0
      %4975 = vmatprep.subr.bf16.mxu0 0
      %4976 = vmatpush1.bf16.msra.mxu0 %v4973
      %4977 = vmatprep.subr.bf16.mxu0 0
      %4978 = vmatpush1.bf16.msra.mxu0 0
      %4979 = vmatprep.subr.bf16.mxu0 0
      %4980 = vmatpush1.bf16.msra.mxu0 0
      %4981 = vmatprep.subr.bf16.mxu0 0
      %4982 = vmatpush1.bf16.msra.mxu0 0
      %4983 = vmatprep.subr.bf16.mxu0 0
      %4984 = vmatpush1.bf16.msra.mxu0 0
      %4985 = vmatprep.subr.bf16.mxu0 0
      %4986 = vmatpush1.bf16.msra.mxu0 0
      %4987 = vmatprep.subr.bf16.mxu0 0
      %4988 = vmatpush1.bf16.msra.mxu0 0
      %4989 = vmatprep.subr.bf16.mxu0 0
      %4990 = vmatpush1.bf16.msra.mxu0 0
      %4991 = vmatprep.subr.bf16.mxu0 0
      %4992 = vmatpush1.bf16.msra.mxu0 0
      %4993 = vmatprep.subr.bf16.mxu0 0
      %4994 = vmatpush1.bf16.msra.mxu0 0
      %4995 = vmatprep.subr.bf16.mxu0 0
      %4996 = vmatpush1.bf16.msra.mxu0 0
      %4997 = vmatprep.subr.bf16.mxu0 0
      %4998 = vmatpush1.bf16.msra.mxu0 0
      %4999 = vmatprep.subr.bf16.mxu0 0
      %5000 = vmatpush1.bf16.msra.mxu0 0
      %5001 = vmatprep.subr.bf16.mxu0 0
      %5002 = vmatpush1.bf16.msra.mxu0 0
      %5003 = vmatprep.subr.bf16.mxu0 0
      %5004 = vmatpush1.bf16.msra.mxu0 0
      %5005 = vmatprep.subr.bf16.mxu0 0
      %5006 = vmatpush1.bf16.msra.mxu0 0
      %5007 = vmatprep.mubr.bf16.mxu0 0
      %5008 = vmatmul.mubr.bf16.gmra.mrb[0].mxu0 %v1582
      %v5009 = vpop.f32.mrb[0].mxu0
      %v5010 = vadd.f32 0.0, %v5009
      %v5011 = vpop.f32.mrb[0].mxu0
      %v5012 = vpop.f32.mrb[0].mxu0
      %v5013 = vpop.f32.mrb[0].mxu0
      %5014 = vdwg.mxu0
      %v5016 = vsel %vm433, %v3891, 0
      %5018 = vmatprep.subr.bf16.mxu0 0
      %5019 = vmatpush1.bf16.msra.mxu0 %v5016
      %5020 = vmatprep.subr.bf16.mxu0 0
      %5021 = vmatpush1.bf16.msra.mxu0 0
      %5022 = vmatprep.subr.bf16.mxu0 0
      %5023 = vmatpush1.bf16.msra.mxu0 0
      %5024 = vmatprep.subr.bf16.mxu0 0
      %5025 = vmatpush1.bf16.msra.mxu0 0
      %5026 = vmatprep.subr.bf16.mxu0 0
      %5027 = vmatpush1.bf16.msra.mxu0 0
      %5028 = vmatprep.subr.bf16.mxu0 0
      %5029 = vmatpush1.bf16.msra.mxu0 0
      %5030 = vmatprep.subr.bf16.mxu0 0
      %5031 = vmatpush1.bf16.msra.mxu0 0
      %5032 = vmatprep.subr.bf16.mxu0 0
      %5033 = vmatpush1.bf16.msra.mxu0 0
      %5034 = vmatprep.subr.bf16.mxu0 0
      %5035 = vmatpush1.bf16.msra.mxu0 0
      %5036 = vmatprep.subr.bf16.mxu0 0
      %5037 = vmatpush1.bf16.msra.mxu0 0
      %5038 = vmatprep.subr.bf16.mxu0 0
      %5039 = vmatpush1.bf16.msra.mxu0 0
      %5040 = vmatprep.subr.bf16.mxu0 0
      %5041 = vmatpush1.bf16.msra.mxu0 0
      %5042 = vmatprep.subr.bf16.mxu0 0
      %5043 = vmatpush1.bf16.msra.mxu0 0
      %5044 = vmatprep.subr.bf16.mxu0 0
      %5045 = vmatpush1.bf16.msra.mxu0 0
      %5046 = vmatprep.subr.bf16.mxu0 0
      %5047 = vmatpush1.bf16.msra.mxu0 0
      %5048 = vmatprep.subr.bf16.mxu0 0
      %5049 = vmatpush1.bf16.msra.mxu0 0
      %5050 = vmatprep.mubr.bf16.mxu0 0
      %5051 = vmatmul.mubr.bf16.gmra.mrb[0].mxu0 %v1628
      %v5052 = vpop.f32.mrb[0].mxu0
      %v5053 = vadd.f32 0.0, %v5052
      %v5054 = vpop.f32.mrb[0].mxu0
      %v5055 = vpop.f32.mrb[0].mxu0
      %v5056 = vpop.f32.mrb[0].mxu0
      %5057 = vdwg.mxu0
      %v5059 = vsel %vm433, %v3892, 0
      %5061 = vmatprep.subr.bf16.mxu0 0
      %5062 = vmatpush1.bf16.msra.mxu0 %v5059
      %5063 = vmatprep.subr.bf16.mxu0 0
      %5064 = vmatpush1.bf16.msra.mxu0 0
      %5065 = vmatprep.subr.bf16.mxu0 0
      %5066 = vmatpush1.bf16.msra.mxu0 0
      %5067 = vmatprep.subr.bf16.mxu0 0
      %5068 = vmatpush1.bf16.msra.mxu0 0
      %5069 = vmatprep.subr.bf16.mxu0 0
      %5070 = vmatpush1.bf16.msra.mxu0 0
      %5071 = vmatprep.subr.bf16.mxu0 0
      %5072 = vmatpush1.bf16.msra.mxu0 0
      %5073 = vmatprep.subr.bf16.mxu0 0
      %5074 = vmatpush1.bf16.msra.mxu0 0
      %5075 = vmatprep.subr.bf16.mxu0 0
      %5076 = vmatpush1.bf16.msra.mxu0 0
      %5077 = vmatprep.subr.bf16.mxu0 0
      %5078 = vmatpush1.bf16.msra.mxu0 0
      %5079 = vmatprep.subr.bf16.mxu0 0
      %5080 = vmatpush1.bf16.msra.mxu0 0
      %5081 = vmatprep.subr.bf16.mxu0 0
      %5082 = vmatpush1.bf16.msra.mxu0 0
      %5083 = vmatprep.subr.bf16.mxu0 0
      %5084 = vmatpush1.bf16.msra.mxu0 0
      %5085 = vmatprep.subr.bf16.mxu0 0
      %5086 = vmatpush1.bf16.msra.mxu0 0
      %5087 = vmatprep.subr.bf16.mxu0 0
      %5088 = vmatpush1.bf16.msra.mxu0 0
      %5089 = vmatprep.subr.bf16.mxu0 0
      %5090 = vmatpush1.bf16.msra.mxu0 0
      %5091 = vmatprep.subr.bf16.mxu0 0
      %5092 = vmatpush1.bf16.msra.mxu0 0
      %5093 = vmatprep.mubr.bf16.mxu0 0
      %5094 = vmatmul.mubr.bf16.gmra.mrb[0].mxu0 %v1674
      %v5095 = vpop.f32.mrb[0].mxu0
      %v5096 = vadd.f32 0.0, %v5095
      %v5097 = vpop.f32.mrb[0].mxu0
      %v5098 = vpop.f32.mrb[0].mxu0
      %v5099 = vpop.f32.mrb[0].mxu0
      %5100 = vdwg.mxu0
      %v5102 = vsel %vm433, %v3893, 0
      %5104 = vmatprep.subr.bf16.mxu0 0
      %5105 = vmatpush1.bf16.msra.mxu0 %v5102
      %5106 = vmatprep.subr.bf16.mxu0 0
      %5107 = vmatpush1.bf16.msra.mxu0 0
      %5108 = vmatprep.subr.bf16.mxu0 0
      %5109 = vmatpush1.bf16.msra.mxu0 0
      %5110 = vmatprep.subr.bf16.mxu0 0
      %5111 = vmatpush1.bf16.msra.mxu0 0
      %5112 = vmatprep.subr.bf16.mxu0 0
      %5113 = vmatpush1.bf16.msra.mxu0 0
      %5114 = vmatprep.subr.bf16.mxu0 0
      %5115 = vmatpush1.bf16.msra.mxu0 0
      %5116 = vmatprep.subr.bf16.mxu0 0
      %5117 = vmatpush1.bf16.msra.mxu0 0
      %5118 = vmatprep.subr.bf16.mxu0 0
      %5119 = vmatpush1.bf16.msra.mxu0 0
      %5120 = vmatprep.subr.bf16.mxu0 0
      %5121 = vmatpush1.bf16.msra.mxu0 0
      %5122 = vmatprep.subr.bf16.mxu0 0
      %5123 = vmatpush1.bf16.msra.mxu0 0
      %5124 = vmatprep.subr.bf16.mxu0 0
      %5125 = vmatpush1.bf16.msra.mxu0 0
      %5126 = vmatprep.subr.bf16.mxu0 0
      %5127 = vmatpush1.bf16.msra.mxu0 0
      %5128 = vmatprep.subr.bf16.mxu0 0
      %5129 = vmatpush1.bf16.msra.mxu0 0
      %5130 = vmatprep.subr.bf16.mxu0 0
      %5131 = vmatpush1.bf16.msra.mxu0 0
      %5132 = vmatprep.subr.bf16.mxu0 0
      %5133 = vmatpush1.bf16.msra.mxu0 0
      %5134 = vmatprep.subr.bf16.mxu0 0
      %5135 = vmatpush1.bf16.msra.mxu0 0
      %5136 = vmatprep.mubr.bf16.mxu0 0
      %5137 = vmatmul.mubr.bf16.gmra.mrb[0].mxu0 %v1720
      %v5138 = vpop.f32.mrb[0].mxu0
      %v5139 = vadd.f32 0.0, %v5138
      %v5140 = vpop.f32.mrb[0].mxu0
      %v5141 = vpop.f32.mrb[0].mxu0
      %v5142 = vpop.f32.mrb[0].mxu0
      %5143 = vdwg.mxu0
      %v5145 = vsel %vm433, %v3894, 0
      %5147 = vmatprep.subr.bf16.mxu0 0
      %5148 = vmatpush1.bf16.msra.mxu0 %v5145
      %5149 = vmatprep.subr.bf16.mxu0 0
      %5150 = vmatpush1.bf16.msra.mxu0 0
      %5151 = vmatprep.subr.bf16.mxu0 0
      %5152 = vmatpush1.bf16.msra.mxu0 0
      %5153 = vmatprep.subr.bf16.mxu0 0
      %5154 = vmatpush1.bf16.msra.mxu0 0
      %5155 = vmatprep.subr.bf16.mxu0 0
      %5156 = vmatpush1.bf16.msra.mxu0 0
      %5157 = vmatprep.subr.bf16.mxu0 0
      %5158 = vmatpush1.bf16.msra.mxu0 0
      %5159 = vmatprep.subr.bf16.mxu0 0
      %5160 = vmatpush1.bf16.msra.mxu0 0
      %5161 = vmatprep.subr.bf16.mxu0 0
      %5162 = vmatpush1.bf16.msra.mxu0 0
      %5163 = vmatprep.subr.bf16.mxu0 0
      %5164 = vmatpush1.bf16.msra.mxu0 0
      %5165 = vmatprep.subr.bf16.mxu0 0
      %5166 = vmatpush1.bf16.msra.mxu0 0
      %5167 = vmatprep.subr.bf16.mxu0 0
      %5168 = vmatpush1.bf16.msra.mxu0 0
      %5169 = vmatprep.subr.bf16.mxu0 0
      %5170 = vmatpush1.bf16.msra.mxu0 0
      %5171 = vmatprep.subr.bf16.mxu0 0
      %5172 = vmatpush1.bf16.msra.mxu0 0
      %5173 = vmatprep.subr.bf16.mxu0 0
      %5174 = vmatpush1.bf16.msra.mxu0 0
      %5175 = vmatprep.subr.bf16.mxu0 0
      %5176 = vmatpush1.bf16.msra.mxu0 0
      %5177 = vmatprep.subr.bf16.mxu0 0
      %5178 = vmatpush1.bf16.msra.mxu0 0
      %5179 = vmatprep.mubr.bf16.mxu0 0
      %5180 = vmatmul.mubr.bf16.gmra.mrb[0].mxu0 %v1766
      %v5181 = vpop.f32.mrb[0].mxu0
      %v5182 = vadd.f32 0.0, %v5181
      %v5183 = vpop.f32.mrb[0].mxu0
      %v5184 = vpop.f32.mrb[0].mxu0
      %v5185 = vpop.f32.mrb[0].mxu0
      %5186 = vdwg.mxu0
      %v5188 = vsel %vm433, %v3895, 0
      %5190 = vmatprep.subr.bf16.mxu0 0
      %5191 = vmatpush1.bf16.msra.mxu0 %v5188
      %5192 = vmatprep.subr.bf16.mxu0 0
      %5193 = vmatpush1.bf16.msra.mxu0 0
      %5194 = vmatprep.subr.bf16.mxu0 0
      %5195 = vmatpush1.bf16.msra.mxu0 0
      %5196 = vmatprep.subr.bf16.mxu0 0
      %5197 = vmatpush1.bf16.msra.mxu0 0
      %5198 = vmatprep.subr.bf16.mxu0 0
      %5199 = vmatpush1.bf16.msra.mxu0 0
      %5200 = vmatprep.subr.bf16.mxu0 0
      %5201 = vmatpush1.bf16.msra.mxu0 0
      %5202 = vmatprep.subr.bf16.mxu0 0
      %5203 = vmatpush1.bf16.msra.mxu0 0
      %5204 = vmatprep.subr.bf16.mxu0 0
      %5205 = vmatpush1.bf16.msra.mxu0 0
      %5206 = vmatprep.subr.bf16.mxu0 0
      %5207 = vmatpush1.bf16.msra.mxu0 0
      %5208 = vmatprep.subr.bf16.mxu0 0
      %5209 = vmatpush1.bf16.msra.mxu0 0
      %5210 = vmatprep.subr.bf16.mxu0 0
      %5211 = vmatpush1.bf16.msra.mxu0 0
      %5212 = vmatprep.subr.bf16.mxu0 0
      %5213 = vmatpush1.bf16.msra.mxu0 0
      %5214 = vmatprep.subr.bf16.mxu0 0
      %5215 = vmatpush1.bf16.msra.mxu0 0
      %5216 = vmatprep.subr.bf16.mxu0 0
      %5217 = vmatpush1.bf16.msra.mxu0 0
      %5218 = vmatprep.subr.bf16.mxu0 0
      %5219 = vmatpush1.bf16.msra.mxu0 0
      %5220 = vmatprep.subr.bf16.mxu0 0
      %5221 = vmatpush1.bf16.msra.mxu0 0
      %5222 = vmatprep.mubr.bf16.mxu0 0
      %5223 = vmatmul.mubr.bf16.gmra.mrb[0].mxu0 %v1812
      %v5224 = vpop.f32.mrb[0].mxu0
      %v5225 = vadd.f32 0.0, %v5224
      %v5226 = vpop.f32.mrb[0].mxu0
      %v5227 = vpop.f32.mrb[0].mxu0
      %v5228 = vpop.f32.mrb[0].mxu0
      %5229 = vdwg.mxu0
      %v5231 = vsel %vm433, %v3896, 0
      %5233 = vmatprep.subr.bf16.mxu0 0
      %5234 = vmatpush1.bf16.msra.mxu0 %v5231
      %5235 = vmatprep.subr.bf16.mxu0 0
      %5236 = vmatpush1.bf16.msra.mxu0 0
      %5237 = vmatprep.subr.bf16.mxu0 0
      %5238 = vmatpush1.bf16.msra.mxu0 0
      %5239 = vmatprep.subr.bf16.mxu0 0
      %5240 = vmatpush1.bf16.msra.mxu0 0
      %5241 = vmatprep.subr.bf16.mxu0 0
      %5242 = vmatpush1.bf16.msra.mxu0 0
      %5243 = vmatprep.subr.bf16.mxu0 0
      %5244 = vmatpush1.bf16.msra.mxu0 0
      %5245 = vmatprep.subr.bf16.mxu0 0
      %5246 = vmatpush1.bf16.msra.mxu0 0
      %5247 = vmatprep.subr.bf16.mxu0 0
      %5248 = vmatpush1.bf16.msra.mxu0 0
      %5249 = vmatprep.subr.bf16.mxu0 0
      %5250 = vmatpush1.bf16.msra.mxu0 0
      %5251 = vmatprep.subr.bf16.mxu0 0
      %5252 = vmatpush1.bf16.msra.mxu0 0
      %5253 = vmatprep.subr.bf16.mxu0 0
      %5254 = vmatpush1.bf16.msra.mxu0 0
      %5255 = vmatprep.subr.bf16.mxu0 0
      %5256 = vmatpush1.bf16.msra.mxu0 0
      %5257 = vmatprep.subr.bf16.mxu0 0
      %5258 = vmatpush1.bf16.msra.mxu0 0
      %5259 = vmatprep.subr.bf16.mxu0 0
      %5260 = vmatpush1.bf16.msra.mxu0 0
      %5261 = vmatprep.subr.bf16.mxu0 0
      %5262 = vmatpush1.bf16.msra.mxu0 0
      %5263 = vmatprep.subr.bf16.mxu0 0
      %5264 = vmatpush1.bf16.msra.mxu0 0
      %5265 = vmatprep.mubr.bf16.mxu0 0
      %5266 = vmatmul.mubr.bf16.gmra.mrb[0].mxu0 %v1858
      %v5267 = vpop.f32.mrb[0].mxu0
      %v5268 = vadd.f32 0.0, %v5267
      %v5269 = vpop.f32.mrb[0].mxu0
      %v5270 = vpop.f32.mrb[0].mxu0
      %v5271 = vpop.f32.mrb[0].mxu0
      %5272 = vdwg.mxu0
      %v5273 = vpack.c.bf16 %v3978, %v3935
      %v5274 = vpack.c.bf16 %v4064, %v4021
      %v5275 = vpack.c.bf16 %v4150, %v4107
      %v5276 = vpack.c.bf16 %v4236, %v4193
      %v5277 = vpack.c.bf16 %v4322, %v4279
      %v5278 = vpack.c.bf16 %v4408, %v4365
      %v5279 = vpack.c.bf16 %v4494, %v4451
      %v5280 = vpack.c.bf16 %v4580, %v4537
      %v5281 = vpack.c.bf16 %v4666, %v4623
      %v5282 = vpack.c.bf16 %v4752, %v4709
      %v5283 = vpack.c.bf16 %v4838, %v4795
      %v5284 = vpack.c.bf16 %v4924, %v4881
      %v5285 = vpack.c.bf16 %v5010, %v4967
      %v5286 = vpack.c.bf16 %v5096, %v5053
      %v5287 = vpack.c.bf16 %v5182, %v5139
      %v5288 = vpack.c.bf16 %v5268, %v5225
      %v5289 = vld [vmem:[%s6] sm:$0xf]
      %v5290 = vld [vmem:[%s6 + $0x4] sm:$0xf]
      %s5291 = sld [smem:[#allocation2]]
      %v5292 = vstv %s5291
      %v5295 = vunpack.c.l.b16 %v5289
      %v5296 = vunpack.c.l.b16 %v5290
      %v5297 = vpack.c.b16 %v5296, %v5295
      %v5300 = vsel %vm1934, %v5273, 0
      %v5303 = vsel %vm1934, %v5274, 0
      %v5306 = vsel %vm1934, %v5275, 0
      %v5309 = vsel %vm1934, %v5276, 0
      %v5312 = vsel %vm1934, %v5277, 0
      %v5315 = vsel %vm1934, %v5278, 0
      %v5318 = vsel %vm1934, %v5279, 0
      %v5321 = vsel %vm1934, %v5280, 0
      %v5324 = vsel %vm1934, %v5281, 0
      %v5327 = vsel %vm1934, %v5282, 0
      %v5330 = vsel %vm1934, %v5283, 0
      %v5333 = vsel %vm1934, %v5284, 0
      %v5336 = vsel %vm1934, %v5285, 0
      %v5339 = vsel %vm1934, %v5286, 0
      %v5342 = vsel %vm1934, %v5287, 0
      %v5345 = vsel %vm1934, %v5288, 0
      %5347 = vmatprep.subr.bf16.mxu0 0
      %5348 = vmatpush1.bf16.msra.mxu0 %v5297
      %5349 = vmatprep.subr.bf16.mxu0 0
      %5350 = vmatpush1.bf16.msra.mxu0 0
      %5351 = vmatprep.subr.bf16.mxu0 0
      %5352 = vmatpush1.bf16.msra.mxu0 0
      %5353 = vmatprep.subr.bf16.mxu0 0
      %5354 = vmatpush1.bf16.msra.mxu0 0
      %5355 = vmatprep.subr.bf16.mxu0 0
      %5356 = vmatpush1.bf16.msra.mxu0 0
      %5357 = vmatprep.subr.bf16.mxu0 0
      %5358 = vmatpush1.bf16.msra.mxu0 0
      %5359 = vmatprep.subr.bf16.mxu0 0
      %5360 = vmatpush1.bf16.msra.mxu0 0
      %5361 = vmatprep.subr.bf16.mxu0 0
      %5362 = vmatpush1.bf16.msra.mxu0 0
      %5363 = vmatprep.subr.bf16.mxu0 0
      %5364 = vmatpush1.bf16.msra.mxu0 0
      %5365 = vmatprep.subr.bf16.mxu0 0
      %5366 = vmatpush1.bf16.msra.mxu0 0
      %5367 = vmatprep.subr.bf16.mxu0 0
      %5368 = vmatpush1.bf16.msra.mxu0 0
      %5369 = vmatprep.subr.bf16.mxu0 0
      %5370 = vmatpush1.bf16.msra.mxu0 0
      %5371 = vmatprep.subr.bf16.mxu0 0
      %5372 = vmatpush1.bf16.msra.mxu0 0
      %5373 = vmatprep.subr.bf16.mxu0 0
      %5374 = vmatpush1.bf16.msra.mxu0 0
      %5375 = vmatprep.subr.bf16.mxu0 0
      %5376 = vmatpush1.bf16.msra.mxu0 0
      %5377 = vmatprep.subr.bf16.mxu0 0
      %5378 = vmatpush1.bf16.msra.mxu0 0
      %5379 = vmatprep.mubr.bf16.mxu0 0
      %5380 = vmatmul.mubr.bf16.gmra.mrb[0].mxu0 %v5300
      %v5381 = vpop.f32.mrb[0].mxu0
      %v5382 = vadd.f32 %v5292, %v5381
      %v5383 = vpop.f32.mrb[0].mxu0
      %v5384 = vpop.f32.mrb[0].mxu0
      %v5385 = vadd.f32 %v5292, %v5384
      %v5386 = vpop.f32.mrb[0].mxu0
      %5387 = vmatprep.mubr.bf16.mxu0 0
      %5388 = vmatmul.mubr.bf16.gmra.mrb[0].mxu0 %v5303
      %v5389 = vpop.f32.mrb[0].mxu0
      %v5390 = vadd.f32 %v5292, %v5389
      %v5391 = vpop.f32.mrb[0].mxu0
      %v5392 = vpop.f32.mrb[0].mxu0
      %v5393 = vadd.f32 %v5292, %v5392
      %v5394 = vpop.f32.mrb[0].mxu0
      %5395 = vmatprep.mubr.bf16.mxu0 0
      %5396 = vmatmul.mubr.bf16.gmra.mrb[0].mxu0 %v5306
      %v5397 = vpop.f32.mrb[0].mxu0
      %v5398 = vadd.f32 %v5292, %v5397
      %v5399 = vpop.f32.mrb[0].mxu0
      %v5400 = vpop.f32.mrb[0].mxu0
      %v5401 = vadd.f32 %v5292, %v5400
      %v5402 = vpop.f32.mrb[0].mxu0
      %5403 = vmatprep.mubr.bf16.mxu0 0
      %5404 = vmatmul.mubr.bf16.gmra.mrb[0].mxu0 %v5309
      %v5405 = vpop.f32.mrb[0].mxu0
      %v5406 = vadd.f32 %v5292, %v5405
      %v5407 = vpop.f32.mrb[0].mxu0
      %v5408 = vpop.f32.mrb[0].mxu0
      %v5409 = vadd.f32 %v5292, %v5408
      %v5410 = vpop.f32.mrb[0].mxu0
      %5411 = vmatprep.mubr.bf16.mxu0 0
      %5412 = vmatmul.mubr.bf16.gmra.mrb[0].mxu0 %v5312
      %v5413 = vpop.f32.mrb[0].mxu0
      %v5414 = vadd.f32 %v5292, %v5413
      %v5415 = vpop.f32.mrb[0].mxu0
      %v5416 = vpop.f32.mrb[0].mxu0
      %v5417 = vadd.f32 %v5292, %v5416
      %v5418 = vpop.f32.mrb[0].mxu0
      %5419 = vmatprep.mubr.bf16.mxu0 0
      %5420 = vmatmul.mubr.bf16.gmra.mrb[0].mxu0 %v5315
      %v5421 = vpop.f32.mrb[0].mxu0
      %v5422 = vadd.f32 %v5292, %v5421
      %v5423 = vpop.f32.mrb[0].mxu0
      %v5424 = vpop.f32.mrb[0].mxu0
      %v5425 = vadd.f32 %v5292, %v5424
      %v5426 = vpop.f32.mrb[0].mxu0
      %5427 = vmatprep.mubr.bf16.mxu0 0
      %5428 = vmatmul.mubr.bf16.gmra.mrb[0].mxu0 %v5318
      %v5429 = vpop.f32.mrb[0].mxu0
      %v5430 = vadd.f32 %v5292, %v5429
      %v5431 = vpop.f32.mrb[0].mxu0
      %v5432 = vpop.f32.mrb[0].mxu0
      %v5433 = vadd.f32 %v5292, %v5432
      %v5434 = vpop.f32.mrb[0].mxu0
      %5435 = vmatprep.mubr.bf16.mxu0 0
      %5436 = vmatmul.mubr.bf16.gmra.mrb[0].mxu0 %v5321
      %v5437 = vpop.f32.mrb[0].mxu0
      %v5438 = vadd.f32 %v5292, %v5437
      %v5439 = vpop.f32.mrb[0].mxu0
      %v5440 = vpop.f32.mrb[0].mxu0
      %v5441 = vadd.f32 %v5292, %v5440
      %v5442 = vpop.f32.mrb[0].mxu0
      %5443 = vmatprep.mubr.bf16.mxu0 0
      %5444 = vmatmul.mubr.bf16.gmra.mrb[0].mxu0 %v5324
      %v5445 = vpop.f32.mrb[0].mxu0
      %v5446 = vadd.f32 %v5292, %v5445
      %v5447 = vpop.f32.mrb[0].mxu0
      %v5448 = vpop.f32.mrb[0].mxu0
      %v5449 = vadd.f32 %v5292, %v5448
      %v5450 = vpop.f32.mrb[0].mxu0
      %5451 = vmatprep.mubr.bf16.mxu0 0
      %5452 = vmatmul.mubr.bf16.gmra.mrb[0].mxu0 %v5327
      %v5453 = vpop.f32.mrb[0].mxu0
      %v5454 = vadd.f32 %v5292, %v5453
      %v5455 = vpop.f32.mrb[0].mxu0
      %v5456 = vpop.f32.mrb[0].mxu0
      %v5457 = vadd.f32 %v5292, %v5456
      %v5458 = vpop.f32.mrb[0].mxu0
      %5459 = vmatprep.mubr.bf16.mxu0 0
      %5460 = vmatmul.mubr.bf16.gmra.mrb[0].mxu0 %v5330
      %v5461 = vpop.f32.mrb[0].mxu0
      %v5462 = vadd.f32 %v5292, %v5461
      %v5463 = vpop.f32.mrb[0].mxu0
      %v5464 = vpop.f32.mrb[0].mxu0
      %v5465 = vadd.f32 %v5292, %v5464
      %v5466 = vpop.f32.mrb[0].mxu0
      %5467 = vmatprep.mubr.bf16.mxu0 0
      %5468 = vmatmul.mubr.bf16.gmra.mrb[0].mxu0 %v5333
      %v5469 = vpop.f32.mrb[0].mxu0
      %v5470 = vadd.f32 %v5292, %v5469
      %v5471 = vpop.f32.mrb[0].mxu0
      %v5472 = vpop.f32.mrb[0].mxu0
      %v5473 = vadd.f32 %v5292, %v5472
      %v5474 = vpop.f32.mrb[0].mxu0
      %5475 = vmatprep.mubr.bf16.mxu0 0
      %5476 = vmatmul.mubr.bf16.gmra.mrb[0].mxu0 %v5336
      %v5477 = vpop.f32.mrb[0].mxu0
      %v5478 = vadd.f32 %v5292, %v5477
      %v5479 = vpop.f32.mrb[0].mxu0
      %v5480 = vpop.f32.mrb[0].mxu0
      %v5481 = vadd.f32 %v5292, %v5480
      %v5482 = vpop.f32.mrb[0].mxu0
      %5483 = vmatprep.mubr.bf16.mxu0 0
      %5484 = vmatmul.mubr.bf16.gmra.mrb[0].mxu0 %v5339
      %v5485 = vpop.f32.mrb[0].mxu0
      %v5486 = vadd.f32 %v5292, %v5485
      %v5487 = vpop.f32.mrb[0].mxu0
      %v5488 = vpop.f32.mrb[0].mxu0
      %v5489 = vadd.f32 %v5292, %v5488
      %v5490 = vpop.f32.mrb[0].mxu0
      %5491 = vmatprep.mubr.bf16.mxu0 0
      %5492 = vmatmul.mubr.bf16.gmra.mrb[0].mxu0 %v5342
      %v5493 = vpop.f32.mrb[0].mxu0
      %v5494 = vadd.f32 %v5292, %v5493
      %v5495 = vpop.f32.mrb[0].mxu0
      %v5496 = vpop.f32.mrb[0].mxu0
      %v5497 = vadd.f32 %v5292, %v5496
      %v5498 = vpop.f32.mrb[0].mxu0
      %5499 = vmatprep.mubr.bf16.mxu0 0
      %5500 = vmatmul.mubr.bf16.gmra.mrb[0].mxu0 %v5345
      %v5501 = vpop.f32.mrb[0].mxu0
      %v5502 = vadd.f32 %v5292, %v5501
      %v5503 = vpop.f32.mrb[0].mxu0
      %v5504 = vpop.f32.mrb[0].mxu0
      %v5505 = vadd.f32 %v5292, %v5504
      %v5506 = vpop.f32.mrb[0].mxu0
      %5507 = vdwg.mxu0
      %v5508 = vtanh.pop %v5382
      %v5509 = vtanh.pop %v5385
      %v5510 = vtanh.pop %v5390
      %v5511 = vtanh.pop %v5393
      %v5512 = vtanh.pop %v5398
      %v5513 = vtanh.pop %v5401
      %v5514 = vtanh.pop %v5406
      %v5515 = vtanh.pop %v5409
      %v5516 = vtanh.pop %v5414
      %v5517 = vtanh.pop %v5417
      %v5518 = vtanh.pop %v5422
      %v5519 = vtanh.pop %v5425
      %v5520 = vtanh.pop %v5430
      %v5521 = vtanh.pop %v5433
      %v5522 = vtanh.pop %v5438
      %v5523 = vtanh.pop %v5441
      %v5524 = vtanh.pop %v5446
      %v5525 = vtanh.pop %v5449
      %v5526 = vtanh.pop %v5454
      %v5527 = vtanh.pop %v5457
      %v5528 = vtanh.pop %v5462
      %v5529 = vtanh.pop %v5465
      %v5530 = vtanh.pop %v5470
      %v5531 = vtanh.pop %v5473
      %v5532 = vtanh.pop %v5478
      %v5533 = vtanh.pop %v5481
      %v5534 = vtanh.pop %v5486
      %v5535 = vtanh.pop %v5489
      %v5536 = vtanh.pop %v5494
      %v5537 = vtanh.pop %v5497
      %v5538 = vtanh.pop %v5502
      %v5539 = vtanh.pop %v5505
      %v5540 = vld [vmem:[%s7] sm:$0xff]
      %v5541 = vld [vmem:[%s7 + $0x8] sm:$0xff]
      %v5542 = vld [vmem:[%s7 + $0x10] sm:$0xff]
      %v5543 = vld [vmem:[%s7 + $0x18] sm:$0xff]
      %v5544 = vpack.c.bf16 %v5509, %v5508
      %v5545 = vpack.c.bf16 %v5511, %v5510
      %v5546 = vpack.c.bf16 %v5513, %v5512
      %v5547 = vpack.c.bf16 %v5515, %v5514
      %v5548 = vpack.c.bf16 %v5517, %v5516
      %v5549 = vpack.c.bf16 %v5519, %v5518
      %v5550 = vpack.c.bf16 %v5521, %v5520
      %v5551 = vpack.c.bf16 %v5523, %v5522
      %v5552 = vpack.c.bf16 %v5525, %v5524
      %v5553 = vpack.c.bf16 %v5527, %v5526
      %v5554 = vpack.c.bf16 %v5529, %v5528
      %v5555 = vpack.c.bf16 %v5531, %v5530
      %v5556 = vpack.c.bf16 %v5533, %v5532
      %v5557 = vpack.c.bf16 %v5535, %v5534
      %v5558 = vpack.c.bf16 %v5537, %v5536
      %v5559 = vpack.c.bf16 %v5539, %v5538
      %s5560 = sld [smem:[#allocation3]]
      %v5561 = vstv %s5560
      %v5566 = vunpack.c.l.b16 %v5540
      %v5567 = vunpack.c.h.b16 %v5540
      %v5568 = vunpack.c.l.b16 %v5541
      %v5569 = vunpack.c.h.b16 %v5541
      %v5570 = vunpack.c.l.b16 %v5542
      %v5571 = vunpack.c.h.b16 %v5542
      %v5572 = vunpack.c.l.b16 %v5543
      %v5573 = vunpack.c.h.b16 %v5543
      %v5574 = vpack.c.b16 %v5568, %v5566
      %v5575 = vpack.c.b16 %v5569, %v5567
      %v5576 = vpack.c.b16 %v5572, %v5570
      %v5577 = vpack.c.b16 %v5573, %v5571
      %5582 = vmatprep.subr.bf16.mxu0 0
      %5583 = vmatpush1.bf16.msra.mxu0 %v5544
      %5584 = vmatprep.subr.bf16.mxu0 0
      %5585 = vmatpush1.bf16.msra.mxu0 %v5545
      %5586 = vmatprep.subr.bf16.mxu0 0
      %5587 = vmatpush1.bf16.msra.mxu0 %v5546
      %5588 = vmatprep.subr.bf16.mxu0 0
      %5589 = vmatpush1.bf16.msra.mxu0 %v5547
      %5590 = vmatprep.subr.bf16.mxu0 0
      %5591 = vmatpush1.bf16.msra.mxu0 %v5548
      %5592 = vmatprep.subr.bf16.mxu0 0
      %5593 = vmatpush1.bf16.msra.mxu0 %v5549
      %5594 = vmatprep.subr.bf16.mxu0 0
      %5595 = vmatpush1.bf16.msra.mxu0 %v5550
      %5596 = vmatprep.subr.bf16.mxu0 0
      %5597 = vmatpush1.bf16.msra.mxu0 %v5551
      %5598 = vmatprep.subr.bf16.mxu0 0
      %5599 = vmatpush1.bf16.msra.mxu0 %v5552
      %5600 = vmatprep.subr.bf16.mxu0 0
      %5601 = vmatpush1.bf16.msra.mxu0 %v5553
      %5602 = vmatprep.subr.bf16.mxu0 0
      %5603 = vmatpush1.bf16.msra.mxu0 %v5554
      %5604 = vmatprep.subr.bf16.mxu0 0
      %5605 = vmatpush1.bf16.msra.mxu0 %v5555
      %5606 = vmatprep.subr.bf16.mxu0 0
      %5607 = vmatpush1.bf16.msra.mxu0 %v5556
      %5608 = vmatprep.subr.bf16.mxu0 0
      %5609 = vmatpush1.bf16.msra.mxu0 %v5557
      %5610 = vmatprep.subr.bf16.mxu0 0
      %5611 = vmatpush1.bf16.msra.mxu0 %v5558
      %5612 = vmatprep.subr.bf16.mxu0 0
      %5613 = vmatpush1.bf16.msra.mxu0 %v5559
      %5614 = vmatprep.mubr.bf16.mxu0 %v5575
      %5615 = vmatmul.mubr.bf16.gmra.mrb[0].mxu0 %v5574
      %v5616 = vpop.f32.mrb[0].mxu0
      %v5617 = vadd.f32 %v5561, %v5616
      %v5618 = vpop.f32.mrb[0].mxu0
      %v5619 = vpop.f32.mrb[0].mxu0
      %v5620 = vadd.f32 %v5561, %v5619
      %v5621 = vpop.f32.mrb[0].mxu0
      %5622 = vmatprep.mubr.bf16.mxu0 %v5577
      %5623 = vmatmul.mubr.bf16.gmra.mrb[0].mxu0 %v5576
      %v5624 = vpop.f32.mrb[0].mxu0
      %v5625 = vadd.f32 %v5561, %v5624
      %v5626 = vpop.f32.mrb[0].mxu0
      %v5627 = vpop.f32.mrb[0].mxu0
      %v5628 = vadd.f32 %v5561, %v5627
      %v5629 = vpop.f32.mrb[0].mxu0
      %5630 = vdwg.mxu0
      %vm5631 = vcmask 7168
      %5632 = vst.msk [vmem:[%s363] sm:$0xff] %vm5631, %v5617
      %5633 = vst.msk [vmem:[%s363 + $0x8] sm:$0xff] %vm5631, %v5620
      %5634 = vst.msk [vmem:[%s363 + $0x10] sm:$0xff] %vm5631, %v5625
      %5635 = vst.msk [vmem:[%s363 + $0x18] sm:$0xff] %vm5631, %v5628
      %p5636 = scmp.lt.s32.totalorder %s23, 1
      %s5637 = scalar_select %p5636, %s23, 1
      %s5638 = smul.addr %s5637, 4
      %s5639 = smul.addr %s5638, 8
      %s5640 = scalar_lea.vmem %s10, %s5639
      // Predicated region
      $region61: #{gcn_value_forward.1} parent=59 // pred_check
        %p5641 = pneg %p256
      $region62: #{gcn_value_forward.1} parent=59 // pred_check_branch
        %5643 = sbr.rel (%p5641) target = $region64
      $region63: #{gcn_value_forward.1} parent=59 // pred_region
        _
      $region64: #{gcn_value_forward.1} parent=59 // pred_fallthru
        _
    $region60: #{gcn_value_forward.1} parent=5 // pred_fallthru
      _
    %p5644 = scmp.le.s32.totalorder 2, %s18
    // Predicated region
    $region65: #{gcn_value_forward.1} parent=5 // pred_check
      %p5645 = pneg %p5644
    $region66: #{gcn_value_forward.1} parent=5 // pred_check_branch
      %5647 = sbr.rel (%p5645) target = $region68
    $region67: #{gcn_value_forward.1} parent=5 // pred_region
      %s5648 = ssub.s32 %s18, 2
      // Predicated region
      $region69: #{gcn_value_forward.1} parent=67 // pred_check
        %p5649 = pneg %p262
      $region70: #{gcn_value_forward.1} parent=67 // pred_check_branch
        %5651 = sbr.rel (%p5649) target = $region72
      $region71: #{gcn_value_forward.1} parent=67 // pred_region
        %p5652 = scmp.lt.s32.totalorder %s24, 1
        %s5653 = scalar_select %p5652, %s24, 1
        %s5654 = smul.addr %s5653, 4
        %s5655 = smul.addr %s5654, 8
        %s5656 = scalar_lea.vmem %s10, %s5655
      $region72: #{gcn_value_forward.1} parent=67 // pred_fallthru
        _
    $region68: #{gcn_value_forward.1} parent=5 // pred_fallthru
      _
  $region6: #{gcn_value_forward.1} parent=0 // loop_footer
    %s22 = sadd.s32 1, %s18
  $region7: #{gcn_value_forward.1} parent=0 // loop_footer_branch
    %17 = sbr.rel target = $region3
  $region8: #{gcn_value_forward.1} parent=0 // loop_exit
    _

</llo_original>
